<compile_context>
chip_gen: v5e
topology: v5e:2x2
jax: 0.10.0
libtpu: 0.0.40
codegen_flags: <defaults>
</compile_context>

<pallas_src>
import jax
import jax.numpy as jnp
from jax.experimental import pallas as pl
from jax.experimental.pallas import tpu as pltpu

INPUT_SIZE = 128
HIDDEN = 1000
OUT = 2
BN_EPS = 1e-5


def _round_up(n, m):
    return ((n + m - 1) // m) * m


# ----------------------------------------------------------------------------
# Kernel
# ----------------------------------------------------------------------------
def _mlp_kernel(x_ref, w1_ref, c1_ref, w2_ref, c2_ref, w3_ref, c3_ref, o_ref):
    # x arrives in f32 straight from HBM; cast to bf16 for the MXU here
    # (avoids a separate host-side pad/cast pass over the activations).
    x = x_ref[...].astype(jnp.bfloat16)

    # Layer 1: Linear + folded BatchNorm + ReLU  (Dropout == identity in eval)
    h = jnp.dot(x, w1_ref[...], preferred_element_type=jnp.float32) + c1_ref[...]
    h = jnp.maximum(h, 0.0)

    # Layer 2: Linear + folded BatchNorm + ReLU
    h = jnp.dot(h.astype(jnp.bfloat16), w2_ref[...],
                preferred_element_type=jnp.float32) + c2_ref[...]
    h = jnp.maximum(h, 0.0)

    # Layer 3: Linear(1000, 2), padded to 128 output lanes; store bf16.
    o = jnp.dot(h.astype(jnp.bfloat16), w3_ref[...],
                preferred_element_type=jnp.float32) + c3_ref[...]
    o_ref[...] = o.astype(o_ref.dtype)


# ----------------------------------------------------------------------------
# Batch-tile selection
# ----------------------------------------------------------------------------
def _choose_batch_tile(batch, max_tile=1024):
    """Balanced batch tile: multiple of 16 (bf16 sublane tile), <= max_tile,
    and at least 2 grid steps for B >= 32 so v7x's two TensorCores both work."""
    batch = max(int(batch), 1)
    if batch <= 16:
        # Tiny batch: single step, minimal sublane-aligned tile.
        return _round_up(batch, 8)
    n_steps = max(2, pl.cdiv(batch, max_tile))
    return _round_up(pl.cdiv(batch, n_steps), 16)


# ----------------------------------------------------------------------------
# Wrapper
# ----------------------------------------------------------------------------
def gender_classify_forward(x, kernel_params, *, out_features=OUT,
                            max_batch_tile=1024):
    """x: (B, input_size) f32.  kernel_params: folded+padded (see below)."""
    w1, c1, w2, c2, w3, c3 = kernel_params
    B, in_features = x.shape
    in_p = w1.shape[0]
    hid_p = w1.shape[1]
    out_p = w3.shape[1]

    # input_size == 128 is already a multiple of 128, so this is a no-op; only
    # pad features in the (unused here) general case.
    if in_features != in_p:
        x = jnp.pad(x, ((0, 0), (0, in_p - in_features)))

    tb = _choose_batch_tile(B, max_batch_tile)
    n_steps = pl.cdiv(B, tb)
    grid = (n_steps,)

    b_eff = n_steps * tb
    flops = 2 * b_eff * (in_p * hid_p + hid_p * hid_p + hid_p * out_p)
    bytes_accessed = int(
        B * in_p * 4                                  # f32 activations in
        + (w1.size + w2.size + w3.size) * 2           # bf16 weights
        + (c1.size + c2.size + c3.size) * 4           # f32 folded biases
        + B * out_p * 2                               # bf16 output
    )

    out = pl.pallas_call(
        _mlp_kernel,
        out_shape=jax.ShapeDtypeStruct((B, out_p), jnp.bfloat16),
        grid_spec=pltpu.PrefetchScalarGridSpec(
            num_scalar_prefetch=0,
            grid=grid,
            in_specs=[
                pl.BlockSpec((tb, in_p), lambda i: (i, 0)),      # x tile (f32)
                pl.BlockSpec((in_p, hid_p), lambda i: (0, 0)),   # W1 (resident)
                pl.BlockSpec((1, hid_p), lambda i: (0, 0)),      # c1
                pl.BlockSpec((hid_p, hid_p), lambda i: (0, 0)),  # W2 (resident)
                pl.BlockSpec((1, hid_p), lambda i: (0, 0)),      # c2
                pl.BlockSpec((hid_p, out_p), lambda i: (0, 0)),  # W3 (resident)
                pl.BlockSpec((1, out_p), lambda i: (0, 0)),      # c3
            ],
            out_specs=pl.BlockSpec((tb, out_p), lambda i: (i, 0)),
        ),
        compiler_params=pltpu.CompilerParams(
            dimension_semantics=("parallel",),
            # Large batch tiles need more than v5e's 16 MiB scoped default;
            # usage stays well under every generation's physical VMEM.
            vmem_limit_bytes=48 * 1024 * 1024,
        ),
        cost_estimate=pl.CostEstimate(
            flops=int(flops), transcendentals=0, bytes_accessed=bytes_accessed),
    )(x, w1, c1, w2, c2, w3, c3)

    # Tiny slice/cast back to the module's (B, 2) f32 logits interface.
    return out[:, :out_features].astype(jnp.float32)


# ----------------------------------------------------------------------------
# Parameter construction (PyTorch-equivalent) + fold/pad for the kernel
# ----------------------------------------------------------------------------
def make_params(key, input_size=INPUT_SIZE, hidden=HIDDEN, out=OUT):
    """Raw PyTorch-layout params: Linear (out,in) weights, BN gamma/beta/mean/var."""
    ks = jax.random.split(key, 14)

    def linear(kw, kb, fan_in, fan_out):
        bound = 1.0 / jnp.sqrt(fan_in)
        w = jax.random.uniform(kw, (fan_out, fan_in), jnp.float32, -bound, bound)
        b = jax.random.uniform(kb, (fan_out,), jnp.float32, -bound, bound)
        return w, b

    def bn(kg, kb, km, kv, n):
        gamma = 1.0 + 0.1 * jax.random.normal(kg, (n,), jnp.float32)
        beta = 0.1 * jax.random.normal(kb, (n,), jnp.float32)
        mean = 0.1 * jax.random.normal(km, (n,), jnp.float32)
        var = jnp.abs(1.0 + 0.1 * jax.random.normal(kv, (n,), jnp.float32))
        return gamma, beta, mean, var

    w1, b1 = linear(ks[0], ks[1], input_size, hidden)
    g1, be1, m1, v1 = bn(ks[2], ks[3], ks[4], ks[5], hidden)
    w2, b2 = linear(ks[6], ks[7], hidden, hidden)
    g2, be2, m2, v2 = bn(ks[8], ks[9], ks[10], ks[11], hidden)
    w3, b3 = linear(ks[12], ks[13], hidden, out)
    return (w1, b1, g1, be1, m1, v1, w2, b2, g2, be2, m2, v2, w3, b3)


def fold_and_pad_params(raw, eps=BN_EPS):
    """Fold bias+BN into weights, transpose to (in,out), zero-pad to 128 multiples,
    cast weights to bf16.  Padded bias lanes are exactly 0 so ReLU keeps them 0."""
    (w1, b1, g1, be1, m1, v1, w2, b2, g2, be2, m2, v2, w3, b3) = raw

    def fold(w, b, gamma, beta, mean, var):
        s = gamma / jnp.sqrt(var + eps)
        wf = w.T * s[None, :]                 # (in, out), column-scaled
        cf = (b - mean) * s + beta            # (out,)
        return wf, cf

    w1f, c1f = fold(w1, b1, g1, be1, m1, v1)
    w2f, c2f = fold(w2, b2, g2, be2, m2, v2)
    w3f, c3f = w3.T, b3

    in_p = _round_up(w1f.shape[0], 128)
    hid_p = _round_up(w1f.shape[1], 128)      # 1000 -> 1024
    out_p = _round_up(w3f.shape[1], 128)      # 2 -> 128

    def pad2(a, rows, cols, dtype):
        z = jnp.zeros((rows, cols), dtype)
        return z.at[:a.shape[0], :a.shape[1]].set(a.astype(dtype))

    W1 = pad2(w1f, in_p, hid_p, jnp.bfloat16)
    C1 = pad2(c1f[None, :], 1, hid_p, jnp.float32)
    W2 = pad2(w2f, hid_p, hid_p, jnp.bfloat16)
    C2 = pad2(c2f[None, :], 1, hid_p, jnp.float32)
    W3 = pad2(w3f, hid_p, out_p, jnp.bfloat16)
    C3 = pad2(c3f[None, :], 1, out_p, jnp.float32)
    return (W1, C1, W2, C2, W3, C3)


# ----------------------------------------------------------------------------
# References
# ----------------------------------------------------------------------------
def reference_forward_f32(x, raw, eps=BN_EPS):
    """Pure-f32 PyTorch-semantics (eval mode) reference."""
    (w1, b1, g1, be1, m1, v1, w2, b2, g2, be2, m2, v2, w3, b3) = raw
    h = x @ w1.T + b1
    h = (h - m1) / jnp.sqrt(v1 + eps) * g1 + be1
    h = jnp.maximum(h, 0.0)
    h = h @ w2.T + b2
    h = (h - m2) / jnp.sqrt(v2 + eps) * g2 + be2
    h = jnp.maximum(h, 0.0)
    return h @ w3.T + b3


def reference_forward_folded(x, kparams, out_features=OUT):
    """Same math as the kernel (folded, padded, bf16 operands, f32 accumulation,
    bf16 output)."""
    w1, c1, w2, c2, w3, c3 = kparams
    in_p = w1.shape[0]
    xp = x
    if x.shape[1] != in_p:
        xp = jnp.pad(x, ((0, 0), (0, in_p - x.shape[1])))
    h = jnp.dot(xp.astype(jnp.bfloat16), w1, preferred_element_type=jnp.float32) + c1
    h = jnp.maximum(h, 0.0).astype(jnp.bfloat16)
    h = jnp.dot(h, w2, preferred_element_type=jnp.float32) + c2
    h = jnp.maximum(h, 0.0).astype(jnp.bfloat16)
    o = jnp.dot(h, w3, preferred_element_type=jnp.float32) + c3
    return o.astype(jnp.bfloat16)[:, :out_features].astype(jnp.float32)


# ----------------------------------------------------------------------------
if __name__ == "__main__":
    key = jax.random.PRNGKey(0)
    kx, kp = jax.random.split(key)

    raw_params = make_params(kp)
    kparams = fold_and_pad_params(raw_params)

    # --- small single-tile case -------------------------------------------
    B = 8
    x = jax.random.normal(kx, (B, INPUT_SIZE), jnp.float32)
    out = jax.block_until_ready(gender_classify_forward(x, kparams))
    assert out.shape == (B, OUT), out.shape

    # Tight check vs. a reference doing exactly the kernel math (bf16 path).
    ref_bf16 = reference_forward_folded(x, kparams)
    err_bf16 = float(jnp.max(jnp.abs(out - ref_bf16)))
    assert jnp.allclose(out, ref_bf16, atol=2e-2, rtol=2e-2), err_bf16

    # Loose semantic check vs. the full-f32 PyTorch-equivalent forward
    # (bf16 weight/output quantization accounts for the residual difference).
    ref_f32 = reference_forward_f32(x, raw_params)
    err_f32 = float(jnp.max(jnp.abs(out - ref_f32)))
    assert jnp.allclose(out, ref_f32, atol=8e-2, rtol=8e-2), err_f32

    # --- multi-step grid + ragged tail (2 tiles -> both v7x TCs) -----------
    B2 = 40
    x2 = jax.random.normal(jax.random.PRNGKey(1), (B2, INPUT_SIZE), jnp.float32)
    out2 = jax.block_until_ready(gender_classify_forward(x2, kparams))
    assert out2.shape == (B2, OUT), out2.shape
    ref2 = reference_forward_folded(x2, kparams)
    err2 = float(jnp.max(jnp.abs(out2 - ref2)))
    assert jnp.allclose(out2, ref2, atol=2e-2, rtol=2e-2), err2

    print("KERNEL_OK")
</pallas_src>

<mosaic_0001>
module attributes {stable_mosaic.version = 11 : i64} {
  func.func @_mlp_kernel(%arg0: i32, %arg1: memref<8x128xf32, #tpu.memory_space<vmem>>, %arg2: memref<128x1024xbf16, #tpu.memory_space<vmem>>, %arg3: memref<1x1024xf32, #tpu.memory_space<vmem>>, %arg4: memref<1024x1024xbf16, #tpu.memory_space<vmem>>, %arg5: memref<1x1024xf32, #tpu.memory_space<vmem>>, %arg6: memref<1024x128xbf16, #tpu.memory_space<vmem>>, %arg7: memref<1x128xf32, #tpu.memory_space<vmem>>, %arg8: memref<8x128xbf16, #tpu.memory_space<vmem>>) attributes {dimension_semantics = [#tpu.dimension_semantics<parallel>], iteration_bounds = array<i64: 1>, scalar_prefetch = 0 : i64, scratch_operands = 0 : i64, tpu.core_type = #tpu.core_type<tc>, window_params = [{transform_indices = @transform_0, window_bounds = array<i64: 8, 128>}, {pipeline_mode = #tpu.pipeline_mode<synchronous>, transform_indices = @transform_1, window_bounds = array<i64: 128, 1024>}, {pipeline_mode = #tpu.pipeline_mode<synchronous>, transform_indices = @transform_2, window_bounds = array<i64: 1, 1024>}, {pipeline_mode = #tpu.pipeline_mode<synchronous>, transform_indices = @transform_3, window_bounds = array<i64: 1024, 1024>}, {pipeline_mode = #tpu.pipeline_mode<synchronous>, transform_indices = @transform_4, window_bounds = array<i64: 1, 1024>}, {pipeline_mode = #tpu.pipeline_mode<synchronous>, transform_indices = @transform_5, window_bounds = array<i64: 1024, 128>}, {pipeline_mode = #tpu.pipeline_mode<synchronous>, transform_indices = @transform_6, window_bounds = array<i64: 1, 128>}, {transform_indices = @transform_7, window_bounds = array<i64: 8, 128>}]} {
    %c0 = arith.constant 0 : index
    %c0_0 = arith.constant 0 : index
    %0 = vector.load %arg1[%c0, %c0_0] : memref<8x128xf32, #tpu.memory_space<vmem>>, vector<8x128xf32>
    %1 = arith.truncf %0 : vector<8x128xf32> to vector<8x128xbf16>
    %c0_1 = arith.constant 0 : index
    %c0_2 = arith.constant 0 : index
    %2 = vector.load %arg2[%c0_1, %c0_2] : memref<128x1024xbf16, #tpu.memory_space<vmem>>, vector<128x1024xbf16>
    %cst = arith.constant dense<0.000000e+00> : vector<8x1024xf32>
    %3 = tpu.matmul %1, %2, %cst {dimension_numbers = #tpu.dot_dimension_numbers<[1], [0], [0], [1], [0, 0, 1, 1], [], []>} : vector<8x128xbf16>, vector<128x1024xbf16>, vector<8x1024xf32> -> vector<8x1024xf32>
    %c0_3 = arith.constant 0 : index
    %c0_4 = arith.constant 0 : index
    %4 = vector.load %arg3[%c0_3, %c0_4] : memref<1x1024xf32, #tpu.memory_space<vmem>>, vector<1x1024xf32>
    %5 = vector.broadcast %4 : vector<1x1024xf32> to vector<8x1024xf32>
    %6 = arith.addf %3, %5 : vector<8x1024xf32>
    %cst_5 = arith.constant 0.000000e+00 : f32
    %7 = vector.broadcast %cst_5 : f32 to vector<8x1024xf32>
    %8 = arith.maximumf %6, %7 : vector<8x1024xf32>
    %9 = arith.truncf %8 : vector<8x1024xf32> to vector<8x1024xbf16>
    %c0_6 = arith.constant 0 : index
    %c0_7 = arith.constant 0 : index
    %10 = vector.load %arg4[%c0_6, %c0_7] : memref<1024x1024xbf16, #tpu.memory_space<vmem>>, vector<1024x1024xbf16>
    %cst_8 = arith.constant dense<0.000000e+00> : vector<8x1024xf32>
    %11 = tpu.matmul %9, %10, %cst_8 {dimension_numbers = #tpu.dot_dimension_numbers<[1], [0], [0], [1], [0, 0, 1, 1], [], []>} : vector<8x1024xbf16>, vector<1024x1024xbf16>, vector<8x1024xf32> -> vector<8x1024xf32>
    %c0_9 = arith.constant 0 : index
    %c0_10 = arith.constant 0 : index
    %12 = vector.load %arg5[%c0_9, %c0_10] : memref<1x1024xf32, #tpu.memory_space<vmem>>, vector<1x1024xf32>
    %13 = vector.broadcast %12 : vector<1x1024xf32> to vector<8x1024xf32>
    %14 = arith.addf %11, %13 : vector<8x1024xf32>
    %cst_11 = arith.constant 0.000000e+00 : f32
    %15 = vector.broadcast %cst_11 : f32 to vector<8x1024xf32>
    %16 = arith.maximumf %14, %15 : vector<8x1024xf32>
    %17 = arith.truncf %16 : vector<8x1024xf32> to vector<8x1024xbf16>
    %c0_12 = arith.constant 0 : index
    %c0_13 = arith.constant 0 : index
    %18 = vector.load %arg6[%c0_12, %c0_13] : memref<1024x128xbf16, #tpu.memory_space<vmem>>, vector<1024x128xbf16>
    %cst_14 = arith.constant dense<0.000000e+00> : vector<8x128xf32>
    %19 = tpu.matmul %17, %18, %cst_14 {dimension_numbers = #tpu.dot_dimension_numbers<[1], [0], [0], [1], [0, 0, 1, 1], [], []>} : vector<8x1024xbf16>, vector<1024x128xbf16>, vector<8x128xf32> -> vector<8x128xf32>
    %c0_15 = arith.constant 0 : index
    %c0_16 = arith.constant 0 : index
    %20 = vector.load %arg7[%c0_15, %c0_16] : memref<1x128xf32, #tpu.memory_space<vmem>>, vector<1x128xf32>
    %21 = vector.broadcast %20 : vector<1x128xf32> to vector<8x128xf32>
    %22 = arith.addf %19, %21 : vector<8x128xf32>
    %23 = arith.truncf %22 : vector<8x128xf32> to vector<8x128xbf16>
    %c0_17 = arith.constant 0 : index
    %c0_18 = arith.constant 0 : index
    %24 = vector.load %arg8[%c0_17, %c0_18] : memref<8x128xbf16, #tpu.memory_space<vmem>>, vector<8x128xbf16>
    tpu.vector_store %arg8[%c0_17, %c0_18], %23 {strides = array<i32>} : memref<8x128xbf16, #tpu.memory_space<vmem>>, vector<8x128xbf16>,
    return
  }
  func.func @transform_0(%arg0: i32) -> (i32, i32) {
    %c0_i32 = arith.constant 0 : i32
    %c0_i32_0 = arith.constant 0 : i32
    return %arg0, %c0_i32 : i32, i32
  }
  func.func @transform_1(%arg0: i32) -> (i32, i32) {
    %c0_i32 = arith.constant 0 : i32
    %c0_i32_0 = arith.constant 0 : i32
    %c0_i32_1 = arith.constant 0 : i32
    return %c0_i32, %c0_i32_0 : i32, i32
  }
  func.func @transform_2(%arg0: i32) -> (i32, i32) {
    %c0_i32 = arith.constant 0 : i32
    %c0_i32_0 = arith.constant 0 : i32
    %c0_i32_1 = arith.constant 0 : i32
    return %c0_i32, %c0_i32_0 : i32, i32
  }
  func.func @transform_3(%arg0: i32) -> (i32, i32) {
    %c0_i32 = arith.constant 0 : i32
    %c0_i32_0 = arith.constant 0 : i32
    %c0_i32_1 = arith.constant 0 : i32
    return %c0_i32, %c0_i32_0 : i32, i32
  }
  func.func @transform_4(%arg0: i32) -> (i32, i32) {
    %c0_i32 = arith.constant 0 : i32
    %c0_i32_0 = arith.constant 0 : i32
    %c0_i32_1 = arith.constant 0 : i32
    return %c0_i32, %c0_i32_0 : i32, i32
  }
  func.func @transform_5(%arg0: i32) -> (i32, i32) {
    %c0_i32 = arith.constant 0 : i32
    %c0_i32_0 = arith.constant 0 : i32
    %c0_i32_1 = arith.constant 0 : i32
    return %c0_i32, %c0_i32_0 : i32, i32
  }
  func.func @transform_6(%arg0: i32) -> (i32, i32) {
    %c0_i32 = arith.constant 0 : i32
    %c0_i32_0 = arith.constant 0 : i32
    %c0_i32_1 = arith.constant 0 : i32
    return %c0_i32, %c0_i32_0 : i32, i32
  }
  func.func @transform_7(%arg0: i32) -> (i32, i32) {
    %c0_i32 = arith.constant 0 : i32
    %c0_i32_0 = arith.constant 0 : i32
    return %arg0, %c0_i32 : i32, i32
  }
}

</mosaic_0001>

<llo_original>
// kernel: tpu_custom_call.1
$region0: #{tpu_custom_call.1}
  #allocation0 [shape = 'u32[]', space=smem, size = 0x4, offset = 0x4, fixed_abs, tag = 'smem constant byte address 0x4 - core index']
  #allocation1 [shape = 'u32[72,128]{1,0:T(1,128)}', space=vmem, size = 0x9000, scoped, tag = 'internal scratch']
  %s0 = inlined_call_operand.hbm [shape: f32[8,128], index: 0, kind: input, shape index: {}]
  %s1 = inlined_call_operand.hbm [shape: bf16[128,1024], index: 1, kind: input, shape index: {}]
  %s2 = inlined_call_operand.hbm [shape: f32[1,1024], index: 2, kind: input, shape index: {}]
  %s3 = inlined_call_operand.hbm [shape: bf16[1024,1024], index: 3, kind: input, shape index: {}]
  %s4 = inlined_call_operand.hbm [shape: f32[1,1024], index: 4, kind: input, shape index: {}]
  %s5 = inlined_call_operand.hbm [shape: bf16[1024,128], index: 5, kind: input, shape index: {}]
  %s6 = inlined_call_operand.hbm [shape: f32[1,128], index: 6, kind: input, shape index: {}]
  %s7 = inlined_call_operand.hbm [shape: bf16[8,128], index: 7, kind: output, shape index: {}]
  %s8 = sld [smem:[#allocation0]]
  $region66: #{tpu_custom_call.1} parent=0
    _
  %s10 = ssub.s32 1, %s8
  %s11 = scalar_select 0, %s10, %s8
  $region1: #{tpu_custom_call.1} parent=0
    #allocation2 [shape = 'u8[4096]{0}', space=vmem, size = 0x1000, scoped, tag = 'input window, operand 0, single buffered']
    #allocation3 [shape = 's32[1]{0}', space=sflag, size = 0x4, scoped, tag = 'scoped memory for tpu_custom_call.1']
    #allocation4 [shape = 's32[1]{0}', space=sflag, size = 0x4, scoped, tag = 'scoped memory for tpu_custom_call.1']
    #allocation5 [shape = 'u8[262144]{0}', space=vmem, size = 0x40000, scoped, tag = 'input window, operand 1, single buffered']
    #allocation6 [shape = 's32[1]{0}', space=sflag, size = 0x4, scoped, tag = 'scoped memory for tpu_custom_call.1']
    #allocation7 [shape = 'u8[4096]{0}', space=vmem, size = 0x1000, scoped, tag = 'input window, operand 2, single buffered']
    #allocation8 [shape = 'u8[2097152]{0}', space=vmem, size = 0x200000, scoped, tag = 'input window, operand 3, single buffered']
    #allocation9 [shape = 's32[1]{0}', space=sflag, size = 0x4, scoped, tag = 'scoped memory for tpu_custom_call.1']
    #allocation10 [shape = 'u8[4096]{0}', space=vmem, size = 0x1000, scoped, tag = 'input window, operand 4, single buffered']
    #allocation11 [shape = 'u8[262144]{0}', space=vmem, size = 0x40000, scoped, tag = 'input window, operand 5, single buffered']
    #allocation12 [shape = 's32[1]{0}', space=sflag, size = 0x4, scoped, tag = 'scoped memory for tpu_custom_call.1']
    #allocation13 [shape = 'u8[512]{0}', space=vmem, size = 0x400, scoped, tag = 'input window, operand 6, single buffered']
    #allocation14 [shape = 'u8[2048]{0}', space=vmem, size = 0x800, scoped, tag = 'output window, operand 0, single buffered']
    %12 = vsyncpa [#allocation3], 0
    %13 = vsyncpa [#allocation6], 0
    %14 = vsyncpa [#allocation9], 0
    %15 = vsyncpa [#allocation12], 0
    %16 = vsyncpa [#allocation4], 0
    // Predicated region
    $region2: #{tpu_custom_call.1} parent=1 // pred_check
      _
    $region3: #{tpu_custom_call.1} parent=1 // pred_check_branch
      %18 = sbr.rel (0) target = $region5
    $region4: #{tpu_custom_call.1} parent=1 // pred_region
      %20 = vsyncadd [#allocation3], 0
      %s22 = sshll.u32 %s0, 4
      %s23 = int_to_ptr.hbm [resolvable:$true] %s22
      %s24 = sshll.u32 [#allocation2], 4
      %s25 = int_to_ptr.vmem [resolvable:$true] %s24
      %27 = dma.hbm_to_vmem [thread:$0]  %s23, 128, %s25, [#allocation3]
    $region5: #{tpu_custom_call.1} parent=1 // pred_fallthru
      _
    // Predicated region
    $region6: #{tpu_custom_call.1} parent=1 // pred_check
      _
    $region7: #{tpu_custom_call.1} parent=1 // pred_check_branch
      %29 = sbr.rel (0) target = $region9
    $region8: #{tpu_custom_call.1} parent=1 // pred_region
      %31 = vsyncadd [#allocation6], 0
      %s32 = sshll.u32 %s1, 4
      %s33 = int_to_ptr.hbm [resolvable:$true] %s32
      %s34 = sshll.u32 [#allocation5], 4
      %s35 = int_to_ptr.vmem [resolvable:$true] %s34
      %40 = dma.hbm_to_vmem [thread:$0]  %s33, 8192, %s35, [#allocation6], 512, 512, 32
    $region9: #{tpu_custom_call.1} parent=1 // pred_fallthru
      _
    // Predicated region
    $region10: #{tpu_custom_call.1} parent=1 // pred_check
      _
    $region11: #{tpu_custom_call.1} parent=1 // pred_check_branch
      %42 = sbr.rel (0) target = $region13
    $region12: #{tpu_custom_call.1} parent=1 // pred_region
      %44 = vsyncadd [#allocation6], 0
      %s46 = sshll.u32 %s2, 4
      %s47 = int_to_ptr.hbm [resolvable:$true] %s46
      %s48 = sshll.u32 [#allocation7], 4
      %s49 = int_to_ptr.vmem [resolvable:$true] %s48
      %51 = dma.hbm_to_vmem [thread:$0]  %s47, 128, %s49, [#allocation6]
    $region13: #{tpu_custom_call.1} parent=1 // pred_fallthru
      _
    // Predicated region
    $region14: #{tpu_custom_call.1} parent=1 // pred_check
      _
    $region15: #{tpu_custom_call.1} parent=1 // pred_check_branch
      %53 = sbr.rel (0) target = $region17
    $region16: #{tpu_custom_call.1} parent=1 // pred_region
      %55 = vsyncadd [#allocation9], 0
      %s56 = sshll.u32 %s3, 4
      %s57 = int_to_ptr.hbm [resolvable:$true] %s56
      %s58 = sshll.u32 [#allocation8], 4
      %s59 = int_to_ptr.vmem [resolvable:$true] %s58
      %64 = dma.hbm_to_vmem [thread:$0]  %s57, 65536, %s59, [#allocation9], 512, 512, 32
    $region17: #{tpu_custom_call.1} parent=1 // pred_fallthru
      _
    // Predicated region
    $region18: #{tpu_custom_call.1} parent=1 // pred_check
      _
    $region19: #{tpu_custom_call.1} parent=1 // pred_check_branch
      %66 = sbr.rel (0) target = $region21
    $region20: #{tpu_custom_call.1} parent=1 // pred_region
      %68 = vsyncadd [#allocation9], 0
      %s70 = sshll.u32 %s4, 4
      %s71 = int_to_ptr.hbm [resolvable:$true] %s70
      %s72 = sshll.u32 [#allocation10], 4
      %s73 = int_to_ptr.vmem [resolvable:$true] %s72
      %75 = dma.hbm_to_vmem [thread:$0]  %s71, 128, %s73, [#allocation9]
    $region21: #{tpu_custom_call.1} parent=1 // pred_fallthru
      _
    // Predicated region
    $region22: #{tpu_custom_call.1} parent=1 // pred_check
      _
    $region23: #{tpu_custom_call.1} parent=1 // pred_check_branch
      %77 = sbr.rel (0) target = $region25
    $region24: #{tpu_custom_call.1} parent=1 // pred_region
      %79 = vsyncadd [#allocation12], 0
      %s80 = sshll.u32 %s5, 4
      %s81 = int_to_ptr.hbm [resolvable:$true] %s80
      %s82 = sshll.u32 [#allocation11], 4
      %s83 = int_to_ptr.vmem [resolvable:$true] %s82
      %88 = dma.hbm_to_vmem [thread:$0]  %s81, 8192, %s83, [#allocation12], 64, 64, 4
    $region25: #{tpu_custom_call.1} parent=1 // pred_fallthru
      _
    // Predicated region
    $region26: #{tpu_custom_call.1} parent=1 // pred_check
      _
    $region27: #{tpu_custom_call.1} parent=1 // pred_check_branch
      %90 = sbr.rel (0) target = $region29
    $region28: #{tpu_custom_call.1} parent=1 // pred_region
      %92 = vsyncadd [#allocation12], 0
      %s94 = sshll.u32 %s6, 4
      %s95 = int_to_ptr.hbm [resolvable:$true] %s94
      %s96 = sshll.u32 [#allocation13], 4
      %s97 = int_to_ptr.vmem [resolvable:$true] %s96
      %99 = dma.hbm_to_vmem [thread:$0]  %s95, 16, %s97, [#allocation12]
    $region29: #{tpu_custom_call.1} parent=1 // pred_fallthru
      _
    // Predicated region
    $region30: #{tpu_custom_call.1} parent=1 // pred_check
      _
    $region31: #{tpu_custom_call.1} parent=1 // pred_check_branch
      %101 = sbr.rel (0) target = $region33
    $region32: #{tpu_custom_call.1} parent=1 // pred_region
      %103 = dma.done [#allocation3], 128
    $region33: #{tpu_custom_call.1} parent=1 // pred_fallthru
      _
    // Predicated region
    $region34: #{tpu_custom_call.1} parent=1 // pred_check
      _
    $region35: #{tpu_custom_call.1} parent=1 // pred_check_branch
      %105 = sbr.rel (0) target = $region37
    $region36: #{tpu_custom_call.1} parent=1 // pred_region
      %107 = dma.done [#allocation6], 8192
    $region37: #{tpu_custom_call.1} parent=1 // pred_fallthru
      _
    // Predicated region
    $region38: #{tpu_custom_call.1} parent=1 // pred_check
      _
    $region39: #{tpu_custom_call.1} parent=1 // pred_check_branch
      %109 = sbr.rel (0) target = $region41
    $region40: #{tpu_custom_call.1} parent=1 // pred_region
      %111 = dma.done [#allocation6], 128
    $region41: #{tpu_custom_call.1} parent=1 // pred_fallthru
      _
    // Predicated region
    $region42: #{tpu_custom_call.1} parent=1 // pred_check
      _
    $region43: #{tpu_custom_call.1} parent=1 // pred_check_branch
      %113 = sbr.rel (0) target = $region45
    $region44: #{tpu_custom_call.1} parent=1 // pred_region
      %115 = dma.done [#allocation9], 65536
    $region45: #{tpu_custom_call.1} parent=1 // pred_fallthru
      _
    // Predicated region
    $region46: #{tpu_custom_call.1} parent=1 // pred_check
      _
    $region47: #{tpu_custom_call.1} parent=1 // pred_check_branch
      %117 = sbr.rel (0) target = $region49
    $region48: #{tpu_custom_call.1} parent=1 // pred_region
      %119 = dma.done [#allocation9], 128
    $region49: #{tpu_custom_call.1} parent=1 // pred_fallthru
      _
    // Predicated region
    $region50: #{tpu_custom_call.1} parent=1 // pred_check
      _
    $region51: #{tpu_custom_call.1} parent=1 // pred_check_branch
      %121 = sbr.rel (0) target = $region53
    $region52: #{tpu_custom_call.1} parent=1 // pred_region
      %123 = dma.done [#allocation12], 8192
    $region53: #{tpu_custom_call.1} parent=1 // pred_fallthru
      _
    // Predicated region
    $region54: #{tpu_custom_call.1} parent=1 // pred_check
      _
    $region55: #{tpu_custom_call.1} parent=1 // pred_check_branch
      %125 = sbr.rel (0) target = $region57
    $region56: #{tpu_custom_call.1} parent=1 // pred_region
      %127 = dma.done [#allocation12], 16
    $region57: #{tpu_custom_call.1} parent=1 // pred_fallthru
      _
    %v128 = vld [vmem:[#allocation2] sm:$0xff]
    %v129 = vpack.c.bf16 %v128, %v128
    %v130 = vld [vmem:[#allocation5] sm:$0xff]
    %v131 = vld [vmem:[#allocation5 + $0x8] sm:$0xff]
    %v132 = vld [vmem:[#allocation5 + $0x10] sm:$0xff]
    %v133 = vld [vmem:[#allocation5 + $0x18] sm:$0xff]
    %v134 = vld [vmem:[#allocation5 + $0x20] sm:$0xff]
    %v135 = vld [vmem:[#allocation5 + $0x28] sm:$0xff]
    %v136 = vld [vmem:[#allocation5 + $0x30] sm:$0xff]
    %v137 = vld [vmem:[#allocation5 + $0x38] sm:$0xff]
    %v138 = vld [vmem:[#allocation5 + $0x40] sm:$0xff]
    %v139 = vld [vmem:[#allocation5 + $0x48] sm:$0xff]
    %v140 = vld [vmem:[#allocation5 + $0x50] sm:$0xff]
    %v141 = vld [vmem:[#allocation5 + $0x58] sm:$0xff]
    %v142 = vld [vmem:[#allocation5 + $0x60] sm:$0xff]
    %v143 = vld [vmem:[#allocation5 + $0x68] sm:$0xff]
    %v144 = vld [vmem:[#allocation5 + $0x70] sm:$0xff]
    %v145 = vld [vmem:[#allocation5 + $0x78] sm:$0xff]
    %v146 = vld [vmem:[#allocation5 + $0x80] sm:$0xff]
    %v147 = vld [vmem:[#allocation5 + $0x88] sm:$0xff]
    %v148 = vld [vmem:[#allocation5 + $0x90] sm:$0xff]
    %v149 = vld [vmem:[#allocation5 + $0x98] sm:$0xff]
    %v150 = vld [vmem:[#allocation5 + $0xa0] sm:$0xff]
    %v151 = vld [vmem:[#allocation5 + $0xa8] sm:$0xff]
    %v152 = vld [vmem:[#allocation5 + $0xb0] sm:$0xff]
    %v153 = vld [vmem:[#allocation5 + $0xb8] sm:$0xff]
    %v154 = vld [vmem:[#allocation5 + $0xc0] sm:$0xff]
    %v155 = vld [vmem:[#allocation5 + $0xc8] sm:$0xff]
    %v156 = vld [vmem:[#allocation5 + $0xd0] sm:$0xff]
    %v157 = vld [vmem:[#allocation5 + $0xd8] sm:$0xff]
    %v158 = vld [vmem:[#allocation5 + $0xe0] sm:$0xff]
    %v159 = vld [vmem:[#allocation5 + $0xe8] sm:$0xff]
    %v160 = vld [vmem:[#allocation5 + $0xf0] sm:$0xff]
    %v161 = vld [vmem:[#allocation5 + $0xf8] sm:$0xff]
    %v162 = vld [vmem:[#allocation5 + $0x100] sm:$0xff]
    %v163 = vld [vmem:[#allocation5 + $0x108] sm:$0xff]
    %v164 = vld [vmem:[#allocation5 + $0x110] sm:$0xff]
    %v165 = vld [vmem:[#allocation5 + $0x118] sm:$0xff]
    %v166 = vld [vmem:[#allocation5 + $0x120] sm:$0xff]
    %v167 = vld [vmem:[#allocation5 + $0x128] sm:$0xff]
    %v168 = vld [vmem:[#allocation5 + $0x130] sm:$0xff]
    %v169 = vld [vmem:[#allocation5 + $0x138] sm:$0xff]
    %v170 = vld [vmem:[#allocation5 + $0x140] sm:$0xff]
    %v171 = vld [vmem:[#allocation5 + $0x148] sm:$0xff]
    %v172 = vld [vmem:[#allocation5 + $0x150] sm:$0xff]
    %v173 = vld [vmem:[#allocation5 + $0x158] sm:$0xff]
    %v174 = vld [vmem:[#allocation5 + $0x160] sm:$0xff]
    %v175 = vld [vmem:[#allocation5 + $0x168] sm:$0xff]
    %v176 = vld [vmem:[#allocation5 + $0x170] sm:$0xff]
    %v177 = vld [vmem:[#allocation5 + $0x178] sm:$0xff]
    %v178 = vld [vmem:[#allocation5 + $0x180] sm:$0xff]
    %v179 = vld [vmem:[#allocation5 + $0x188] sm:$0xff]
    %v180 = vld [vmem:[#allocation5 + $0x190] sm:$0xff]
    %v181 = vld [vmem:[#allocation5 + $0x198] sm:$0xff]
    %v182 = vld [vmem:[#allocation5 + $0x1a0] sm:$0xff]
    %v183 = vld [vmem:[#allocation5 + $0x1a8] sm:$0xff]
    %v184 = vld [vmem:[#allocation5 + $0x1b0] sm:$0xff]
    %v185 = vld [vmem:[#allocation5 + $0x1b8] sm:$0xff]
    %v186 = vld [vmem:[#allocation5 + $0x1c0] sm:$0xff]
    %v187 = vld [vmem:[#allocation5 + $0x1c8] sm:$0xff]
    %v188 = vld [vmem:[#allocation5 + $0x1d0] sm:$0xff]
    %v189 = vld [vmem:[#allocation5 + $0x1d8] sm:$0xff]
    %v190 = vld [vmem:[#allocation5 + $0x1e0] sm:$0xff]
    %v191 = vld [vmem:[#allocation5 + $0x1e8] sm:$0xff]
    %v192 = vld [vmem:[#allocation5 + $0x1f0] sm:$0xff]
    %v193 = vld [vmem:[#allocation5 + $0x1f8] sm:$0xff]
    %v194 = vld [vmem:[#allocation7] sm:$0xff]
    %v196 = vperm.slane %v194, 0
    %v197 = vperm.slane %v194, 1
    %v198 = vperm.slane %v194, 2
    %v199 = vperm.slane %v194, 3
    %v200 = vperm.slane %v194, 4
    %v201 = vperm.slane %v194, 5
    %v202 = vperm.slane %v194, 6
    %v203 = vperm.slane %v194, 7
    %v276 = vunpack.c.l.b16 %v130
    %v277 = vunpack.c.h.b16 %v130
    %v278 = vunpack.c.l.b16 %v131
    %v279 = vunpack.c.h.b16 %v131
    %v280 = vunpack.c.l.b16 %v132
    %v281 = vunpack.c.h.b16 %v132
    %v282 = vunpack.c.l.b16 %v133
    %v283 = vunpack.c.h.b16 %v133
    %v284 = vunpack.c.l.b16 %v134
    %v285 = vunpack.c.h.b16 %v134
    %v286 = vunpack.c.l.b16 %v135
    %v287 = vunpack.c.h.b16 %v135
    %v288 = vunpack.c.l.b16 %v136
    %v289 = vunpack.c.h.b16 %v136
    %v290 = vunpack.c.l.b16 %v137
    %v291 = vunpack.c.h.b16 %v137
    %v292 = vunpack.c.l.b16 %v138
    %v293 = vunpack.c.h.b16 %v138
    %v294 = vunpack.c.l.b16 %v139
    %v295 = vunpack.c.h.b16 %v139
    %v296 = vunpack.c.l.b16 %v140
    %v297 = vunpack.c.h.b16 %v140
    %v298 = vunpack.c.l.b16 %v141
    %v299 = vunpack.c.h.b16 %v141
    %v300 = vunpack.c.l.b16 %v142
    %v301 = vunpack.c.h.b16 %v142
    %v302 = vunpack.c.l.b16 %v143
    %v303 = vunpack.c.h.b16 %v143
    %v304 = vunpack.c.l.b16 %v144
    %v305 = vunpack.c.h.b16 %v144
    %v306 = vunpack.c.l.b16 %v145
    %v307 = vunpack.c.h.b16 %v145
    %v308 = vunpack.c.l.b16 %v146
    %v309 = vunpack.c.h.b16 %v146
    %v310 = vunpack.c.l.b16 %v147
    %v311 = vunpack.c.h.b16 %v147
    %v312 = vunpack.c.l.b16 %v148
    %v313 = vunpack.c.h.b16 %v148
    %v314 = vunpack.c.l.b16 %v149
    %v315 = vunpack.c.h.b16 %v149
    %v316 = vunpack.c.l.b16 %v150
    %v317 = vunpack.c.h.b16 %v150
    %v318 = vunpack.c.l.b16 %v151
    %v319 = vunpack.c.h.b16 %v151
    %v320 = vunpack.c.l.b16 %v152
    %v321 = vunpack.c.h.b16 %v152
    %v322 = vunpack.c.l.b16 %v153
    %v323 = vunpack.c.h.b16 %v153
    %v324 = vunpack.c.l.b16 %v154
    %v325 = vunpack.c.h.b16 %v154
    %v326 = vunpack.c.l.b16 %v155
    %v327 = vunpack.c.h.b16 %v155
    %v328 = vunpack.c.l.b16 %v156
    %v329 = vunpack.c.h.b16 %v156
    %v330 = vunpack.c.l.b16 %v157
    %v331 = vunpack.c.h.b16 %v157
    %v332 = vunpack.c.l.b16 %v158
    %v333 = vunpack.c.h.b16 %v158
    %v334 = vunpack.c.l.b16 %v159
    %v335 = vunpack.c.h.b16 %v159
    %v336 = vunpack.c.l.b16 %v160
    %v337 = vunpack.c.h.b16 %v160
    %v338 = vunpack.c.l.b16 %v161
    %v339 = vunpack.c.h.b16 %v161
    %v340 = vunpack.c.l.b16 %v162
    %v341 = vunpack.c.h.b16 %v162
    %v342 = vunpack.c.l.b16 %v163
    %v343 = vunpack.c.h.b16 %v163
    %v344 = vunpack.c.l.b16 %v164
    %v345 = vunpack.c.h.b16 %v164
    %v346 = vunpack.c.l.b16 %v165
    %v347 = vunpack.c.h.b16 %v165
    %v348 = vunpack.c.l.b16 %v166
    %v349 = vunpack.c.h.b16 %v166
    %v350 = vunpack.c.l.b16 %v167
    %v351 = vunpack.c.h.b16 %v167
    %v352 = vunpack.c.l.b16 %v168
    %v353 = vunpack.c.h.b16 %v168
    %v354 = vunpack.c.l.b16 %v169
    %v355 = vunpack.c.h.b16 %v169
    %v356 = vunpack.c.l.b16 %v170
    %v357 = vunpack.c.h.b16 %v170
    %v358 = vunpack.c.l.b16 %v171
    %v359 = vunpack.c.h.b16 %v171
    %v360 = vunpack.c.l.b16 %v172
    %v361 = vunpack.c.h.b16 %v172
    %v362 = vunpack.c.l.b16 %v173
    %v363 = vunpack.c.h.b16 %v173
    %v364 = vunpack.c.l.b16 %v174
    %v365 = vunpack.c.h.b16 %v174
    %v366 = vunpack.c.l.b16 %v175
    %v367 = vunpack.c.h.b16 %v175
    %v368 = vunpack.c.l.b16 %v176
    %v369 = vunpack.c.h.b16 %v176
    %v370 = vunpack.c.l.b16 %v177
    %v371 = vunpack.c.h.b16 %v177
    %v372 = vunpack.c.l.b16 %v178
    %v373 = vunpack.c.h.b16 %v178
    %v374 = vunpack.c.l.b16 %v179
    %v375 = vunpack.c.h.b16 %v179
    %v376 = vunpack.c.l.b16 %v180
    %v377 = vunpack.c.h.b16 %v180
    %v378 = vunpack.c.l.b16 %v181
    %v379 = vunpack.c.h.b16 %v181
    %v380 = vunpack.c.l.b16 %v182
    %v381 = vunpack.c.h.b16 %v182
    %v382 = vunpack.c.l.b16 %v183
    %v383 = vunpack.c.h.b16 %v183
    %v384 = vunpack.c.l.b16 %v184
    %v385 = vunpack.c.h.b16 %v184
    %v386 = vunpack.c.l.b16 %v185
    %v387 = vunpack.c.h.b16 %v185
    %v388 = vunpack.c.l.b16 %v186
    %v389 = vunpack.c.h.b16 %v186
    %v390 = vunpack.c.l.b16 %v187
    %v391 = vunpack.c.h.b16 %v187
    %v392 = vunpack.c.l.b16 %v188
    %v393 = vunpack.c.h.b16 %v188
    %v394 = vunpack.c.l.b16 %v189
    %v395 = vunpack.c.h.b16 %v189
    %v396 = vunpack.c.l.b16 %v190
    %v397 = vunpack.c.h.b16 %v190
    %v398 = vunpack.c.l.b16 %v191
    %v399 = vunpack.c.h.b16 %v191
    %v400 = vunpack.c.l.b16 %v192
    %v401 = vunpack.c.h.b16 %v192
    %v402 = vunpack.c.l.b16 %v193
    %v403 = vunpack.c.h.b16 %v193
    %v404 = vpack.c.b16 %v284, %v276
    %v405 = vpack.c.b16 %v285, %v277
    %v406 = vpack.c.b16 %v286, %v278
    %v407 = vpack.c.b16 %v287, %v279
    %v408 = vpack.c.b16 %v288, %v280
    %v409 = vpack.c.b16 %v289, %v281
    %v410 = vpack.c.b16 %v290, %v282
    %v411 = vpack.c.b16 %v291, %v283
    %v412 = vpack.c.b16 %v300, %v292
    %v413 = vpack.c.b16 %v301, %v293
    %v414 = vpack.c.b16 %v302, %v294
    %v415 = vpack.c.b16 %v303, %v295
    %v416 = vpack.c.b16 %v304, %v296
    %v417 = vpack.c.b16 %v305, %v297
    %v418 = vpack.c.b16 %v306, %v298
    %v419 = vpack.c.b16 %v307, %v299
    %v420 = vpack.c.b16 %v316, %v308
    %v421 = vpack.c.b16 %v317, %v309
    %v422 = vpack.c.b16 %v318, %v310
    %v423 = vpack.c.b16 %v319, %v311
    %v424 = vpack.c.b16 %v320, %v312
    %v425 = vpack.c.b16 %v321, %v313
    %v426 = vpack.c.b16 %v322, %v314
    %v427 = vpack.c.b16 %v323, %v315
    %v428 = vpack.c.b16 %v332, %v324
    %v429 = vpack.c.b16 %v333, %v325
    %v430 = vpack.c.b16 %v334, %v326
    %v431 = vpack.c.b16 %v335, %v327
    %v432 = vpack.c.b16 %v336, %v328
    %v433 = vpack.c.b16 %v337, %v329
    %v434 = vpack.c.b16 %v338, %v330
    %v435 = vpack.c.b16 %v339, %v331
    %v436 = vpack.c.b16 %v348, %v340
    %v437 = vpack.c.b16 %v349, %v341
    %v438 = vpack.c.b16 %v350, %v342
    %v439 = vpack.c.b16 %v351, %v343
    %v440 = vpack.c.b16 %v352, %v344
    %v441 = vpack.c.b16 %v353, %v345
    %v442 = vpack.c.b16 %v354, %v346
    %v443 = vpack.c.b16 %v355, %v347
    %v444 = vpack.c.b16 %v364, %v356
    %v445 = vpack.c.b16 %v365, %v357
    %v446 = vpack.c.b16 %v366, %v358
    %v447 = vpack.c.b16 %v367, %v359
    %v448 = vpack.c.b16 %v368, %v360
    %v449 = vpack.c.b16 %v369, %v361
    %v450 = vpack.c.b16 %v370, %v362
    %v451 = vpack.c.b16 %v371, %v363
    %v452 = vpack.c.b16 %v380, %v372
    %v453 = vpack.c.b16 %v381, %v373
    %v454 = vpack.c.b16 %v382, %v374
    %v455 = vpack.c.b16 %v383, %v375
    %v456 = vpack.c.b16 %v384, %v376
    %v457 = vpack.c.b16 %v385, %v377
    %v458 = vpack.c.b16 %v386, %v378
    %v459 = vpack.c.b16 %v387, %v379
    %v460 = vpack.c.b16 %v396, %v388
    %v461 = vpack.c.b16 %v397, %v389
    %v462 = vpack.c.b16 %v398, %v390
    %v463 = vpack.c.b16 %v399, %v391
    %v464 = vpack.c.b16 %v400, %v392
    %v465 = vpack.c.b16 %v401, %v393
    %v466 = vpack.c.b16 %v402, %v394
    %v467 = vpack.c.b16 %v403, %v395
    %532 = vmatpush.bf16.msra.mxu0 %v460
    %533 = vmatpush.bf16.msra.mxu0 %v452
    %534 = vmatpush.bf16.msra.mxu0 %v444
    %535 = vmatpush.bf16.msra.mxu0 %v436
    %536 = vmatpush.bf16.msra.mxu0 %v428
    %537 = vmatpush.bf16.msra.mxu0 %v420
    %538 = vmatpush.bf16.msra.mxu0 %v412
    %539 = vmatpush.bf16.msra.mxu0 %v404
    %540 = vmatmul.bf16.gmra.mxu0 %v129
    %v541 = vpop.f32.mrf.mxu0
    %v542 = vadd.f32 %v196, %v541
    %v543 = vpop.f32.mrf.mxu0
    %544 = vdwg.mxu0
    %545 = vmatpush.bf16.msra.mxu0 %v461
    %546 = vmatpush.bf16.msra.mxu0 %v453
    %547 = vmatpush.bf16.msra.mxu0 %v445
    %548 = vmatpush.bf16.msra.mxu0 %v437
    %549 = vmatpush.bf16.msra.mxu0 %v429
    %550 = vmatpush.bf16.msra.mxu0 %v421
    %551 = vmatpush.bf16.msra.mxu0 %v413
    %552 = vmatpush.bf16.msra.mxu0 %v405
    %553 = vmatmul.bf16.gmra.mxu0 %v129
    %v554 = vpop.f32.mrf.mxu0
    %v555 = vadd.f32 %v197, %v554
    %v556 = vpop.f32.mrf.mxu0
    %557 = vdwg.mxu0
    %558 = vmatpush.bf16.msra.mxu0 %v462
    %559 = vmatpush.bf16.msra.mxu0 %v454
    %560 = vmatpush.bf16.msra.mxu0 %v446
    %561 = vmatpush.bf16.msra.mxu0 %v438
    %562 = vmatpush.bf16.msra.mxu0 %v430
    %563 = vmatpush.bf16.msra.mxu0 %v422
    %564 = vmatpush.bf16.msra.mxu0 %v414
    %565 = vmatpush.bf16.msra.mxu0 %v406
    %566 = vmatmul.bf16.gmra.mxu0 %v129
    %v567 = vpop.f32.mrf.mxu0
    %v568 = vadd.f32 %v198, %v567
    %v569 = vpop.f32.mrf.mxu0
    %570 = vdwg.mxu0
    %571 = vmatpush.bf16.msra.mxu0 %v463
    %572 = vmatpush.bf16.msra.mxu0 %v455
    %573 = vmatpush.bf16.msra.mxu0 %v447
    %574 = vmatpush.bf16.msra.mxu0 %v439
    %575 = vmatpush.bf16.msra.mxu0 %v431
    %576 = vmatpush.bf16.msra.mxu0 %v423
    %577 = vmatpush.bf16.msra.mxu0 %v415
    %578 = vmatpush.bf16.msra.mxu0 %v407
    %579 = vmatmul.bf16.gmra.mxu0 %v129
    %v580 = vpop.f32.mrf.mxu0
    %v581 = vadd.f32 %v199, %v580
    %v582 = vpop.f32.mrf.mxu0
    %583 = vdwg.mxu0
    %584 = vmatpush.bf16.msra.mxu0 %v464
    %585 = vmatpush.bf16.msra.mxu0 %v456
    %586 = vmatpush.bf16.msra.mxu0 %v448
    %587 = vmatpush.bf16.msra.mxu0 %v440
    %588 = vmatpush.bf16.msra.mxu0 %v432
    %589 = vmatpush.bf16.msra.mxu0 %v424
    %590 = vmatpush.bf16.msra.mxu0 %v416
    %591 = vmatpush.bf16.msra.mxu0 %v408
    %592 = vmatmul.bf16.gmra.mxu0 %v129
    %v593 = vpop.f32.mrf.mxu0
    %v594 = vadd.f32 %v200, %v593
    %v595 = vpop.f32.mrf.mxu0
    %596 = vdwg.mxu0
    %597 = vmatpush.bf16.msra.mxu0 %v465
    %598 = vmatpush.bf16.msra.mxu0 %v457
    %599 = vmatpush.bf16.msra.mxu0 %v449
    %600 = vmatpush.bf16.msra.mxu0 %v441
    %601 = vmatpush.bf16.msra.mxu0 %v433
    %602 = vmatpush.bf16.msra.mxu0 %v425
    %603 = vmatpush.bf16.msra.mxu0 %v417
    %604 = vmatpush.bf16.msra.mxu0 %v409
    %605 = vmatmul.bf16.gmra.mxu0 %v129
    %v606 = vpop.f32.mrf.mxu0
    %v607 = vadd.f32 %v201, %v606
    %v608 = vpop.f32.mrf.mxu0
    %609 = vdwg.mxu0
    %610 = vmatpush.bf16.msra.mxu0 %v466
    %611 = vmatpush.bf16.msra.mxu0 %v458
    %612 = vmatpush.bf16.msra.mxu0 %v450
    %613 = vmatpush.bf16.msra.mxu0 %v442
    %614 = vmatpush.bf16.msra.mxu0 %v434
    %615 = vmatpush.bf16.msra.mxu0 %v426
    %616 = vmatpush.bf16.msra.mxu0 %v418
    %617 = vmatpush.bf16.msra.mxu0 %v410
    %618 = vmatmul.bf16.gmra.mxu0 %v129
    %v619 = vpop.f32.mrf.mxu0
    %v620 = vadd.f32 %v202, %v619
    %v621 = vpop.f32.mrf.mxu0
    %622 = vdwg.mxu0
    %623 = vmatpush.bf16.msra.mxu0 %v467
    %624 = vmatpush.bf16.msra.mxu0 %v459
    %625 = vmatpush.bf16.msra.mxu0 %v451
    %626 = vmatpush.bf16.msra.mxu0 %v443
    %627 = vmatpush.bf16.msra.mxu0 %v435
    %628 = vmatpush.bf16.msra.mxu0 %v427
    %629 = vmatpush.bf16.msra.mxu0 %v419
    %630 = vmatpush.bf16.msra.mxu0 %v411
    %631 = vmatmul.bf16.gmra.mxu0 %v129
    %v632 = vpop.f32.mrf.mxu0
    %v633 = vadd.f32 %v203, %v632
    %v634 = vpop.f32.mrf.mxu0
    %635 = vdwg.mxu0
    %v636 = vmax.f32 %v542, 0.0
    %v637 = vmax.f32 %v555, 0.0
    %v638 = vmax.f32 %v568, 0.0
    %v639 = vmax.f32 %v581, 0.0
    %v640 = vmax.f32 %v594, 0.0
    %v641 = vmax.f32 %v607, 0.0
    %v642 = vmax.f32 %v620, 0.0
    %v643 = vmax.f32 %v633, 0.0
    %v644 = vpack.c.bf16 %v636, %v636
    %v645 = vpack.c.bf16 %v637, %v637
    %v646 = vpack.c.bf16 %v638, %v638
    %v647 = vpack.c.bf16 %v639, %v639
    %v648 = vpack.c.bf16 %v640, %v640
    %v649 = vpack.c.bf16 %v641, %v641
    %v650 = vpack.c.bf16 %v642, %v642
    %v651 = vpack.c.bf16 %v643, %v643
    %v652 = vld [vmem:[#allocation8] sm:$0xff]
    %v653 = vld [vmem:[#allocation8 + $0x8] sm:$0xff]
    %v654 = vld [vmem:[#allocation8 + $0x10] sm:$0xff]
    %v655 = vld [vmem:[#allocation8 + $0x18] sm:$0xff]
    %v656 = vld [vmem:[#allocation8 + $0x20] sm:$0xff]
    %v657 = vld [vmem:[#allocation8 + $0x28] sm:$0xff]
    %v658 = vld [vmem:[#allocation8 + $0x30] sm:$0xff]
    %v659 = vld [vmem:[#allocation8 + $0x38] sm:$0xff]
    %v660 = vld [vmem:[#allocation8 + $0x40] sm:$0xff]
    %v661 = vld [vmem:[#allocation8 + $0x48] sm:$0xff]
    %v662 = vld [vmem:[#allocation8 + $0x50] sm:$0xff]
    %v663 = vld [vmem:[#allocation8 + $0x58] sm:$0xff]
    %v664 = vld [vmem:[#allocation8 + $0x60] sm:$0xff]
    %v665 = vld [vmem:[#allocation8 + $0x68] sm:$0xff]
    %v666 = vld [vmem:[#allocation8 + $0x70] sm:$0xff]
    %v667 = vld [vmem:[#allocation8 + $0x78] sm:$0xff]
    %v668 = vld [vmem:[#allocation8 + $0x80] sm:$0xff]
    %v669 = vld [vmem:[#allocation8 + $0x88] sm:$0xff]
    %v670 = vld [vmem:[#allocation8 + $0x90] sm:$0xff]
    %v671 = vld [vmem:[#allocation8 + $0x98] sm:$0xff]
    %v672 = vld [vmem:[#allocation8 + $0xa0] sm:$0xff]
    %v673 = vld [vmem:[#allocation8 + $0xa8] sm:$0xff]
    %v674 = vld [vmem:[#allocation8 + $0xb0] sm:$0xff]
    %v675 = vld [vmem:[#allocation8 + $0xb8] sm:$0xff]
    %v676 = vld [vmem:[#allocation8 + $0xc0] sm:$0xff]
    %v677 = vld [vmem:[#allocation8 + $0xc8] sm:$0xff]
    %v678 = vld [vmem:[#allocation8 + $0xd0] sm:$0xff]
    %v679 = vld [vmem:[#allocation8 + $0xd8] sm:$0xff]
    %v680 = vld [vmem:[#allocation8 + $0xe0] sm:$0xff]
    %v681 = vld [vmem:[#allocation8 + $0xe8] sm:$0xff]
    %v682 = vld [vmem:[#allocation8 + $0xf0] sm:$0xff]
    %v683 = vld [vmem:[#allocation8 + $0xf8] sm:$0xff]
    %v684 = vld [vmem:[#allocation8 + $0x100] sm:$0xff]
    %v685 = vld [vmem:[#allocation8 + $0x108] sm:$0xff]
    %v686 = vld [vmem:[#allocation8 + $0x110] sm:$0xff]
    %v687 = vld [vmem:[#allocation8 + $0x118] sm:$0xff]
    %v688 = vld [vmem:[#allocation8 + $0x120] sm:$0xff]
    %v689 = vld [vmem:[#allocation8 + $0x128] sm:$0xff]
    %v690 = vld [vmem:[#allocation8 + $0x130] sm:$0xff]
    %v691 = vld [vmem:[#allocation8 + $0x138] sm:$0xff]
    %v692 = vld [vmem:[#allocation8 + $0x140] sm:$0xff]
    %v693 = vld [vmem:[#allocation8 + $0x148] sm:$0xff]
    %v694 = vld [vmem:[#allocation8 + $0x150] sm:$0xff]
    %v695 = vld [vmem:[#allocation8 + $0x158] sm:$0xff]
    %v696 = vld [vmem:[#allocation8 + $0x160] sm:$0xff]
    %v697 = vld [vmem:[#allocation8 + $0x168] sm:$0xff]
    %v698 = vld [vmem:[#allocation8 + $0x170] sm:$0xff]
    %v699 = vld [vmem:[#allocation8 + $0x178] sm:$0xff]
    %v700 = vld [vmem:[#allocation8 + $0x180] sm:$0xff]
    %v701 = vld [vmem:[#allocation8 + $0x188] sm:$0xff]
    %v702 = vld [vmem:[#allocation8 + $0x190] sm:$0xff]
    %v703 = vld [vmem:[#allocation8 + $0x198] sm:$0xff]
    %v704 = vld [vmem:[#allocation8 + $0x1a0] sm:$0xff]
    %v705 = vld [vmem:[#allocation8 + $0x1a8] sm:$0xff]
    %v706 = vld [vmem:[#allocation8 + $0x1b0] sm:$0xff]
    %v707 = vld [vmem:[#allocation8 + $0x1b8] sm:$0xff]
    %v708 = vld [vmem:[#allocation8 + $0x1c0] sm:$0xff]
    %v709 = vld [vmem:[#allocation8 + $0x1c8] sm:$0xff]
    %v710 = vld [vmem:[#allocation8 + $0x1d0] sm:$0xff]
    %v711 = vld [vmem:[#allocation8 + $0x1d8] sm:$0xff]
    %v712 = vld [vmem:[#allocation8 + $0x1e0] sm:$0xff]
    %v713 = vld [vmem:[#allocation8 + $0x1e8] sm:$0xff]
    %v714 = vld [vmem:[#allocation8 + $0x1f0] sm:$0xff]
    %v715 = vld [vmem:[#allocation8 + $0x1f8] sm:$0xff]
    %v716 = vld [vmem:[#allocation8 + $0x200] sm:$0xff]
    %v717 = vld [vmem:[#allocation8 + $0x208] sm:$0xff]
    %v718 = vld [vmem:[#allocation8 + $0x210] sm:$0xff]
    %v719 = vld [vmem:[#allocation8 + $0x218] sm:$0xff]
    %v720 = vld [vmem:[#allocation8 + $0x220] sm:$0xff]
    %v721 = vld [vmem:[#allocation8 + $0x228] sm:$0xff]
    %v722 = vld [vmem:[#allocation8 + $0x230] sm:$0xff]
    %v723 = vld [vmem:[#allocation8 + $0x238] sm:$0xff]
    %v724 = vld [vmem:[#allocation8 + $0x240] sm:$0xff]
    %v725 = vld [vmem:[#allocation8 + $0x248] sm:$0xff]
    %v726 = vld [vmem:[#allocation8 + $0x250] sm:$0xff]
    %v727 = vld [vmem:[#allocation8 + $0x258] sm:$0xff]
    %v728 = vld [vmem:[#allocation8 + $0x260] sm:$0xff]
    %v729 = vld [vmem:[#allocation8 + $0x268] sm:$0xff]
    %v730 = vld [vmem:[#allocation8 + $0x270] sm:$0xff]
    %v731 = vld [vmem:[#allocation8 + $0x278] sm:$0xff]
    %v732 = vld [vmem:[#allocation8 + $0x280] sm:$0xff]
    %v733 = vld [vmem:[#allocation8 + $0x288] sm:$0xff]
    %v734 = vld [vmem:[#allocation8 + $0x290] sm:$0xff]
    %v735 = vld [vmem:[#allocation8 + $0x298] sm:$0xff]
    %v736 = vld [vmem:[#allocation8 + $0x2a0] sm:$0xff]
    %v737 = vld [vmem:[#allocation8 + $0x2a8] sm:$0xff]
    %v738 = vld [vmem:[#allocation8 + $0x2b0] sm:$0xff]
    %v739 = vld [vmem:[#allocation8 + $0x2b8] sm:$0xff]
    %v740 = vld [vmem:[#allocation8 + $0x2c0] sm:$0xff]
    %v741 = vld [vmem:[#allocation8 + $0x2c8] sm:$0xff]
    %v742 = vld [vmem:[#allocation8 + $0x2d0] sm:$0xff]
    %v743 = vld [vmem:[#allocation8 + $0x2d8] sm:$0xff]
    %v744 = vld [vmem:[#allocation8 + $0x2e0] sm:$0xff]
    %v745 = vld [vmem:[#allocation8 + $0x2e8] sm:$0xff]
    %v746 = vld [vmem:[#allocation8 + $0x2f0] sm:$0xff]
    %v747 = vld [vmem:[#allocation8 + $0x2f8] sm:$0xff]
    %v748 = vld [vmem:[#allocation8 + $0x300] sm:$0xff]
    %v749 = vld [vmem:[#allocation8 + $0x308] sm:$0xff]
    %v750 = vld [vmem:[#allocation8 + $0x310] sm:$0xff]
    %v751 = vld [vmem:[#allocation8 + $0x318] sm:$0xff]
    %v752 = vld [vmem:[#allocation8 + $0x320] sm:$0xff]
    %v753 = vld [vmem:[#allocation8 + $0x328] sm:$0xff]
    %v754 = vld [vmem:[#allocation8 + $0x330] sm:$0xff]
    %v755 = vld [vmem:[#allocation8 + $0x338] sm:$0xff]
    %v756 = vld [vmem:[#allocation8 + $0x340] sm:$0xff]
    %v757 = vld [vmem:[#allocation8 + $0x348] sm:$0xff]
    %v758 = vld [vmem:[#allocation8 + $0x350] sm:$0xff]
    %v759 = vld [vmem:[#allocation8 + $0x358] sm:$0xff]
    %v760 = vld [vmem:[#allocation8 + $0x360] sm:$0xff]
    %v761 = vld [vmem:[#allocation8 + $0x368] sm:$0xff]
    %v762 = vld [vmem:[#allocation8 + $0x370] sm:$0xff]
    %v763 = vld [vmem:[#allocation8 + $0x378] sm:$0xff]
    %v764 = vld [vmem:[#allocation8 + $0x380] sm:$0xff]
    %v765 = vld [vmem:[#allocation8 + $0x388] sm:$0xff]
    %v766 = vld [vmem:[#allocation8 + $0x390] sm:$0xff]
    %v767 = vld [vmem:[#allocation8 + $0x398] sm:$0xff]
    %v768 = vld [vmem:[#allocation8 + $0x3a0] sm:$0xff]
    %v769 = vld [vmem:[#allocation8 + $0x3a8] sm:$0xff]
    %v770 = vld [vmem:[#allocation8 + $0x3b0] sm:$0xff]
    %v771 = vld [vmem:[#allocation8 + $0x3b8] sm:$0xff]
    %v772 = vld [vmem:[#allocation8 + $0x3c0] sm:$0xff]
    %v773 = vld [vmem:[#allocation8 + $0x3c8] sm:$0xff]
    %v774 = vld [vmem:[#allocation8 + $0x3d0] sm:$0xff]
    %v775 = vld [vmem:[#allocation8 + $0x3d8] sm:$0xff]
    %v776 = vld [vmem:[#allocation8 + $0x3e0] sm:$0xff]
    %v777 = vld [vmem:[#allocation8 + $0x3e8] sm:$0xff]
    %v778 = vld [vmem:[#allocation8 + $0x3f0] sm:$0xff]
    %v779 = vld [vmem:[#allocation8 + $0x3f8] sm:$0xff]
    %v780 = vld [vmem:[#allocation8 + $0x400] sm:$0xff]
    %v781 = vld [vmem:[#allocation8 + $0x408] sm:$0xff]
    %v782 = vld [vmem:[#allocation8 + $0x410] sm:$0xff]
    %v783 = vld [vmem:[#allocation8 + $0x418] sm:$0xff]
    %v784 = vld [vmem:[#allocation8 + $0x420] sm:$0xff]
    %v785 = vld [vmem:[#allocation8 + $0x428] sm:$0xff]
    %v786 = vld [vmem:[#allocation8 + $0x430] sm:$0xff]
    %v787 = vld [vmem:[#allocation8 + $0x438] sm:$0xff]
    %v788 = vld [vmem:[#allocation8 + $0x440] sm:$0xff]
    %v789 = vld [vmem:[#allocation8 + $0x448] sm:$0xff]
    %v790 = vld [vmem:[#allocation8 + $0x450] sm:$0xff]
    %v791 = vld [vmem:[#allocation8 + $0x458] sm:$0xff]
    %v792 = vld [vmem:[#allocation8 + $0x460] sm:$0xff]
    %v793 = vld [vmem:[#allocation8 + $0x468] sm:$0xff]
    %v794 = vld [vmem:[#allocation8 + $0x470] sm:$0xff]
    %v795 = vld [vmem:[#allocation8 + $0x478] sm:$0xff]
    %v796 = vld [vmem:[#allocation8 + $0x480] sm:$0xff]
    %v797 = vld [vmem:[#allocation8 + $0x488] sm:$0xff]
    %v798 = vld [vmem:[#allocation8 + $0x490] sm:$0xff]
    %v799 = vld [vmem:[#allocation8 + $0x498] sm:$0xff]
    %v800 = vld [vmem:[#allocation8 + $0x4a0] sm:$0xff]
    %v801 = vld [vmem:[#allocation8 + $0x4a8] sm:$0xff]
    %v802 = vld [vmem:[#allocation8 + $0x4b0] sm:$0xff]
    %v803 = vld [vmem:[#allocation8 + $0x4b8] sm:$0xff]
    %v804 = vld [vmem:[#allocation8 + $0x4c0] sm:$0xff]
    %v805 = vld [vmem:[#allocation8 + $0x4c8] sm:$0xff]
    %v806 = vld [vmem:[#allocation8 + $0x4d0] sm:$0xff]
    %v807 = vld [vmem:[#allocation8 + $0x4d8] sm:$0xff]
    %v808 = vld [vmem:[#allocation8 + $0x4e0] sm:$0xff]
    %v809 = vld [vmem:[#allocation8 + $0x4e8] sm:$0xff]
    %v810 = vld [vmem:[#allocation8 + $0x4f0] sm:$0xff]
    %v811 = vld [vmem:[#allocation8 + $0x4f8] sm:$0xff]
    %v812 = vld [vmem:[#allocation8 + $0x500] sm:$0xff]
    %v813 = vld [vmem:[#allocation8 + $0x508] sm:$0xff]
    %v814 = vld [vmem:[#allocation8 + $0x510] sm:$0xff]
    %v815 = vld [vmem:[#allocation8 + $0x518] sm:$0xff]
    %v816 = vld [vmem:[#allocation8 + $0x520] sm:$0xff]
    %v817 = vld [vmem:[#allocation8 + $0x528] sm:$0xff]
    %v818 = vld [vmem:[#allocation8 + $0x530] sm:$0xff]
    %v819 = vld [vmem:[#allocation8 + $0x538] sm:$0xff]
    %v820 = vld [vmem:[#allocation8 + $0x540] sm:$0xff]
    %v821 = vld [vmem:[#allocation8 + $0x548] sm:$0xff]
    %v822 = vld [vmem:[#allocation8 + $0x550] sm:$0xff]
    %v823 = vld [vmem:[#allocation8 + $0x558] sm:$0xff]
    %v824 = vld [vmem:[#allocation8 + $0x560] sm:$0xff]
    %v825 = vld [vmem:[#allocation8 + $0x568] sm:$0xff]
    %v826 = vld [vmem:[#allocation8 + $0x570] sm:$0xff]
    %v827 = vld [vmem:[#allocation8 + $0x578] sm:$0xff]
    %v828 = vld [vmem:[#allocation8 + $0x580] sm:$0xff]
    %v829 = vld [vmem:[#allocation8 + $0x588] sm:$0xff]
    %v830 = vld [vmem:[#allocation8 + $0x590] sm:$0xff]
    %v831 = vld [vmem:[#allocation8 + $0x598] sm:$0xff]
    %v832 = vld [vmem:[#allocation8 + $0x5a0] sm:$0xff]
    %v833 = vld [vmem:[#allocation8 + $0x5a8] sm:$0xff]
    %v834 = vld [vmem:[#allocation8 + $0x5b0] sm:$0xff]
    %v835 = vld [vmem:[#allocation8 + $0x5b8] sm:$0xff]
    %v836 = vld [vmem:[#allocation8 + $0x5c0] sm:$0xff]
    %v837 = vld [vmem:[#allocation8 + $0x5c8] sm:$0xff]
    %v838 = vld [vmem:[#allocation8 + $0x5d0] sm:$0xff]
    %v839 = vld [vmem:[#allocation8 + $0x5d8] sm:$0xff]
    %v840 = vld [vmem:[#allocation8 + $0x5e0] sm:$0xff]
    %v841 = vld [vmem:[#allocation8 + $0x5e8] sm:$0xff]
    %v842 = vld [vmem:[#allocation8 + $0x5f0] sm:$0xff]
    %v843 = vld [vmem:[#allocation8 + $0x5f8] sm:$0xff]
    %v844 = vld [vmem:[#allocation8 + $0x600] sm:$0xff]
    %v845 = vld [vmem:[#allocation8 + $0x608] sm:$0xff]
    %v846 = vld [vmem:[#allocation8 + $0x610] sm:$0xff]
    %v847 = vld [vmem:[#allocation8 + $0x618] sm:$0xff]
    %v848 = vld [vmem:[#allocation8 + $0x620] sm:$0xff]
    %v849 = vld [vmem:[#allocation8 + $0x628] sm:$0xff]
    %v850 = vld [vmem:[#allocation8 + $0x630] sm:$0xff]
    %v851 = vld [vmem:[#allocation8 + $0x638] sm:$0xff]
    %v852 = vld [vmem:[#allocation8 + $0x640] sm:$0xff]
    %v853 = vld [vmem:[#allocation8 + $0x648] sm:$0xff]
    %v854 = vld [vmem:[#allocation8 + $0x650] sm:$0xff]
    %v855 = vld [vmem:[#allocation8 + $0x658] sm:$0xff]
    %v856 = vld [vmem:[#allocation8 + $0x660] sm:$0xff]
    %v857 = vld [vmem:[#allocation8 + $0x668] sm:$0xff]
    %v858 = vld [vmem:[#allocation8 + $0x670] sm:$0xff]
    %v859 = vld [vmem:[#allocation8 + $0x678] sm:$0xff]
    %v860 = vld [vmem:[#allocation8 + $0x680] sm:$0xff]
    %v861 = vld [vmem:[#allocation8 + $0x688] sm:$0xff]
    %v862 = vld [vmem:[#allocation8 + $0x690] sm:$0xff]
    %v863 = vld [vmem:[#allocation8 + $0x698] sm:$0xff]
    %v864 = vld [vmem:[#allocation8 + $0x6a0] sm:$0xff]
    %v865 = vld [vmem:[#allocation8 + $0x6a8] sm:$0xff]
    %v866 = vld [vmem:[#allocation8 + $0x6b0] sm:$0xff]
    %v867 = vld [vmem:[#allocation8 + $0x6b8] sm:$0xff]
    %v868 = vld [vmem:[#allocation8 + $0x6c0] sm:$0xff]
    %v869 = vld [vmem:[#allocation8 + $0x6c8] sm:$0xff]
    %v870 = vld [vmem:[#allocation8 + $0x6d0] sm:$0xff]
    %v871 = vld [vmem:[#allocation8 + $0x6d8] sm:$0xff]
    %v872 = vld [vmem:[#allocation8 + $0x6e0] sm:$0xff]
    %v873 = vld [vmem:[#allocation8 + $0x6e8] sm:$0xff]
    %v874 = vld [vmem:[#allocation8 + $0x6f0] sm:$0xff]
    %v875 = vld [vmem:[#allocation8 + $0x6f8] sm:$0xff]
    %v876 = vld [vmem:[#allocation8 + $0x700] sm:$0xff]
    %v877 = vld [vmem:[#allocation8 + $0x708] sm:$0xff]
    %v878 = vld [vmem:[#allocation8 + $0x710] sm:$0xff]
    %v879 = vld [vmem:[#allocation8 + $0x718] sm:$0xff]
    %v880 = vld [vmem:[#allocation8 + $0x720] sm:$0xff]
    %v881 = vld [vmem:[#allocation8 + $0x728] sm:$0xff]
    %v882 = vld [vmem:[#allocation8 + $0x730] sm:$0xff]
    %v883 = vld [vmem:[#allocation8 + $0x738] sm:$0xff]
    %v884 = vld [vmem:[#allocation8 + $0x740] sm:$0xff]
    %v885 = vld [vmem:[#allocation8 + $0x748] sm:$0xff]
    %v886 = vld [vmem:[#allocation8 + $0x750] sm:$0xff]
    %v887 = vld [vmem:[#allocation8 + $0x758] sm:$0xff]
    %v888 = vld [vmem:[#allocation8 + $0x760] sm:$0xff]
    %v889 = vld [vmem:[#allocation8 + $0x768] sm:$0xff]
    %v890 = vld [vmem:[#allocation8 + $0x770] sm:$0xff]
    %v891 = vld [vmem:[#allocation8 + $0x778] sm:$0xff]
    %v892 = vld [vmem:[#allocation8 + $0x780] sm:$0xff]
    %v893 = vld [vmem:[#allocation8 + $0x788] sm:$0xff]
    %v894 = vld [vmem:[#allocation8 + $0x790] sm:$0xff]
    %v895 = vld [vmem:[#allocation8 + $0x798] sm:$0xff]
    %v896 = vld [vmem:[#allocation8 + $0x7a0] sm:$0xff]
    %v897 = vld [vmem:[#allocation8 + $0x7a8] sm:$0xff]
    %v898 = vld [vmem:[#allocation8 + $0x7b0] sm:$0xff]
    %v899 = vld [vmem:[#allocation8 + $0x7b8] sm:$0xff]
    %v900 = vld [vmem:[#allocation8 + $0x7c0] sm:$0xff]
    %v901 = vld [vmem:[#allocation8 + $0x7c8] sm:$0xff]
    %v902 = vld [vmem:[#allocation8 + $0x7d0] sm:$0xff]
    %v903 = vld [vmem:[#allocation8 + $0x7d8] sm:$0xff]
    %v904 = vld [vmem:[#allocation8 + $0x7e0] sm:$0xff]
    %v905 = vld [vmem:[#allocation8 + $0x7e8] sm:$0xff]
    %v906 = vld [vmem:[#allocation8 + $0x7f0] sm:$0xff]
    %v907 = vld [vmem:[#allocation8 + $0x7f8] sm:$0xff]
    %v908 = vld [vmem:[#allocation8 + $0x800] sm:$0xff]
    %v909 = vld [vmem:[#allocation8 + $0x808] sm:$0xff]
    %v910 = vld [vmem:[#allocation8 + $0x810] sm:$0xff]
    %v911 = vld [vmem:[#allocation8 + $0x818] sm:$0xff]
    %v912 = vld [vmem:[#allocation8 + $0x820] sm:$0xff]
    %v913 = vld [vmem:[#allocation8 + $0x828] sm:$0xff]
    %v914 = vld [vmem:[#allocation8 + $0x830] sm:$0xff]
    %v915 = vld [vmem:[#allocation8 + $0x838] sm:$0xff]
    %v916 = vld [vmem:[#allocation8 + $0x840] sm:$0xff]
    %v917 = vld [vmem:[#allocation8 + $0x848] sm:$0xff]
    %v918 = vld [vmem:[#allocation8 + $0x850] sm:$0xff]
    %v919 = vld [vmem:[#allocation8 + $0x858] sm:$0xff]
    %v920 = vld [vmem:[#allocation8 + $0x860] sm:$0xff]
    %v921 = vld [vmem:[#allocation8 + $0x868] sm:$0xff]
    %v922 = vld [vmem:[#allocation8 + $0x870] sm:$0xff]
    %v923 = vld [vmem:[#allocation8 + $0x878] sm:$0xff]
    %v924 = vld [vmem:[#allocation8 + $0x880] sm:$0xff]
    %v925 = vld [vmem:[#allocation8 + $0x888] sm:$0xff]
    %v926 = vld [vmem:[#allocation8 + $0x890] sm:$0xff]
    %v927 = vld [vmem:[#allocation8 + $0x898] sm:$0xff]
    %v928 = vld [vmem:[#allocation8 + $0x8a0] sm:$0xff]
    %v929 = vld [vmem:[#allocation8 + $0x8a8] sm:$0xff]
    %v930 = vld [vmem:[#allocation8 + $0x8b0] sm:$0xff]
    %v931 = vld [vmem:[#allocation8 + $0x8b8] sm:$0xff]
    %v932 = vld [vmem:[#allocation8 + $0x8c0] sm:$0xff]
    %v933 = vld [vmem:[#allocation8 + $0x8c8] sm:$0xff]
    %v934 = vld [vmem:[#allocation8 + $0x8d0] sm:$0xff]
    %v935 = vld [vmem:[#allocation8 + $0x8d8] sm:$0xff]
    %v936 = vld [vmem:[#allocation8 + $0x8e0] sm:$0xff]
    %v937 = vld [vmem:[#allocation8 + $0x8e8] sm:$0xff]
    %v938 = vld [vmem:[#allocation8 + $0x8f0] sm:$0xff]
    %v939 = vld [vmem:[#allocation8 + $0x8f8] sm:$0xff]
    %v940 = vld [vmem:[#allocation8 + $0x900] sm:$0xff]
    %v941 = vld [vmem:[#allocation8 + $0x908] sm:$0xff]
    %v942 = vld [vmem:[#allocation8 + $0x910] sm:$0xff]
    %v943 = vld [vmem:[#allocation8 + $0x918] sm:$0xff]
    %v944 = vld [vmem:[#allocation8 + $0x920] sm:$0xff]
    %v945 = vld [vmem:[#allocation8 + $0x928] sm:$0xff]
    %v946 = vld [vmem:[#allocation8 + $0x930] sm:$0xff]
    %v947 = vld [vmem:[#allocation8 + $0x938] sm:$0xff]
    %v948 = vld [vmem:[#allocation8 + $0x940] sm:$0xff]
    %v949 = vld [vmem:[#allocation8 + $0x948] sm:$0xff]
    %v950 = vld [vmem:[#allocation8 + $0x950] sm:$0xff]
    %v951 = vld [vmem:[#allocation8 + $0x958] sm:$0xff]
    %v952 = vld [vmem:[#allocation8 + $0x960] sm:$0xff]
    %v953 = vld [vmem:[#allocation8 + $0x968] sm:$0xff]
    %v954 = vld [vmem:[#allocation8 + $0x970] sm:$0xff]
    %v955 = vld [vmem:[#allocation8 + $0x978] sm:$0xff]
    %v956 = vld [vmem:[#allocation8 + $0x980] sm:$0xff]
    %v957 = vld [vmem:[#allocation8 + $0x988] sm:$0xff]
    %v958 = vld [vmem:[#allocation8 + $0x990] sm:$0xff]
    %v959 = vld [vmem:[#allocation8 + $0x998] sm:$0xff]
    %v960 = vld [vmem:[#allocation8 + $0x9a0] sm:$0xff]
    %v961 = vld [vmem:[#allocation8 + $0x9a8] sm:$0xff]
    %v962 = vld [vmem:[#allocation8 + $0x9b0] sm:$0xff]
    %v963 = vld [vmem:[#allocation8 + $0x9b8] sm:$0xff]
    %v964 = vld [vmem:[#allocation8 + $0x9c0] sm:$0xff]
    %v965 = vld [vmem:[#allocation8 + $0x9c8] sm:$0xff]
    %v966 = vld [vmem:[#allocation8 + $0x9d0] sm:$0xff]
    %v967 = vld [vmem:[#allocation8 + $0x9d8] sm:$0xff]
    %v968 = vld [vmem:[#allocation8 + $0x9e0] sm:$0xff]
    %v969 = vld [vmem:[#allocation8 + $0x9e8] sm:$0xff]
    %v970 = vld [vmem:[#allocation8 + $0x9f0] sm:$0xff]
    %v971 = vld [vmem:[#allocation8 + $0x9f8] sm:$0xff]
    %v972 = vld [vmem:[#allocation8 + $0xa00] sm:$0xff]
    %v973 = vld [vmem:[#allocation8 + $0xa08] sm:$0xff]
    %v974 = vld [vmem:[#allocation8 + $0xa10] sm:$0xff]
    %v975 = vld [vmem:[#allocation8 + $0xa18] sm:$0xff]
    %v976 = vld [vmem:[#allocation8 + $0xa20] sm:$0xff]
    %v977 = vld [vmem:[#allocation8 + $0xa28] sm:$0xff]
    %v978 = vld [vmem:[#allocation8 + $0xa30] sm:$0xff]
    %v979 = vld [vmem:[#allocation8 + $0xa38] sm:$0xff]
    %v980 = vld [vmem:[#allocation8 + $0xa40] sm:$0xff]
    %v981 = vld [vmem:[#allocation8 + $0xa48] sm:$0xff]
    %v982 = vld [vmem:[#allocation8 + $0xa50] sm:$0xff]
    %v983 = vld [vmem:[#allocation8 + $0xa58] sm:$0xff]
    %v984 = vld [vmem:[#allocation8 + $0xa60] sm:$0xff]
    %v985 = vld [vmem:[#allocation8 + $0xa68] sm:$0xff]
    %v986 = vld [vmem:[#allocation8 + $0xa70] sm:$0xff]
    %v987 = vld [vmem:[#allocation8 + $0xa78] sm:$0xff]
    %v988 = vld [vmem:[#allocation8 + $0xa80] sm:$0xff]
    %v989 = vld [vmem:[#allocation8 + $0xa88] sm:$0xff]
    %v990 = vld [vmem:[#allocation8 + $0xa90] sm:$0xff]
    %v991 = vld [vmem:[#allocation8 + $0xa98] sm:$0xff]
    %v992 = vld [vmem:[#allocation8 + $0xaa0] sm:$0xff]
    %v993 = vld [vmem:[#allocation8 + $0xaa8] sm:$0xff]
    %v994 = vld [vmem:[#allocation8 + $0xab0] sm:$0xff]
    %v995 = vld [vmem:[#allocation8 + $0xab8] sm:$0xff]
    %v996 = vld [vmem:[#allocation8 + $0xac0] sm:$0xff]
    %v997 = vld [vmem:[#allocation8 + $0xac8] sm:$0xff]
    %v998 = vld [vmem:[#allocation8 + $0xad0] sm:$0xff]
    %v999 = vld [vmem:[#allocation8 + $0xad8] sm:$0xff]
    %v1000 = vld [vmem:[#allocation8 + $0xae0] sm:$0xff]
    %v1001 = vld [vmem:[#allocation8 + $0xae8] sm:$0xff]
    %v1002 = vld [vmem:[#allocation8 + $0xaf0] sm:$0xff]
    %v1003 = vld [vmem:[#allocation8 + $0xaf8] sm:$0xff]
    %v1004 = vld [vmem:[#allocation8 + $0xb00] sm:$0xff]
    %v1005 = vld [vmem:[#allocation8 + $0xb08] sm:$0xff]
    %v1006 = vld [vmem:[#allocation8 + $0xb10] sm:$0xff]
    %v1007 = vld [vmem:[#allocation8 + $0xb18] sm:$0xff]
    %v1008 = vld [vmem:[#allocation8 + $0xb20] sm:$0xff]
    %v1009 = vld [vmem:[#allocation8 + $0xb28] sm:$0xff]
    %v1010 = vld [vmem:[#allocation8 + $0xb30] sm:$0xff]
    %v1011 = vld [vmem:[#allocation8 + $0xb38] sm:$0xff]
    %v1012 = vld [vmem:[#allocation8 + $0xb40] sm:$0xff]
    %v1013 = vld [vmem:[#allocation8 + $0xb48] sm:$0xff]
    %v1014 = vld [vmem:[#allocation8 + $0xb50] sm:$0xff]
    %v1015 = vld [vmem:[#allocation8 + $0xb58] sm:$0xff]
    %v1016 = vld [vmem:[#allocation8 + $0xb60] sm:$0xff]
    %v1017 = vld [vmem:[#allocation8 + $0xb68] sm:$0xff]
    %v1018 = vld [vmem:[#allocation8 + $0xb70] sm:$0xff]
    %v1019 = vld [vmem:[#allocation8 + $0xb78] sm:$0xff]
    %v1020 = vld [vmem:[#allocation8 + $0xb80] sm:$0xff]
    %v1021 = vld [vmem:[#allocation8 + $0xb88] sm:$0xff]
    %v1022 = vld [vmem:[#allocation8 + $0xb90] sm:$0xff]
    %v1023 = vld [vmem:[#allocation8 + $0xb98] sm:$0xff]
    %v1024 = vld [vmem:[#allocation8 + $0xba0] sm:$0xff]
    %v1025 = vld [vmem:[#allocation8 + $0xba8] sm:$0xff]
    %v1026 = vld [vmem:[#allocation8 + $0xbb0] sm:$0xff]
    %v1027 = vld [vmem:[#allocation8 + $0xbb8] sm:$0xff]
    %v1028 = vld [vmem:[#allocation8 + $0xbc0] sm:$0xff]
    %v1029 = vld [vmem:[#allocation8 + $0xbc8] sm:$0xff]
    %v1030 = vld [vmem:[#allocation8 + $0xbd0] sm:$0xff]
    %v1031 = vld [vmem:[#allocation8 + $0xbd8] sm:$0xff]
    %v1032 = vld [vmem:[#allocation8 + $0xbe0] sm:$0xff]
    %v1033 = vld [vmem:[#allocation8 + $0xbe8] sm:$0xff]
    %v1034 = vld [vmem:[#allocation8 + $0xbf0] sm:$0xff]
    %v1035 = vld [vmem:[#allocation8 + $0xbf8] sm:$0xff]
    %v1036 = vld [vmem:[#allocation8 + $0xc00] sm:$0xff]
    %v1037 = vld [vmem:[#allocation8 + $0xc08] sm:$0xff]
    %v1038 = vld [vmem:[#allocation8 + $0xc10] sm:$0xff]
    %v1039 = vld [vmem:[#allocation8 + $0xc18] sm:$0xff]
    %v1040 = vld [vmem:[#allocation8 + $0xc20] sm:$0xff]
    %v1041 = vld [vmem:[#allocation8 + $0xc28] sm:$0xff]
    %v1042 = vld [vmem:[#allocation8 + $0xc30] sm:$0xff]
    %v1043 = vld [vmem:[#allocation8 + $0xc38] sm:$0xff]
    %v1044 = vld [vmem:[#allocation8 + $0xc40] sm:$0xff]
    %v1045 = vld [vmem:[#allocation8 + $0xc48] sm:$0xff]
    %v1046 = vld [vmem:[#allocation8 + $0xc50] sm:$0xff]
    %v1047 = vld [vmem:[#allocation8 + $0xc58] sm:$0xff]
    %v1048 = vld [vmem:[#allocation8 + $0xc60] sm:$0xff]
    %v1049 = vld [vmem:[#allocation8 + $0xc68] sm:$0xff]
    %v1050 = vld [vmem:[#allocation8 + $0xc70] sm:$0xff]
    %v1051 = vld [vmem:[#allocation8 + $0xc78] sm:$0xff]
    %v1052 = vld [vmem:[#allocation8 + $0xc80] sm:$0xff]
    %v1053 = vld [vmem:[#allocation8 + $0xc88] sm:$0xff]
    %v1054 = vld [vmem:[#allocation8 + $0xc90] sm:$0xff]
    %v1055 = vld [vmem:[#allocation8 + $0xc98] sm:$0xff]
    %v1056 = vld [vmem:[#allocation8 + $0xca0] sm:$0xff]
    %v1057 = vld [vmem:[#allocation8 + $0xca8] sm:$0xff]
    %v1058 = vld [vmem:[#allocation8 + $0xcb0] sm:$0xff]
    %v1059 = vld [vmem:[#allocation8 + $0xcb8] sm:$0xff]
    %v1060 = vld [vmem:[#allocation8 + $0xcc0] sm:$0xff]
    %v1061 = vld [vmem:[#allocation8 + $0xcc8] sm:$0xff]
    %v1062 = vld [vmem:[#allocation8 + $0xcd0] sm:$0xff]
    %v1063 = vld [vmem:[#allocation8 + $0xcd8] sm:$0xff]
    %v1064 = vld [vmem:[#allocation8 + $0xce0] sm:$0xff]
    %v1065 = vld [vmem:[#allocation8 + $0xce8] sm:$0xff]
    %v1066 = vld [vmem:[#allocation8 + $0xcf0] sm:$0xff]
    %v1067 = vld [vmem:[#allocation8 + $0xcf8] sm:$0xff]
    %v1068 = vld [vmem:[#allocation8 + $0xd00] sm:$0xff]
    %v1069 = vld [vmem:[#allocation8 + $0xd08] sm:$0xff]
    %v1070 = vld [vmem:[#allocation8 + $0xd10] sm:$0xff]
    %v1071 = vld [vmem:[#allocation8 + $0xd18] sm:$0xff]
    %v1072 = vld [vmem:[#allocation8 + $0xd20] sm:$0xff]
    %v1073 = vld [vmem:[#allocation8 + $0xd28] sm:$0xff]
    %v1074 = vld [vmem:[#allocation8 + $0xd30] sm:$0xff]
    %v1075 = vld [vmem:[#allocation8 + $0xd38] sm:$0xff]
    %v1076 = vld [vmem:[#allocation8 + $0xd40] sm:$0xff]
    %v1077 = vld [vmem:[#allocation8 + $0xd48] sm:$0xff]
    %v1078 = vld [vmem:[#allocation8 + $0xd50] sm:$0xff]
    %v1079 = vld [vmem:[#allocation8 + $0xd58] sm:$0xff]
    %v1080 = vld [vmem:[#allocation8 + $0xd60] sm:$0xff]
    %v1081 = vld [vmem:[#allocation8 + $0xd68] sm:$0xff]
    %v1082 = vld [vmem:[#allocation8 + $0xd70] sm:$0xff]
    %v1083 = vld [vmem:[#allocation8 + $0xd78] sm:$0xff]
    %v1084 = vld [vmem:[#allocation8 + $0xd80] sm:$0xff]
    %v1085 = vld [vmem:[#allocation8 + $0xd88] sm:$0xff]
    %v1086 = vld [vmem:[#allocation8 + $0xd90] sm:$0xff]
    %v1087 = vld [vmem:[#allocation8 + $0xd98] sm:$0xff]
    %v1088 = vld [vmem:[#allocation8 + $0xda0] sm:$0xff]
    %v1089 = vld [vmem:[#allocation8 + $0xda8] sm:$0xff]
    %v1090 = vld [vmem:[#allocation8 + $0xdb0] sm:$0xff]
    %v1091 = vld [vmem:[#allocation8 + $0xdb8] sm:$0xff]
    %v1092 = vld [vmem:[#allocation8 + $0xdc0] sm:$0xff]
    %v1093 = vld [vmem:[#allocation8 + $0xdc8] sm:$0xff]
    %v1094 = vld [vmem:[#allocation8 + $0xdd0] sm:$0xff]
    %v1095 = vld [vmem:[#allocation8 + $0xdd8] sm:$0xff]
    %v1096 = vld [vmem:[#allocation8 + $0xde0] sm:$0xff]
    %v1097 = vld [vmem:[#allocation8 + $0xde8] sm:$0xff]
    %v1098 = vld [vmem:[#allocation8 + $0xdf0] sm:$0xff]
    %v1099 = vld [vmem:[#allocation8 + $0xdf8] sm:$0xff]
    %v1100 = vld [vmem:[#allocation8 + $0xe00] sm:$0xff]
    %v1101 = vld [vmem:[#allocation8 + $0xe08] sm:$0xff]
    %v1102 = vld [vmem:[#allocation8 + $0xe10] sm:$0xff]
    %v1103 = vld [vmem:[#allocation8 + $0xe18] sm:$0xff]
    %v1104 = vld [vmem:[#allocation8 + $0xe20] sm:$0xff]
    %v1105 = vld [vmem:[#allocation8 + $0xe28] sm:$0xff]
    %v1106 = vld [vmem:[#allocation8 + $0xe30] sm:$0xff]
    %v1107 = vld [vmem:[#allocation8 + $0xe38] sm:$0xff]
    %v1108 = vld [vmem:[#allocation8 + $0xe40] sm:$0xff]
    %v1109 = vld [vmem:[#allocation8 + $0xe48] sm:$0xff]
    %v1110 = vld [vmem:[#allocation8 + $0xe50] sm:$0xff]
    %v1111 = vld [vmem:[#allocation8 + $0xe58] sm:$0xff]
    %v1112 = vld [vmem:[#allocation8 + $0xe60] sm:$0xff]
    %v1113 = vld [vmem:[#allocation8 + $0xe68] sm:$0xff]
    %v1114 = vld [vmem:[#allocation8 + $0xe70] sm:$0xff]
    %v1115 = vld [vmem:[#allocation8 + $0xe78] sm:$0xff]
    %v1116 = vld [vmem:[#allocation8 + $0xe80] sm:$0xff]
    %v1117 = vld [vmem:[#allocation8 + $0xe88] sm:$0xff]
    %v1118 = vld [vmem:[#allocation8 + $0xe90] sm:$0xff]
    %v1119 = vld [vmem:[#allocation8 + $0xe98] sm:$0xff]
    %v1120 = vld [vmem:[#allocation8 + $0xea0] sm:$0xff]
    %v1121 = vld [vmem:[#allocation8 + $0xea8] sm:$0xff]
    %v1122 = vld [vmem:[#allocation8 + $0xeb0] sm:$0xff]
    %v1123 = vld [vmem:[#allocation8 + $0xeb8] sm:$0xff]
    %v1124 = vld [vmem:[#allocation8 + $0xec0] sm:$0xff]
    %v1125 = vld [vmem:[#allocation8 + $0xec8] sm:$0xff]
    %v1126 = vld [vmem:[#allocation8 + $0xed0] sm:$0xff]
    %v1127 = vld [vmem:[#allocation8 + $0xed8] sm:$0xff]
    %v1128 = vld [vmem:[#allocation8 + $0xee0] sm:$0xff]
    %v1129 = vld [vmem:[#allocation8 + $0xee8] sm:$0xff]
    %v1130 = vld [vmem:[#allocation8 + $0xef0] sm:$0xff]
    %v1131 = vld [vmem:[#allocation8 + $0xef8] sm:$0xff]
    %v1132 = vld [vmem:[#allocation8 + $0xf00] sm:$0xff]
    %v1133 = vld [vmem:[#allocation8 + $0xf08] sm:$0xff]
    %v1134 = vld [vmem:[#allocation8 + $0xf10] sm:$0xff]
    %v1135 = vld [vmem:[#allocation8 + $0xf18] sm:$0xff]
    %v1136 = vld [vmem:[#allocation8 + $0xf20] sm:$0xff]
    %v1137 = vld [vmem:[#allocation8 + $0xf28] sm:$0xff]
    %v1138 = vld [vmem:[#allocation8 + $0xf30] sm:$0xff]
    %v1139 = vld [vmem:[#allocation8 + $0xf38] sm:$0xff]
    %v1140 = vld [vmem:[#allocation8 + $0xf40] sm:$0xff]
    %v1141 = vld [vmem:[#allocation8 + $0xf48] sm:$0xff]
    %v1142 = vld [vmem:[#allocation8 + $0xf50] sm:$0xff]
    %v1143 = vld [vmem:[#allocation8 + $0xf58] sm:$0xff]
    %v1144 = vld [vmem:[#allocation8 + $0xf60] sm:$0xff]
    %v1145 = vld [vmem:[#allocation8 + $0xf68] sm:$0xff]
    %v1146 = vld [vmem:[#allocation8 + $0xf70] sm:$0xff]
    %v1147 = vld [vmem:[#allocation8 + $0xf78] sm:$0xff]
    %v1148 = vld [vmem:[#allocation8 + $0xf80] sm:$0xff]
    %v1149 = vld [vmem:[#allocation8 + $0xf88] sm:$0xff]
    %v1150 = vld [vmem:[#allocation8 + $0xf90] sm:$0xff]
    %v1151 = vld [vmem:[#allocation8 + $0xf98] sm:$0xff]
    %v1152 = vld [vmem:[#allocation8 + $0xfa0] sm:$0xff]
    %v1153 = vld [vmem:[#allocation8 + $0xfa8] sm:$0xff]
    %v1154 = vld [vmem:[#allocation8 + $0xfb0] sm:$0xff]
    %v1155 = vld [vmem:[#allocation8 + $0xfb8] sm:$0xff]
    %v1156 = vld [vmem:[#allocation8 + $0xfc0] sm:$0xff]
    %v1157 = vld [vmem:[#allocation8 + $0xfc8] sm:$0xff]
    %v1158 = vld [vmem:[#allocation8 + $0xfd0] sm:$0xff]
    %v1159 = vld [vmem:[#allocation8 + $0xfd8] sm:$0xff]
    %v1160 = vld [vmem:[#allocation8 + $0xfe0] sm:$0xff]
    %v1161 = vld [vmem:[#allocation8 + $0xfe8] sm:$0xff]
    %v1162 = vld [vmem:[#allocation8 + $0xff0] sm:$0xff]
    %v1163 = vld [vmem:[#allocation8 + $0xff8] sm:$0xff]
    %v1164 = vld [vmem:[#allocation10] sm:$0xff]
    %v1166 = vperm.slane %v1164, 0
    %v1167 = vperm.slane %v1164, 1
    %v1168 = vperm.slane %v1164, 2
    %v1169 = vperm.slane %v1164, 3
    %v1170 = vperm.slane %v1164, 4
    %v1171 = vperm.slane %v1164, 5
    %v1172 = vperm.slane %v1164, 6
    %v1173 = vperm.slane %v1164, 7
    %v1694 = vunpack.c.l.b16 %v652
    %v1695 = vunpack.c.h.b16 %v652
    %v1696 = vunpack.c.l.b16 %v653
    %v1697 = vunpack.c.h.b16 %v653
    %v1698 = vunpack.c.l.b16 %v654
    %v1699 = vunpack.c.h.b16 %v654
    %v1700 = vunpack.c.l.b16 %v655
    %v1701 = vunpack.c.h.b16 %v655
    %v1702 = vunpack.c.l.b16 %v656
    %v1703 = vunpack.c.h.b16 %v656
    %v1704 = vunpack.c.l.b16 %v657
    %v1705 = vunpack.c.h.b16 %v657
    %v1706 = vunpack.c.l.b16 %v658
    %v1707 = vunpack.c.h.b16 %v658
    %v1708 = vunpack.c.l.b16 %v659
    %v1709 = vunpack.c.h.b16 %v659
    %v1710 = vunpack.c.l.b16 %v660
    %v1711 = vunpack.c.h.b16 %v660
    %v1712 = vunpack.c.l.b16 %v661
    %v1713 = vunpack.c.h.b16 %v661
    %v1714 = vunpack.c.l.b16 %v662
    %v1715 = vunpack.c.h.b16 %v662
    %v1716 = vunpack.c.l.b16 %v663
    %v1717 = vunpack.c.h.b16 %v663
    %v1718 = vunpack.c.l.b16 %v664
    %v1719 = vunpack.c.h.b16 %v664
    %v1720 = vunpack.c.l.b16 %v665
    %v1721 = vunpack.c.h.b16 %v665
    %v1722 = vunpack.c.l.b16 %v666
    %v1723 = vunpack.c.h.b16 %v666
    %v1724 = vunpack.c.l.b16 %v667
    %v1725 = vunpack.c.h.b16 %v667
    %v1726 = vunpack.c.l.b16 %v668
    %v1727 = vunpack.c.h.b16 %v668
    %v1728 = vunpack.c.l.b16 %v669
    %v1729 = vunpack.c.h.b16 %v669
    %v1730 = vunpack.c.l.b16 %v670
    %v1731 = vunpack.c.h.b16 %v670
    %v1732 = vunpack.c.l.b16 %v671
    %v1733 = vunpack.c.h.b16 %v671
    %v1734 = vunpack.c.l.b16 %v672
    %v1735 = vunpack.c.h.b16 %v672
    %v1736 = vunpack.c.l.b16 %v673
    %v1737 = vunpack.c.h.b16 %v673
    %v1738 = vunpack.c.l.b16 %v674
    %v1739 = vunpack.c.h.b16 %v674
    %v1740 = vunpack.c.l.b16 %v675
    %v1741 = vunpack.c.h.b16 %v675
    %v1742 = vunpack.c.l.b16 %v676
    %v1743 = vunpack.c.h.b16 %v676
    %v1744 = vunpack.c.l.b16 %v677
    %v1745 = vunpack.c.h.b16 %v677
    %v1746 = vunpack.c.l.b16 %v678
    %v1747 = vunpack.c.h.b16 %v678
    %v1748 = vunpack.c.l.b16 %v679
    %v1749 = vunpack.c.h.b16 %v679
    %v1750 = vunpack.c.l.b16 %v680
    %v1751 = vunpack.c.h.b16 %v680
    %v1752 = vunpack.c.l.b16 %v681
    %v1753 = vunpack.c.h.b16 %v681
    %v1754 = vunpack.c.l.b16 %v682
    %v1755 = vunpack.c.h.b16 %v682
    %v1756 = vunpack.c.l.b16 %v683
    %v1757 = vunpack.c.h.b16 %v683
    %v1758 = vunpack.c.l.b16 %v684
    %v1759 = vunpack.c.h.b16 %v684
    %v1760 = vunpack.c.l.b16 %v685
    %v1761 = vunpack.c.h.b16 %v685
    %v1762 = vunpack.c.l.b16 %v686
    %v1763 = vunpack.c.h.b16 %v686
    %v1764 = vunpack.c.l.b16 %v687
    %v1765 = vunpack.c.h.b16 %v687
    %v1766 = vunpack.c.l.b16 %v688
    %v1767 = vunpack.c.h.b16 %v688
    %v1768 = vunpack.c.l.b16 %v689
    %v1769 = vunpack.c.h.b16 %v689
    %v1770 = vunpack.c.l.b16 %v690
    %v1771 = vunpack.c.h.b16 %v690
    %v1772 = vunpack.c.l.b16 %v691
    %v1773 = vunpack.c.h.b16 %v691
    %v1774 = vunpack.c.l.b16 %v692
    %v1775 = vunpack.c.h.b16 %v692
    %v1776 = vunpack.c.l.b16 %v693
    %v1777 = vunpack.c.h.b16 %v693
    %v1778 = vunpack.c.l.b16 %v694
    %v1779 = vunpack.c.h.b16 %v694
    %v1780 = vunpack.c.l.b16 %v695
    %v1781 = vunpack.c.h.b16 %v695
    %v1782 = vunpack.c.l.b16 %v696
    %v1783 = vunpack.c.h.b16 %v696
    %v1784 = vunpack.c.l.b16 %v697
    %v1785 = vunpack.c.h.b16 %v697
    %v1786 = vunpack.c.l.b16 %v698
    %v1787 = vunpack.c.h.b16 %v698
    %v1788 = vunpack.c.l.b16 %v699
    %v1789 = vunpack.c.h.b16 %v699
    %v1790 = vunpack.c.l.b16 %v700
    %v1791 = vunpack.c.h.b16 %v700
    %v1792 = vunpack.c.l.b16 %v701
    %v1793 = vunpack.c.h.b16 %v701
    %v1794 = vunpack.c.l.b16 %v702
    %v1795 = vunpack.c.h.b16 %v702
    %v1796 = vunpack.c.l.b16 %v703
    %v1797 = vunpack.c.h.b16 %v703
    %v1798 = vunpack.c.l.b16 %v704
    %v1799 = vunpack.c.h.b16 %v704
    %v1800 = vunpack.c.l.b16 %v705
    %v1801 = vunpack.c.h.b16 %v705
    %v1802 = vunpack.c.l.b16 %v706
    %v1803 = vunpack.c.h.b16 %v706
    %v1804 = vunpack.c.l.b16 %v707
    %v1805 = vunpack.c.h.b16 %v707
    %v1806 = vunpack.c.l.b16 %v708
    %v1807 = vunpack.c.h.b16 %v708
    %v1808 = vunpack.c.l.b16 %v709
    %v1809 = vunpack.c.h.b16 %v709
    %v1810 = vunpack.c.l.b16 %v710
    %v1811 = vunpack.c.h.b16 %v710
    %v1812 = vunpack.c.l.b16 %v711
    %v1813 = vunpack.c.h.b16 %v711
    %v1814 = vunpack.c.l.b16 %v712
    %v1815 = vunpack.c.h.b16 %v712
    %v1816 = vunpack.c.l.b16 %v713
    %v1817 = vunpack.c.h.b16 %v713
    %v1818 = vunpack.c.l.b16 %v714
    %v1819 = vunpack.c.h.b16 %v714
    %v1820 = vunpack.c.l.b16 %v715
    %v1821 = vunpack.c.h.b16 %v715
    %v1822 = vunpack.c.l.b16 %v716
    %v1823 = vunpack.c.h.b16 %v716
    %v1824 = vunpack.c.l.b16 %v717
    %v1825 = vunpack.c.h.b16 %v717
    %v1826 = vunpack.c.l.b16 %v718
    %v1827 = vunpack.c.h.b16 %v718
    %v1828 = vunpack.c.l.b16 %v719
    %v1829 = vunpack.c.h.b16 %v719
    %v1830 = vunpack.c.l.b16 %v720
    %v1831 = vunpack.c.h.b16 %v720
    %v1832 = vunpack.c.l.b16 %v721
    %v1833 = vunpack.c.h.b16 %v721
    %v1834 = vunpack.c.l.b16 %v722
    %v1835 = vunpack.c.h.b16 %v722
    %v1836 = vunpack.c.l.b16 %v723
    %v1837 = vunpack.c.h.b16 %v723
    %v1838 = vunpack.c.l.b16 %v724
    %v1839 = vunpack.c.h.b16 %v724
    %v1840 = vunpack.c.l.b16 %v725
    %v1841 = vunpack.c.h.b16 %v725
    %v1842 = vunpack.c.l.b16 %v726
    %v1843 = vunpack.c.h.b16 %v726
    %v1844 = vunpack.c.l.b16 %v727
    %v1845 = vunpack.c.h.b16 %v727
    %v1846 = vunpack.c.l.b16 %v728
    %v1847 = vunpack.c.h.b16 %v728
    %v1848 = vunpack.c.l.b16 %v729
    %v1849 = vunpack.c.h.b16 %v729
    %v1850 = vunpack.c.l.b16 %v730
    %v1851 = vunpack.c.h.b16 %v730
    %v1852 = vunpack.c.l.b16 %v731
    %v1853 = vunpack.c.h.b16 %v731
    %v1854 = vunpack.c.l.b16 %v732
    %v1855 = vunpack.c.h.b16 %v732
    %v1856 = vunpack.c.l.b16 %v733
    %v1857 = vunpack.c.h.b16 %v733
    %v1858 = vunpack.c.l.b16 %v734
    %v1859 = vunpack.c.h.b16 %v734
    %v1860 = vunpack.c.l.b16 %v735
    %v1861 = vunpack.c.h.b16 %v735
    %v1862 = vunpack.c.l.b16 %v736
    %v1863 = vunpack.c.h.b16 %v736
    %v1864 = vunpack.c.l.b16 %v737
    %v1865 = vunpack.c.h.b16 %v737
    %v1866 = vunpack.c.l.b16 %v738
    %v1867 = vunpack.c.h.b16 %v738
    %v1868 = vunpack.c.l.b16 %v739
    %v1869 = vunpack.c.h.b16 %v739
    %v1870 = vunpack.c.l.b16 %v740
    %v1871 = vunpack.c.h.b16 %v740
    %v1872 = vunpack.c.l.b16 %v741
    %v1873 = vunpack.c.h.b16 %v741
    %v1874 = vunpack.c.l.b16 %v742
    %v1875 = vunpack.c.h.b16 %v742
    %v1876 = vunpack.c.l.b16 %v743
    %v1877 = vunpack.c.h.b16 %v743
    %v1878 = vunpack.c.l.b16 %v744
    %v1879 = vunpack.c.h.b16 %v744
    %v1880 = vunpack.c.l.b16 %v745
    %v1881 = vunpack.c.h.b16 %v745
    %v1882 = vunpack.c.l.b16 %v746
    %v1883 = vunpack.c.h.b16 %v746
    %v1884 = vunpack.c.l.b16 %v747
    %v1885 = vunpack.c.h.b16 %v747
    %v1886 = vunpack.c.l.b16 %v748
    %v1887 = vunpack.c.h.b16 %v748
    %v1888 = vunpack.c.l.b16 %v749
    %v1889 = vunpack.c.h.b16 %v749
    %v1890 = vunpack.c.l.b16 %v750
    %v1891 = vunpack.c.h.b16 %v750
    %v1892 = vunpack.c.l.b16 %v751
    %v1893 = vunpack.c.h.b16 %v751
    %v1894 = vunpack.c.l.b16 %v752
    %v1895 = vunpack.c.h.b16 %v752
    %v1896 = vunpack.c.l.b16 %v753
    %v1897 = vunpack.c.h.b16 %v753
    %v1898 = vunpack.c.l.b16 %v754
    %v1899 = vunpack.c.h.b16 %v754
    %v1900 = vunpack.c.l.b16 %v755
    %v1901 = vunpack.c.h.b16 %v755
    %v1902 = vunpack.c.l.b16 %v756
    %v1903 = vunpack.c.h.b16 %v756
    %v1904 = vunpack.c.l.b16 %v757
    %v1905 = vunpack.c.h.b16 %v757
    %v1906 = vunpack.c.l.b16 %v758
    %v1907 = vunpack.c.h.b16 %v758
    %v1908 = vunpack.c.l.b16 %v759
    %v1909 = vunpack.c.h.b16 %v759
    %v1910 = vunpack.c.l.b16 %v760
    %v1911 = vunpack.c.h.b16 %v760
    %v1912 = vunpack.c.l.b16 %v761
    %v1913 = vunpack.c.h.b16 %v761
    %v1914 = vunpack.c.l.b16 %v762
    %v1915 = vunpack.c.h.b16 %v762
    %v1916 = vunpack.c.l.b16 %v763
    %v1917 = vunpack.c.h.b16 %v763
    %v1918 = vunpack.c.l.b16 %v764
    %v1919 = vunpack.c.h.b16 %v764
    %v1920 = vunpack.c.l.b16 %v765
    %v1921 = vunpack.c.h.b16 %v765
    %v1922 = vunpack.c.l.b16 %v766
    %v1923 = vunpack.c.h.b16 %v766
    %v1924 = vunpack.c.l.b16 %v767
    %v1925 = vunpack.c.h.b16 %v767
    %v1926 = vunpack.c.l.b16 %v768
    %v1927 = vunpack.c.h.b16 %v768
    %v1928 = vunpack.c.l.b16 %v769
    %v1929 = vunpack.c.h.b16 %v769
    %v1930 = vunpack.c.l.b16 %v770
    %v1931 = vunpack.c.h.b16 %v770
    %v1932 = vunpack.c.l.b16 %v771
    %v1933 = vunpack.c.h.b16 %v771
    %v1934 = vunpack.c.l.b16 %v772
    %v1935 = vunpack.c.h.b16 %v772
    %v1936 = vunpack.c.l.b16 %v773
    %v1937 = vunpack.c.h.b16 %v773
    %v1938 = vunpack.c.l.b16 %v774
    %v1939 = vunpack.c.h.b16 %v774
    %v1940 = vunpack.c.l.b16 %v775
    %v1941 = vunpack.c.h.b16 %v775
    %v1942 = vunpack.c.l.b16 %v776
    %v1943 = vunpack.c.h.b16 %v776
    %v1944 = vunpack.c.l.b16 %v777
    %v1945 = vunpack.c.h.b16 %v777
    %v1946 = vunpack.c.l.b16 %v778
    %v1947 = vunpack.c.h.b16 %v778
    %v1948 = vunpack.c.l.b16 %v779
    %v1949 = vunpack.c.h.b16 %v779
    %v1950 = vunpack.c.l.b16 %v780
    %v1951 = vunpack.c.h.b16 %v780
    %v1952 = vunpack.c.l.b16 %v781
    %v1953 = vunpack.c.h.b16 %v781
    %v1954 = vunpack.c.l.b16 %v782
    %v1955 = vunpack.c.h.b16 %v782
    %v1956 = vunpack.c.l.b16 %v783
    %v1957 = vunpack.c.h.b16 %v783
    %v1958 = vunpack.c.l.b16 %v784
    %v1959 = vunpack.c.h.b16 %v784
    %v1960 = vunpack.c.l.b16 %v785
    %v1961 = vunpack.c.h.b16 %v785
    %v1962 = vunpack.c.l.b16 %v786
    %v1963 = vunpack.c.h.b16 %v786
    %v1964 = vunpack.c.l.b16 %v787
    %v1965 = vunpack.c.h.b16 %v787
    %v1966 = vunpack.c.l.b16 %v788
    %v1967 = vunpack.c.h.b16 %v788
    %v1968 = vunpack.c.l.b16 %v789
    %v1969 = vunpack.c.h.b16 %v789
    %v1970 = vunpack.c.l.b16 %v790
    %v1971 = vunpack.c.h.b16 %v790
    %v1972 = vunpack.c.l.b16 %v791
    %v1973 = vunpack.c.h.b16 %v791
    %v1974 = vunpack.c.l.b16 %v792
    %v1975 = vunpack.c.h.b16 %v792
    %v1976 = vunpack.c.l.b16 %v793
    %v1977 = vunpack.c.h.b16 %v793
    %v1978 = vunpack.c.l.b16 %v794
    %v1979 = vunpack.c.h.b16 %v794
    %v1980 = vunpack.c.l.b16 %v795
    %v1981 = vunpack.c.h.b16 %v795
    %v1982 = vunpack.c.l.b16 %v796
    %v1983 = vunpack.c.h.b16 %v796
    %v1984 = vunpack.c.l.b16 %v797
    %v1985 = vunpack.c.h.b16 %v797
    %v1986 = vunpack.c.l.b16 %v798
    %v1987 = vunpack.c.h.b16 %v798
    %v1988 = vunpack.c.l.b16 %v799
    %v1989 = vunpack.c.h.b16 %v799
    %v1990 = vunpack.c.l.b16 %v800
    %v1991 = vunpack.c.h.b16 %v800
    %v1992 = vunpack.c.l.b16 %v801
    %v1993 = vunpack.c.h.b16 %v801
    %v1994 = vunpack.c.l.b16 %v802
    %v1995 = vunpack.c.h.b16 %v802
    %v1996 = vunpack.c.l.b16 %v803
    %v1997 = vunpack.c.h.b16 %v803
    %v1998 = vunpack.c.l.b16 %v804
    %v1999 = vunpack.c.h.b16 %v804
    %v2000 = vunpack.c.l.b16 %v805
    %v2001 = vunpack.c.h.b16 %v805
    %v2002 = vunpack.c.l.b16 %v806
    %v2003 = vunpack.c.h.b16 %v806
    %v2004 = vunpack.c.l.b16 %v807
    %v2005 = vunpack.c.h.b16 %v807
    %v2006 = vunpack.c.l.b16 %v808
    %v2007 = vunpack.c.h.b16 %v808
    %v2008 = vunpack.c.l.b16 %v809
    %v2009 = vunpack.c.h.b16 %v809
    %v2010 = vunpack.c.l.b16 %v810
    %v2011 = vunpack.c.h.b16 %v810
    %v2012 = vunpack.c.l.b16 %v811
    %v2013 = vunpack.c.h.b16 %v811
    %v2014 = vunpack.c.l.b16 %v812
    %v2015 = vunpack.c.h.b16 %v812
    %v2016 = vunpack.c.l.b16 %v813
    %v2017 = vunpack.c.h.b16 %v813
    %v2018 = vunpack.c.l.b16 %v814
    %v2019 = vunpack.c.h.b16 %v814
    %v2020 = vunpack.c.l.b16 %v815
    %v2021 = vunpack.c.h.b16 %v815
    %v2022 = vunpack.c.l.b16 %v816
    %v2023 = vunpack.c.h.b16 %v816
    %v2024 = vunpack.c.l.b16 %v817
    %v2025 = vunpack.c.h.b16 %v817
    %v2026 = vunpack.c.l.b16 %v818
    %v2027 = vunpack.c.h.b16 %v818
    %v2028 = vunpack.c.l.b16 %v819
    %v2029 = vunpack.c.h.b16 %v819
    %v2030 = vunpack.c.l.b16 %v820
    %v2031 = vunpack.c.h.b16 %v820
    %v2032 = vunpack.c.l.b16 %v821
    %v2033 = vunpack.c.h.b16 %v821
    %v2034 = vunpack.c.l.b16 %v822
    %v2035 = vunpack.c.h.b16 %v822
    %v2036 = vunpack.c.l.b16 %v823
    %v2037 = vunpack.c.h.b16 %v823
    %v2038 = vunpack.c.l.b16 %v824
    %v2039 = vunpack.c.h.b16 %v824
    %v2040 = vunpack.c.l.b16 %v825
    %v2041 = vunpack.c.h.b16 %v825
    %v2042 = vunpack.c.l.b16 %v826
    %v2043 = vunpack.c.h.b16 %v826
    %v2044 = vunpack.c.l.b16 %v827
    %v2045 = vunpack.c.h.b16 %v827
    %v2046 = vunpack.c.l.b16 %v828
    %v2047 = vunpack.c.h.b16 %v828
    %v2048 = vunpack.c.l.b16 %v829
    %v2049 = vunpack.c.h.b16 %v829
    %v2050 = vunpack.c.l.b16 %v830
    %v2051 = vunpack.c.h.b16 %v830
    %v2052 = vunpack.c.l.b16 %v831
    %v2053 = vunpack.c.h.b16 %v831
    %v2054 = vunpack.c.l.b16 %v832
    %v2055 = vunpack.c.h.b16 %v832
    %v2056 = vunpack.c.l.b16 %v833
    %v2057 = vunpack.c.h.b16 %v833
    %v2058 = vunpack.c.l.b16 %v834
    %v2059 = vunpack.c.h.b16 %v834
    %v2060 = vunpack.c.l.b16 %v835
    %v2061 = vunpack.c.h.b16 %v835
    %v2062 = vunpack.c.l.b16 %v836
    %v2063 = vunpack.c.h.b16 %v836
    %v2064 = vunpack.c.l.b16 %v837
    %v2065 = vunpack.c.h.b16 %v837
    %v2066 = vunpack.c.l.b16 %v838
    %v2067 = vunpack.c.h.b16 %v838
    %v2068 = vunpack.c.l.b16 %v839
    %v2069 = vunpack.c.h.b16 %v839
    %v2070 = vunpack.c.l.b16 %v840
    %v2071 = vunpack.c.h.b16 %v840
    %v2072 = vunpack.c.l.b16 %v841
    %v2073 = vunpack.c.h.b16 %v841
    %v2074 = vunpack.c.l.b16 %v842
    %v2075 = vunpack.c.h.b16 %v842
    %v2076 = vunpack.c.l.b16 %v843
    %v2077 = vunpack.c.h.b16 %v843
    %v2078 = vunpack.c.l.b16 %v844
    %v2079 = vunpack.c.h.b16 %v844
    %v2080 = vunpack.c.l.b16 %v845
    %v2081 = vunpack.c.h.b16 %v845
    %v2082 = vunpack.c.l.b16 %v846
    %v2083 = vunpack.c.h.b16 %v846
    %v2084 = vunpack.c.l.b16 %v847
    %v2085 = vunpack.c.h.b16 %v847
    %v2086 = vunpack.c.l.b16 %v848
    %v2087 = vunpack.c.h.b16 %v848
    %v2088 = vunpack.c.l.b16 %v849
    %v2089 = vunpack.c.h.b16 %v849
    %v2090 = vunpack.c.l.b16 %v850
    %v2091 = vunpack.c.h.b16 %v850
    %v2092 = vunpack.c.l.b16 %v851
    %v2093 = vunpack.c.h.b16 %v851
    %v2094 = vunpack.c.l.b16 %v852
    %v2095 = vunpack.c.h.b16 %v852
    %v2096 = vunpack.c.l.b16 %v853
    %v2097 = vunpack.c.h.b16 %v853
    %v2098 = vunpack.c.l.b16 %v854
    %v2099 = vunpack.c.h.b16 %v854
    %v2100 = vunpack.c.l.b16 %v855
    %v2101 = vunpack.c.h.b16 %v855
    %v2102 = vunpack.c.l.b16 %v856
    %v2103 = vunpack.c.h.b16 %v856
    %v2104 = vunpack.c.l.b16 %v857
    %v2105 = vunpack.c.h.b16 %v857
    %v2106 = vunpack.c.l.b16 %v858
    %v2107 = vunpack.c.h.b16 %v858
    %v2108 = vunpack.c.l.b16 %v859
    %v2109 = vunpack.c.h.b16 %v859
    %v2110 = vunpack.c.l.b16 %v860
    %v2111 = vunpack.c.h.b16 %v860
    %v2112 = vunpack.c.l.b16 %v861
    %v2113 = vunpack.c.h.b16 %v861
    %v2114 = vunpack.c.l.b16 %v862
    %v2115 = vunpack.c.h.b16 %v862
    %v2116 = vunpack.c.l.b16 %v863
    %v2117 = vunpack.c.h.b16 %v863
    %v2118 = vunpack.c.l.b16 %v864
    %v2119 = vunpack.c.h.b16 %v864
    %v2120 = vunpack.c.l.b16 %v865
    %v2121 = vunpack.c.h.b16 %v865
    %v2122 = vunpack.c.l.b16 %v866
    %v2123 = vunpack.c.h.b16 %v866
    %v2124 = vunpack.c.l.b16 %v867
    %v2125 = vunpack.c.h.b16 %v867
    %v2126 = vunpack.c.l.b16 %v868
    %v2127 = vunpack.c.h.b16 %v868
    %v2128 = vunpack.c.l.b16 %v869
    %v2129 = vunpack.c.h.b16 %v869
    %v2130 = vunpack.c.l.b16 %v870
    %v2131 = vunpack.c.h.b16 %v870
    %v2132 = vunpack.c.l.b16 %v871
    %v2133 = vunpack.c.h.b16 %v871
    %v2134 = vunpack.c.l.b16 %v872
    %v2135 = vunpack.c.h.b16 %v872
    %v2136 = vunpack.c.l.b16 %v873
    %v2137 = vunpack.c.h.b16 %v873
    %v2138 = vunpack.c.l.b16 %v874
    %v2139 = vunpack.c.h.b16 %v874
    %v2140 = vunpack.c.l.b16 %v875
    %v2141 = vunpack.c.h.b16 %v875
    %v2142 = vunpack.c.l.b16 %v876
    %v2143 = vunpack.c.h.b16 %v876
    %v2144 = vunpack.c.l.b16 %v877
    %v2145 = vunpack.c.h.b16 %v877
    %v2146 = vunpack.c.l.b16 %v878
    %v2147 = vunpack.c.h.b16 %v878
    %v2148 = vunpack.c.l.b16 %v879
    %v2149 = vunpack.c.h.b16 %v879
    %v2150 = vunpack.c.l.b16 %v880
    %v2151 = vunpack.c.h.b16 %v880
    %v2152 = vunpack.c.l.b16 %v881
    %v2153 = vunpack.c.h.b16 %v881
    %v2154 = vunpack.c.l.b16 %v882
    %v2155 = vunpack.c.h.b16 %v882
    %v2156 = vunpack.c.l.b16 %v883
    %v2157 = vunpack.c.h.b16 %v883
    %v2158 = vunpack.c.l.b16 %v884
    %v2159 = vunpack.c.h.b16 %v884
    %v2160 = vunpack.c.l.b16 %v885
    %v2161 = vunpack.c.h.b16 %v885
    %v2162 = vunpack.c.l.b16 %v886
    %v2163 = vunpack.c.h.b16 %v886
    %v2164 = vunpack.c.l.b16 %v887
    %v2165 = vunpack.c.h.b16 %v887
    %v2166 = vunpack.c.l.b16 %v888
    %v2167 = vunpack.c.h.b16 %v888
    %v2168 = vunpack.c.l.b16 %v889
    %v2169 = vunpack.c.h.b16 %v889
    %v2170 = vunpack.c.l.b16 %v890
    %v2171 = vunpack.c.h.b16 %v890
    %v2172 = vunpack.c.l.b16 %v891
    %v2173 = vunpack.c.h.b16 %v891
    %v2174 = vunpack.c.l.b16 %v892
    %v2175 = vunpack.c.h.b16 %v892
    %v2176 = vunpack.c.l.b16 %v893
    %v2177 = vunpack.c.h.b16 %v893
    %v2178 = vunpack.c.l.b16 %v894
    %v2179 = vunpack.c.h.b16 %v894
    %v2180 = vunpack.c.l.b16 %v895
    %v2181 = vunpack.c.h.b16 %v895
    %v2182 = vunpack.c.l.b16 %v896
    %v2183 = vunpack.c.h.b16 %v896
    %v2184 = vunpack.c.l.b16 %v897
    %v2185 = vunpack.c.h.b16 %v897
    %v2186 = vunpack.c.l.b16 %v898
    %v2187 = vunpack.c.h.b16 %v898
    %v2188 = vunpack.c.l.b16 %v899
    %v2189 = vunpack.c.h.b16 %v899
    %v2190 = vunpack.c.l.b16 %v900
    %v2191 = vunpack.c.h.b16 %v900
    %v2192 = vunpack.c.l.b16 %v901
    %v2193 = vunpack.c.h.b16 %v901
    %v2194 = vunpack.c.l.b16 %v902
    %v2195 = vunpack.c.h.b16 %v902
    %v2196 = vunpack.c.l.b16 %v903
    %v2197 = vunpack.c.h.b16 %v903
    %v2198 = vunpack.c.l.b16 %v904
    %v2199 = vunpack.c.h.b16 %v904
    %v2200 = vunpack.c.l.b16 %v905
    %v2201 = vunpack.c.h.b16 %v905
    %v2202 = vunpack.c.l.b16 %v906
    %v2203 = vunpack.c.h.b16 %v906
    %v2204 = vunpack.c.l.b16 %v907
    %v2205 = vunpack.c.h.b16 %v907
    %v2206 = vunpack.c.l.b16 %v908
    %v2207 = vunpack.c.h.b16 %v908
    %v2208 = vunpack.c.l.b16 %v909
    %v2209 = vunpack.c.h.b16 %v909
    %v2210 = vunpack.c.l.b16 %v910
    %v2211 = vunpack.c.h.b16 %v910
    %v2212 = vunpack.c.l.b16 %v911
    %v2213 = vunpack.c.h.b16 %v911
    %v2214 = vunpack.c.l.b16 %v912
    %v2215 = vunpack.c.h.b16 %v912
    %v2216 = vunpack.c.l.b16 %v913
    %v2217 = vunpack.c.h.b16 %v913
    %v2218 = vunpack.c.l.b16 %v914
    %v2219 = vunpack.c.h.b16 %v914
    %v2220 = vunpack.c.l.b16 %v915
    %v2221 = vunpack.c.h.b16 %v915
    %v2222 = vunpack.c.l.b16 %v916
    %v2223 = vunpack.c.h.b16 %v916
    %v2224 = vunpack.c.l.b16 %v917
    %v2225 = vunpack.c.h.b16 %v917
    %v2226 = vunpack.c.l.b16 %v918
    %v2227 = vunpack.c.h.b16 %v918
    %v2228 = vunpack.c.l.b16 %v919
    %v2229 = vunpack.c.h.b16 %v919
    %v2230 = vunpack.c.l.b16 %v920
    %v2231 = vunpack.c.h.b16 %v920
    %v2232 = vunpack.c.l.b16 %v921
    %v2233 = vunpack.c.h.b16 %v921
    %v2234 = vunpack.c.l.b16 %v922
    %v2235 = vunpack.c.h.b16 %v922
    %v2236 = vunpack.c.l.b16 %v923
    %v2237 = vunpack.c.h.b16 %v923
    %v2238 = vunpack.c.l.b16 %v924
    %v2239 = vunpack.c.h.b16 %v924
    %v2240 = vunpack.c.l.b16 %v925
    %v2241 = vunpack.c.h.b16 %v925
    %v2242 = vunpack.c.l.b16 %v926
    %v2243 = vunpack.c.h.b16 %v926
    %v2244 = vunpack.c.l.b16 %v927
    %v2245 = vunpack.c.h.b16 %v927
    %v2246 = vunpack.c.l.b16 %v928
    %v2247 = vunpack.c.h.b16 %v928
    %v2248 = vunpack.c.l.b16 %v929
    %v2249 = vunpack.c.h.b16 %v929
    %v2250 = vunpack.c.l.b16 %v930
    %v2251 = vunpack.c.h.b16 %v930
    %v2252 = vunpack.c.l.b16 %v931
    %v2253 = vunpack.c.h.b16 %v931
    %v2254 = vunpack.c.l.b16 %v932
    %v2255 = vunpack.c.h.b16 %v932
    %v2256 = vunpack.c.l.b16 %v933
    %v2257 = vunpack.c.h.b16 %v933
    %v2258 = vunpack.c.l.b16 %v934
    %v2259 = vunpack.c.h.b16 %v934
    %v2260 = vunpack.c.l.b16 %v935
    %v2261 = vunpack.c.h.b16 %v935
    %v2262 = vunpack.c.l.b16 %v936
    %v2263 = vunpack.c.h.b16 %v936
    %v2264 = vunpack.c.l.b16 %v937
    %v2265 = vunpack.c.h.b16 %v937
    %v2266 = vunpack.c.l.b16 %v938
    %v2267 = vunpack.c.h.b16 %v938
    %v2268 = vunpack.c.l.b16 %v939
    %v2269 = vunpack.c.h.b16 %v939
    %v2270 = vunpack.c.l.b16 %v940
    %v2271 = vunpack.c.h.b16 %v940
    %v2272 = vunpack.c.l.b16 %v941
    %v2273 = vunpack.c.h.b16 %v941
    %v2274 = vunpack.c.l.b16 %v942
    %v2275 = vunpack.c.h.b16 %v942
    %v2276 = vunpack.c.l.b16 %v943
    %v2277 = vunpack.c.h.b16 %v943
    %v2278 = vunpack.c.l.b16 %v944
    %v2279 = vunpack.c.h.b16 %v944
    %v2280 = vunpack.c.l.b16 %v945
    %v2281 = vunpack.c.h.b16 %v945
    %v2282 = vunpack.c.l.b16 %v946
    %v2283 = vunpack.c.h.b16 %v946
    %v2284 = vunpack.c.l.b16 %v947
    %v2285 = vunpack.c.h.b16 %v947
    %v2286 = vunpack.c.l.b16 %v948
    %v2287 = vunpack.c.h.b16 %v948
    %v2288 = vunpack.c.l.b16 %v949
    %v2289 = vunpack.c.h.b16 %v949
    %v2290 = vunpack.c.l.b16 %v950
    %v2291 = vunpack.c.h.b16 %v950
    %v2292 = vunpack.c.l.b16 %v951
    %v2293 = vunpack.c.h.b16 %v951
    %v2294 = vunpack.c.l.b16 %v952
    %v2295 = vunpack.c.h.b16 %v952
    %v2296 = vunpack.c.l.b16 %v953
    %v2297 = vunpack.c.h.b16 %v953
    %v2298 = vunpack.c.l.b16 %v954
    %v2299 = vunpack.c.h.b16 %v954
    %v2300 = vunpack.c.l.b16 %v955
    %v2301 = vunpack.c.h.b16 %v955
    %v2302 = vunpack.c.l.b16 %v956
    %v2303 = vunpack.c.h.b16 %v956
    %v2304 = vunpack.c.l.b16 %v957
    %v2305 = vunpack.c.h.b16 %v957
    %v2306 = vunpack.c.l.b16 %v958
    %v2307 = vunpack.c.h.b16 %v958
    %v2308 = vunpack.c.l.b16 %v959
    %v2309 = vunpack.c.h.b16 %v959
    %v2310 = vunpack.c.l.b16 %v960
    %v2311 = vunpack.c.h.b16 %v960
    %v2312 = vunpack.c.l.b16 %v961
    %v2313 = vunpack.c.h.b16 %v961
    %v2314 = vunpack.c.l.b16 %v962
    %v2315 = vunpack.c.h.b16 %v962
    %v2316 = vunpack.c.l.b16 %v963
    %v2317 = vunpack.c.h.b16 %v963
    %v2318 = vunpack.c.l.b16 %v964
    %v2319 = vunpack.c.h.b16 %v964
    %v2320 = vunpack.c.l.b16 %v965
    %v2321 = vunpack.c.h.b16 %v965
    %v2322 = vunpack.c.l.b16 %v966
    %v2323 = vunpack.c.h.b16 %v966
    %v2324 = vunpack.c.l.b16 %v967
    %v2325 = vunpack.c.h.b16 %v967
    %v2326 = vunpack.c.l.b16 %v968
    %v2327 = vunpack.c.h.b16 %v968
    %v2328 = vunpack.c.l.b16 %v969
    %v2329 = vunpack.c.h.b16 %v969
    %v2330 = vunpack.c.l.b16 %v970
    %v2331 = vunpack.c.h.b16 %v970
    %v2332 = vunpack.c.l.b16 %v971
    %v2333 = vunpack.c.h.b16 %v971
    %v2334 = vunpack.c.l.b16 %v972
    %v2335 = vunpack.c.h.b16 %v972
    %v2336 = vunpack.c.l.b16 %v973
    %v2337 = vunpack.c.h.b16 %v973
    %v2338 = vunpack.c.l.b16 %v974
    %v2339 = vunpack.c.h.b16 %v974
    %v2340 = vunpack.c.l.b16 %v975
    %v2341 = vunpack.c.h.b16 %v975
    %v2342 = vunpack.c.l.b16 %v976
    %v2343 = vunpack.c.h.b16 %v976
    %v2344 = vunpack.c.l.b16 %v977
    %v2345 = vunpack.c.h.b16 %v977
    %v2346 = vunpack.c.l.b16 %v978
    %v2347 = vunpack.c.h.b16 %v978
    %v2348 = vunpack.c.l.b16 %v979
    %v2349 = vunpack.c.h.b16 %v979
    %v2350 = vunpack.c.l.b16 %v980
    %v2351 = vunpack.c.h.b16 %v980
    %v2352 = vunpack.c.l.b16 %v981
    %v2353 = vunpack.c.h.b16 %v981
    %v2354 = vunpack.c.l.b16 %v982
    %v2355 = vunpack.c.h.b16 %v982
    %v2356 = vunpack.c.l.b16 %v983
    %v2357 = vunpack.c.h.b16 %v983
    %v2358 = vunpack.c.l.b16 %v984
    %v2359 = vunpack.c.h.b16 %v984
    %v2360 = vunpack.c.l.b16 %v985
    %v2361 = vunpack.c.h.b16 %v985
    %v2362 = vunpack.c.l.b16 %v986
    %v2363 = vunpack.c.h.b16 %v986
    %v2364 = vunpack.c.l.b16 %v987
    %v2365 = vunpack.c.h.b16 %v987
    %v2366 = vunpack.c.l.b16 %v988
    %v2367 = vunpack.c.h.b16 %v988
    %v2368 = vunpack.c.l.b16 %v989
    %v2369 = vunpack.c.h.b16 %v989
    %v2370 = vunpack.c.l.b16 %v990
    %v2371 = vunpack.c.h.b16 %v990
    %v2372 = vunpack.c.l.b16 %v991
    %v2373 = vunpack.c.h.b16 %v991
    %v2374 = vunpack.c.l.b16 %v992
    %v2375 = vunpack.c.h.b16 %v992
    %v2376 = vunpack.c.l.b16 %v993
    %v2377 = vunpack.c.h.b16 %v993
    %v2378 = vunpack.c.l.b16 %v994
    %v2379 = vunpack.c.h.b16 %v994
    %v2380 = vunpack.c.l.b16 %v995
    %v2381 = vunpack.c.h.b16 %v995
    %v2382 = vunpack.c.l.b16 %v996
    %v2383 = vunpack.c.h.b16 %v996
    %v2384 = vunpack.c.l.b16 %v997
    %v2385 = vunpack.c.h.b16 %v997
    %v2386 = vunpack.c.l.b16 %v998
    %v2387 = vunpack.c.h.b16 %v998
    %v2388 = vunpack.c.l.b16 %v999
    %v2389 = vunpack.c.h.b16 %v999
    %v2390 = vunpack.c.l.b16 %v1000
    %v2391 = vunpack.c.h.b16 %v1000
    %v2392 = vunpack.c.l.b16 %v1001
    %v2393 = vunpack.c.h.b16 %v1001
    %v2394 = vunpack.c.l.b16 %v1002
    %v2395 = vunpack.c.h.b16 %v1002
    %v2396 = vunpack.c.l.b16 %v1003
    %v2397 = vunpack.c.h.b16 %v1003
    %v2398 = vunpack.c.l.b16 %v1004
    %v2399 = vunpack.c.h.b16 %v1004
    %v2400 = vunpack.c.l.b16 %v1005
    %v2401 = vunpack.c.h.b16 %v1005
    %v2402 = vunpack.c.l.b16 %v1006
    %v2403 = vunpack.c.h.b16 %v1006
    %v2404 = vunpack.c.l.b16 %v1007
    %v2405 = vunpack.c.h.b16 %v1007
    %v2406 = vunpack.c.l.b16 %v1008
    %v2407 = vunpack.c.h.b16 %v1008
    %v2408 = vunpack.c.l.b16 %v1009
    %v2409 = vunpack.c.h.b16 %v1009
    %v2410 = vunpack.c.l.b16 %v1010
    %v2411 = vunpack.c.h.b16 %v1010
    %v2412 = vunpack.c.l.b16 %v1011
    %v2413 = vunpack.c.h.b16 %v1011
    %v2414 = vunpack.c.l.b16 %v1012
    %v2415 = vunpack.c.h.b16 %v1012
    %v2416 = vunpack.c.l.b16 %v1013
    %v2417 = vunpack.c.h.b16 %v1013
    %v2418 = vunpack.c.l.b16 %v1014
    %v2419 = vunpack.c.h.b16 %v1014
    %v2420 = vunpack.c.l.b16 %v1015
    %v2421 = vunpack.c.h.b16 %v1015
    %v2422 = vunpack.c.l.b16 %v1016
    %v2423 = vunpack.c.h.b16 %v1016
    %v2424 = vunpack.c.l.b16 %v1017
    %v2425 = vunpack.c.h.b16 %v1017
    %v2426 = vunpack.c.l.b16 %v1018
    %v2427 = vunpack.c.h.b16 %v1018
    %v2428 = vunpack.c.l.b16 %v1019
    %v2429 = vunpack.c.h.b16 %v1019
    %v2430 = vunpack.c.l.b16 %v1020
    %v2431 = vunpack.c.h.b16 %v1020
    %v2432 = vunpack.c.l.b16 %v1021
    %v2433 = vunpack.c.h.b16 %v1021
    %v2434 = vunpack.c.l.b16 %v1022
    %v2435 = vunpack.c.h.b16 %v1022
    %v2436 = vunpack.c.l.b16 %v1023
    %v2437 = vunpack.c.h.b16 %v1023
    %v2438 = vunpack.c.l.b16 %v1024
    %v2439 = vunpack.c.h.b16 %v1024
    %v2440 = vunpack.c.l.b16 %v1025
    %v2441 = vunpack.c.h.b16 %v1025
    %v2442 = vunpack.c.l.b16 %v1026
    %v2443 = vunpack.c.h.b16 %v1026
    %v2444 = vunpack.c.l.b16 %v1027
    %v2445 = vunpack.c.h.b16 %v1027
    %v2446 = vunpack.c.l.b16 %v1028
    %v2447 = vunpack.c.h.b16 %v1028
    %v2448 = vunpack.c.l.b16 %v1029
    %v2449 = vunpack.c.h.b16 %v1029
    %v2450 = vunpack.c.l.b16 %v1030
    %v2451 = vunpack.c.h.b16 %v1030
    %v2452 = vunpack.c.l.b16 %v1031
    %v2453 = vunpack.c.h.b16 %v1031
    %v2454 = vunpack.c.l.b16 %v1032
    %v2455 = vunpack.c.h.b16 %v1032
    %v2456 = vunpack.c.l.b16 %v1033
    %v2457 = vunpack.c.h.b16 %v1033
    %v2458 = vunpack.c.l.b16 %v1034
    %v2459 = vunpack.c.h.b16 %v1034
    %v2460 = vunpack.c.l.b16 %v1035
    %v2461 = vunpack.c.h.b16 %v1035
    %v2462 = vunpack.c.l.b16 %v1036
    %v2463 = vunpack.c.h.b16 %v1036
    %v2464 = vunpack.c.l.b16 %v1037
    %v2465 = vunpack.c.h.b16 %v1037
    %v2466 = vunpack.c.l.b16 %v1038
    %v2467 = vunpack.c.h.b16 %v1038
    %v2468 = vunpack.c.l.b16 %v1039
    %v2469 = vunpack.c.h.b16 %v1039
    %v2470 = vunpack.c.l.b16 %v1040
    %v2471 = vunpack.c.h.b16 %v1040
    %v2472 = vunpack.c.l.b16 %v1041
    %v2473 = vunpack.c.h.b16 %v1041
    %v2474 = vunpack.c.l.b16 %v1042
    %v2475 = vunpack.c.h.b16 %v1042
    %v2476 = vunpack.c.l.b16 %v1043
    %v2477 = vunpack.c.h.b16 %v1043
    %v2478 = vunpack.c.l.b16 %v1044
    %v2479 = vunpack.c.h.b16 %v1044
    %v2480 = vunpack.c.l.b16 %v1045
    %v2481 = vunpack.c.h.b16 %v1045
    %v2482 = vunpack.c.l.b16 %v1046
    %v2483 = vunpack.c.h.b16 %v1046
    %v2484 = vunpack.c.l.b16 %v1047
    %v2485 = vunpack.c.h.b16 %v1047
    %v2486 = vunpack.c.l.b16 %v1048
    %v2487 = vunpack.c.h.b16 %v1048
    %v2488 = vunpack.c.l.b16 %v1049
    %v2489 = vunpack.c.h.b16 %v1049
    %v2490 = vunpack.c.l.b16 %v1050
    %v2491 = vunpack.c.h.b16 %v1050
    %v2492 = vunpack.c.l.b16 %v1051
    %v2493 = vunpack.c.h.b16 %v1051
    %v2494 = vunpack.c.l.b16 %v1052
    %v2495 = vunpack.c.h.b16 %v1052
    %v2496 = vunpack.c.l.b16 %v1053
    %v2497 = vunpack.c.h.b16 %v1053
    %v2498 = vunpack.c.l.b16 %v1054
    %v2499 = vunpack.c.h.b16 %v1054
    %v2500 = vunpack.c.l.b16 %v1055
    %v2501 = vunpack.c.h.b16 %v1055
    %v2502 = vunpack.c.l.b16 %v1056
    %v2503 = vunpack.c.h.b16 %v1056
    %v2504 = vunpack.c.l.b16 %v1057
    %v2505 = vunpack.c.h.b16 %v1057
    %v2506 = vunpack.c.l.b16 %v1058
    %v2507 = vunpack.c.h.b16 %v1058
    %v2508 = vunpack.c.l.b16 %v1059
    %v2509 = vunpack.c.h.b16 %v1059
    %v2510 = vunpack.c.l.b16 %v1060
    %v2511 = vunpack.c.h.b16 %v1060
    %v2512 = vunpack.c.l.b16 %v1061
    %v2513 = vunpack.c.h.b16 %v1061
    %v2514 = vunpack.c.l.b16 %v1062
    %v2515 = vunpack.c.h.b16 %v1062
    %v2516 = vunpack.c.l.b16 %v1063
    %v2517 = vunpack.c.h.b16 %v1063
    %v2518 = vunpack.c.l.b16 %v1064
    %v2519 = vunpack.c.h.b16 %v1064
    %v2520 = vunpack.c.l.b16 %v1065
    %v2521 = vunpack.c.h.b16 %v1065
    %v2522 = vunpack.c.l.b16 %v1066
    %v2523 = vunpack.c.h.b16 %v1066
    %v2524 = vunpack.c.l.b16 %v1067
    %v2525 = vunpack.c.h.b16 %v1067
    %v2526 = vunpack.c.l.b16 %v1068
    %v2527 = vunpack.c.h.b16 %v1068
    %v2528 = vunpack.c.l.b16 %v1069
    %v2529 = vunpack.c.h.b16 %v1069
    %v2530 = vunpack.c.l.b16 %v1070
    %v2531 = vunpack.c.h.b16 %v1070
    %v2532 = vunpack.c.l.b16 %v1071
    %v2533 = vunpack.c.h.b16 %v1071
    %v2534 = vunpack.c.l.b16 %v1072
    %v2535 = vunpack.c.h.b16 %v1072
    %v2536 = vunpack.c.l.b16 %v1073
    %v2537 = vunpack.c.h.b16 %v1073
    %v2538 = vunpack.c.l.b16 %v1074
    %v2539 = vunpack.c.h.b16 %v1074
    %v2540 = vunpack.c.l.b16 %v1075
    %v2541 = vunpack.c.h.b16 %v1075
    %v2542 = vunpack.c.l.b16 %v1076
    %v2543 = vunpack.c.h.b16 %v1076
    %v2544 = vunpack.c.l.b16 %v1077
    %v2545 = vunpack.c.h.b16 %v1077
    %v2546 = vunpack.c.l.b16 %v1078
    %v2547 = vunpack.c.h.b16 %v1078
    %v2548 = vunpack.c.l.b16 %v1079
    %v2549 = vunpack.c.h.b16 %v1079
    %v2550 = vunpack.c.l.b16 %v1080
    %v2551 = vunpack.c.h.b16 %v1080
    %v2552 = vunpack.c.l.b16 %v1081
    %v2553 = vunpack.c.h.b16 %v1081
    %v2554 = vunpack.c.l.b16 %v1082
    %v2555 = vunpack.c.h.b16 %v1082
    %v2556 = vunpack.c.l.b16 %v1083
    %v2557 = vunpack.c.h.b16 %v1083
    %v2558 = vunpack.c.l.b16 %v1084
    %v2559 = vunpack.c.h.b16 %v1084
    %v2560 = vunpack.c.l.b16 %v1085
    %v2561 = vunpack.c.h.b16 %v1085
    %v2562 = vunpack.c.l.b16 %v1086
    %v2563 = vunpack.c.h.b16 %v1086
    %v2564 = vunpack.c.l.b16 %v1087
    %v2565 = vunpack.c.h.b16 %v1087
    %v2566 = vunpack.c.l.b16 %v1088
    %v2567 = vunpack.c.h.b16 %v1088
    %v2568 = vunpack.c.l.b16 %v1089
    %v2569 = vunpack.c.h.b16 %v1089
    %v2570 = vunpack.c.l.b16 %v1090
    %v2571 = vunpack.c.h.b16 %v1090
    %v2572 = vunpack.c.l.b16 %v1091
    %v2573 = vunpack.c.h.b16 %v1091
    %v2574 = vunpack.c.l.b16 %v1092
    %v2575 = vunpack.c.h.b16 %v1092
    %v2576 = vunpack.c.l.b16 %v1093
    %v2577 = vunpack.c.h.b16 %v1093
    %v2578 = vunpack.c.l.b16 %v1094
    %v2579 = vunpack.c.h.b16 %v1094
    %v2580 = vunpack.c.l.b16 %v1095
    %v2581 = vunpack.c.h.b16 %v1095
    %v2582 = vunpack.c.l.b16 %v1096
    %v2583 = vunpack.c.h.b16 %v1096
    %v2584 = vunpack.c.l.b16 %v1097
    %v2585 = vunpack.c.h.b16 %v1097
    %v2586 = vunpack.c.l.b16 %v1098
    %v2587 = vunpack.c.h.b16 %v1098
    %v2588 = vunpack.c.l.b16 %v1099
    %v2589 = vunpack.c.h.b16 %v1099
    %v2590 = vunpack.c.l.b16 %v1100
    %v2591 = vunpack.c.h.b16 %v1100
    %v2592 = vunpack.c.l.b16 %v1101
    %v2593 = vunpack.c.h.b16 %v1101
    %v2594 = vunpack.c.l.b16 %v1102
    %v2595 = vunpack.c.h.b16 %v1102
    %v2596 = vunpack.c.l.b16 %v1103
    %v2597 = vunpack.c.h.b16 %v1103
    %v2598 = vunpack.c.l.b16 %v1104
    %v2599 = vunpack.c.h.b16 %v1104
    %v2600 = vunpack.c.l.b16 %v1105
    %v2601 = vunpack.c.h.b16 %v1105
    %v2602 = vunpack.c.l.b16 %v1106
    %v2603 = vunpack.c.h.b16 %v1106
    %v2604 = vunpack.c.l.b16 %v1107
    %v2605 = vunpack.c.h.b16 %v1107
    %v2606 = vunpack.c.l.b16 %v1108
    %v2607 = vunpack.c.h.b16 %v1108
    %v2608 = vunpack.c.l.b16 %v1109
    %v2609 = vunpack.c.h.b16 %v1109
    %v2610 = vunpack.c.l.b16 %v1110
    %v2611 = vunpack.c.h.b16 %v1110
    %v2612 = vunpack.c.l.b16 %v1111
    %v2613 = vunpack.c.h.b16 %v1111
    %v2614 = vunpack.c.l.b16 %v1112
    %v2615 = vunpack.c.h.b16 %v1112
    %v2616 = vunpack.c.l.b16 %v1113
    %v2617 = vunpack.c.h.b16 %v1113
    %v2618 = vunpack.c.l.b16 %v1114
    %v2619 = vunpack.c.h.b16 %v1114
    %v2620 = vunpack.c.l.b16 %v1115
    %v2621 = vunpack.c.h.b16 %v1115
    %v2622 = vunpack.c.l.b16 %v1116
    %v2623 = vunpack.c.h.b16 %v1116
    %v2624 = vunpack.c.l.b16 %v1117
    %v2625 = vunpack.c.h.b16 %v1117
    %v2626 = vunpack.c.l.b16 %v1118
    %v2627 = vunpack.c.h.b16 %v1118
    %v2628 = vunpack.c.l.b16 %v1119
    %v2629 = vunpack.c.h.b16 %v1119
    %v2630 = vunpack.c.l.b16 %v1120
    %v2631 = vunpack.c.h.b16 %v1120
    %v2632 = vunpack.c.l.b16 %v1121
    %v2633 = vunpack.c.h.b16 %v1121
    %v2634 = vunpack.c.l.b16 %v1122
    %v2635 = vunpack.c.h.b16 %v1122
    %v2636 = vunpack.c.l.b16 %v1123
    %v2637 = vunpack.c.h.b16 %v1123
    %v2638 = vunpack.c.l.b16 %v1124
    %v2639 = vunpack.c.h.b16 %v1124
    %v2640 = vunpack.c.l.b16 %v1125
    %v2641 = vunpack.c.h.b16 %v1125
    %v2642 = vunpack.c.l.b16 %v1126
    %v2643 = vunpack.c.h.b16 %v1126
    %v2644 = vunpack.c.l.b16 %v1127
    %v2645 = vunpack.c.h.b16 %v1127
    %v2646 = vunpack.c.l.b16 %v1128
    %v2647 = vunpack.c.h.b16 %v1128
    %v2648 = vunpack.c.l.b16 %v1129
    %v2649 = vunpack.c.h.b16 %v1129
    %v2650 = vunpack.c.l.b16 %v1130
    %v2651 = vunpack.c.h.b16 %v1130
    %v2652 = vunpack.c.l.b16 %v1131
    %v2653 = vunpack.c.h.b16 %v1131
    %v2654 = vunpack.c.l.b16 %v1132
    %v2655 = vunpack.c.h.b16 %v1132
    %v2656 = vunpack.c.l.b16 %v1133
    %v2657 = vunpack.c.h.b16 %v1133
    %v2658 = vunpack.c.l.b16 %v1134
    %v2659 = vunpack.c.h.b16 %v1134
    %v2660 = vunpack.c.l.b16 %v1135
    %v2661 = vunpack.c.h.b16 %v1135
    %v2662 = vunpack.c.l.b16 %v1136
    %v2663 = vunpack.c.h.b16 %v1136
    %v2664 = vunpack.c.l.b16 %v1137
    %v2665 = vunpack.c.h.b16 %v1137
    %v2666 = vunpack.c.l.b16 %v1138
    %v2667 = vunpack.c.h.b16 %v1138
    %v2668 = vunpack.c.l.b16 %v1139
    %v2669 = vunpack.c.h.b16 %v1139
    %v2670 = vunpack.c.l.b16 %v1140
    %v2671 = vunpack.c.h.b16 %v1140
    %v2672 = vunpack.c.l.b16 %v1141
    %v2673 = vunpack.c.h.b16 %v1141
    %v2674 = vunpack.c.l.b16 %v1142
    %v2675 = vunpack.c.h.b16 %v1142
    %v2676 = vunpack.c.l.b16 %v1143
    %v2677 = vunpack.c.h.b16 %v1143
    %v2678 = vunpack.c.l.b16 %v1144
    %v2679 = vunpack.c.h.b16 %v1144
    %v2680 = vunpack.c.l.b16 %v1145
    %v2681 = vunpack.c.h.b16 %v1145
    %v2682 = vunpack.c.l.b16 %v1146
    %v2683 = vunpack.c.h.b16 %v1146
    %v2684 = vunpack.c.l.b16 %v1147
    %v2685 = vunpack.c.h.b16 %v1147
    %v2686 = vunpack.c.l.b16 %v1148
    %v2687 = vunpack.c.h.b16 %v1148
    %v2688 = vunpack.c.l.b16 %v1149
    %v2689 = vunpack.c.h.b16 %v1149
    %v2690 = vunpack.c.l.b16 %v1150
    %v2691 = vunpack.c.h.b16 %v1150
    %v2692 = vunpack.c.l.b16 %v1151
    %v2693 = vunpack.c.h.b16 %v1151
    %v2694 = vunpack.c.l.b16 %v1152
    %v2695 = vunpack.c.h.b16 %v1152
    %v2696 = vunpack.c.l.b16 %v1153
    %v2697 = vunpack.c.h.b16 %v1153
    %v2698 = vunpack.c.l.b16 %v1154
    %v2699 = vunpack.c.h.b16 %v1154
    %v2700 = vunpack.c.l.b16 %v1155
    %v2701 = vunpack.c.h.b16 %v1155
    %v2702 = vunpack.c.l.b16 %v1156
    %v2703 = vunpack.c.h.b16 %v1156
    %v2704 = vunpack.c.l.b16 %v1157
    %v2705 = vunpack.c.h.b16 %v1157
    %v2706 = vunpack.c.l.b16 %v1158
    %v2707 = vunpack.c.h.b16 %v1158
    %v2708 = vunpack.c.l.b16 %v1159
    %v2709 = vunpack.c.h.b16 %v1159
    %v2710 = vunpack.c.l.b16 %v1160
    %v2711 = vunpack.c.h.b16 %v1160
    %v2712 = vunpack.c.l.b16 %v1161
    %v2713 = vunpack.c.h.b16 %v1161
    %v2714 = vunpack.c.l.b16 %v1162
    %v2715 = vunpack.c.h.b16 %v1162
    %v2716 = vunpack.c.l.b16 %v1163
    %v2717 = vunpack.c.h.b16 %v1163
    %v2718 = vpack.c.b16 %v1702, %v1694
    %v2719 = vpack.c.b16 %v1703, %v1695
    %v2720 = vpack.c.b16 %v1704, %v1696
    %v2721 = vpack.c.b16 %v1705, %v1697
    %v2722 = vpack.c.b16 %v1706, %v1698
    %v2723 = vpack.c.b16 %v1707, %v1699
    %v2724 = vpack.c.b16 %v1708, %v1700
    %v2725 = vpack.c.b16 %v1709, %v1701
    %v2726 = vpack.c.b16 %v1718, %v1710
    %v2727 = vpack.c.b16 %v1719, %v1711
    %v2728 = vpack.c.b16 %v1720, %v1712
    %v2729 = vpack.c.b16 %v1721, %v1713
    %v2730 = vpack.c.b16 %v1722, %v1714
    %v2731 = vpack.c.b16 %v1723, %v1715
    %v2732 = vpack.c.b16 %v1724, %v1716
    %v2733 = vpack.c.b16 %v1725, %v1717
    %v2734 = vpack.c.b16 %v1734, %v1726
    %v2735 = vpack.c.b16 %v1735, %v1727
    %v2736 = vpack.c.b16 %v1736, %v1728
    %v2737 = vpack.c.b16 %v1737, %v1729
    %v2738 = vpack.c.b16 %v1738, %v1730
    %v2739 = vpack.c.b16 %v1739, %v1731
    %v2740 = vpack.c.b16 %v1740, %v1732
    %v2741 = vpack.c.b16 %v1741, %v1733
    %v2742 = vpack.c.b16 %v1750, %v1742
    %v2743 = vpack.c.b16 %v1751, %v1743
    %v2744 = vpack.c.b16 %v1752, %v1744
    %v2745 = vpack.c.b16 %v1753, %v1745
    %v2746 = vpack.c.b16 %v1754, %v1746
    %v2747 = vpack.c.b16 %v1755, %v1747
    %v2748 = vpack.c.b16 %v1756, %v1748
    %v2749 = vpack.c.b16 %v1757, %v1749
    %v2750 = vpack.c.b16 %v1766, %v1758
    %v2751 = vpack.c.b16 %v1767, %v1759
    %v2752 = vpack.c.b16 %v1768, %v1760
    %v2753 = vpack.c.b16 %v1769, %v1761
    %v2754 = vpack.c.b16 %v1770, %v1762
    %v2755 = vpack.c.b16 %v1771, %v1763
    %v2756 = vpack.c.b16 %v1772, %v1764
    %v2757 = vpack.c.b16 %v1773, %v1765
    %v2758 = vpack.c.b16 %v1782, %v1774
    %v2759 = vpack.c.b16 %v1783, %v1775
    %v2760 = vpack.c.b16 %v1784, %v1776
    %v2761 = vpack.c.b16 %v1785, %v1777
    %v2762 = vpack.c.b16 %v1786, %v1778
    %v2763 = vpack.c.b16 %v1787, %v1779
    %v2764 = vpack.c.b16 %v1788, %v1780
    %v2765 = vpack.c.b16 %v1789, %v1781
    %v2766 = vpack.c.b16 %v1798, %v1790
    %v2767 = vpack.c.b16 %v1799, %v1791
    %v2768 = vpack.c.b16 %v1800, %v1792
    %v2769 = vpack.c.b16 %v1801, %v1793
    %v2770 = vpack.c.b16 %v1802, %v1794
    %v2771 = vpack.c.b16 %v1803, %v1795
    %v2772 = vpack.c.b16 %v1804, %v1796
    %v2773 = vpack.c.b16 %v1805, %v1797
    %v2774 = vpack.c.b16 %v1814, %v1806
    %v2775 = vpack.c.b16 %v1815, %v1807
    %v2776 = vpack.c.b16 %v1816, %v1808
    %v2777 = vpack.c.b16 %v1817, %v1809
    %v2778 = vpack.c.b16 %v1818, %v1810
    %v2779 = vpack.c.b16 %v1819, %v1811
    %v2780 = vpack.c.b16 %v1820, %v1812
    %v2781 = vpack.c.b16 %v1821, %v1813
    %v2782 = vpack.c.b16 %v1830, %v1822
    %v2783 = vpack.c.b16 %v1831, %v1823
    %v2784 = vpack.c.b16 %v1832, %v1824
    %v2785 = vpack.c.b16 %v1833, %v1825
    %v2786 = vpack.c.b16 %v1834, %v1826
    %v2787 = vpack.c.b16 %v1835, %v1827
    %v2788 = vpack.c.b16 %v1836, %v1828
    %v2789 = vpack.c.b16 %v1837, %v1829
    %v2790 = vpack.c.b16 %v1846, %v1838
    %v2791 = vpack.c.b16 %v1847, %v1839
    %v2792 = vpack.c.b16 %v1848, %v1840
    %v2793 = vpack.c.b16 %v1849, %v1841
    %v2794 = vpack.c.b16 %v1850, %v1842
    %v2795 = vpack.c.b16 %v1851, %v1843
    %v2796 = vpack.c.b16 %v1852, %v1844
    %v2797 = vpack.c.b16 %v1853, %v1845
    %v2798 = vpack.c.b16 %v1862, %v1854
    %v2799 = vpack.c.b16 %v1863, %v1855
    %v2800 = vpack.c.b16 %v1864, %v1856
    %v2801 = vpack.c.b16 %v1865, %v1857
    %v2802 = vpack.c.b16 %v1866, %v1858
    %v2803 = vpack.c.b16 %v1867, %v1859
    %v2804 = vpack.c.b16 %v1868, %v1860
    %v2805 = vpack.c.b16 %v1869, %v1861
    %v2806 = vpack.c.b16 %v1878, %v1870
    %v2807 = vpack.c.b16 %v1879, %v1871
    %v2808 = vpack.c.b16 %v1880, %v1872
    %v2809 = vpack.c.b16 %v1881, %v1873
    %v2810 = vpack.c.b16 %v1882, %v1874
    %v2811 = vpack.c.b16 %v1883, %v1875
    %v2812 = vpack.c.b16 %v1884, %v1876
    %v2813 = vpack.c.b16 %v1885, %v1877
    %v2814 = vpack.c.b16 %v1894, %v1886
    %v2815 = vpack.c.b16 %v1895, %v1887
    %v2816 = vpack.c.b16 %v1896, %v1888
    %v2817 = vpack.c.b16 %v1897, %v1889
    %v2818 = vpack.c.b16 %v1898, %v1890
    %v2819 = vpack.c.b16 %v1899, %v1891
    %v2820 = vpack.c.b16 %v1900, %v1892
    %v2821 = vpack.c.b16 %v1901, %v1893
    %v2822 = vpack.c.b16 %v1910, %v1902
    %v2823 = vpack.c.b16 %v1911, %v1903
    %v2824 = vpack.c.b16 %v1912, %v1904
    %v2825 = vpack.c.b16 %v1913, %v1905
    %v2826 = vpack.c.b16 %v1914, %v1906
    %v2827 = vpack.c.b16 %v1915, %v1907
    %v2828 = vpack.c.b16 %v1916, %v1908
    %v2829 = vpack.c.b16 %v1917, %v1909
    %v2830 = vpack.c.b16 %v1926, %v1918
    %v2831 = vpack.c.b16 %v1927, %v1919
    %v2832 = vpack.c.b16 %v1928, %v1920
    %v2833 = vpack.c.b16 %v1929, %v1921
    %v2834 = vpack.c.b16 %v1930, %v1922
    %v2835 = vpack.c.b16 %v1931, %v1923
    %v2836 = vpack.c.b16 %v1932, %v1924
    %v2837 = vpack.c.b16 %v1933, %v1925
    %v2838 = vpack.c.b16 %v1942, %v1934
    %v2839 = vpack.c.b16 %v1943, %v1935
    %v2840 = vpack.c.b16 %v1944, %v1936
    %v2841 = vpack.c.b16 %v1945, %v1937
    %v2842 = vpack.c.b16 %v1946, %v1938
    %v2843 = vpack.c.b16 %v1947, %v1939
    %v2844 = vpack.c.b16 %v1948, %v1940
    %v2845 = vpack.c.b16 %v1949, %v1941
    %v2846 = vpack.c.b16 %v1958, %v1950
    %v2847 = vpack.c.b16 %v1959, %v1951
    %v2848 = vpack.c.b16 %v1960, %v1952
    %v2849 = vpack.c.b16 %v1961, %v1953
    %v2850 = vpack.c.b16 %v1962, %v1954
    %v2851 = vpack.c.b16 %v1963, %v1955
    %v2852 = vpack.c.b16 %v1964, %v1956
    %v2853 = vpack.c.b16 %v1965, %v1957
    %v2854 = vpack.c.b16 %v1974, %v1966
    %v2855 = vpack.c.b16 %v1975, %v1967
    %v2856 = vpack.c.b16 %v1976, %v1968
    %v2857 = vpack.c.b16 %v1977, %v1969
    %v2858 = vpack.c.b16 %v1978, %v1970
    %v2859 = vpack.c.b16 %v1979, %v1971
    %v2860 = vpack.c.b16 %v1980, %v1972
    %v2861 = vpack.c.b16 %v1981, %v1973
    %v2862 = vpack.c.b16 %v1990, %v1982
    %v2863 = vpack.c.b16 %v1991, %v1983
    %v2864 = vpack.c.b16 %v1992, %v1984
    %v2865 = vpack.c.b16 %v1993, %v1985
    %v2866 = vpack.c.b16 %v1994, %v1986
    %v2867 = vpack.c.b16 %v1995, %v1987
    %v2868 = vpack.c.b16 %v1996, %v1988
    %v2869 = vpack.c.b16 %v1997, %v1989
    %v2870 = vpack.c.b16 %v2006, %v1998
    %v2871 = vpack.c.b16 %v2007, %v1999
    %v2872 = vpack.c.b16 %v2008, %v2000
    %v2873 = vpack.c.b16 %v2009, %v2001
    %v2874 = vpack.c.b16 %v2010, %v2002
    %v2875 = vpack.c.b16 %v2011, %v2003
    %v2876 = vpack.c.b16 %v2012, %v2004
    %v2877 = vpack.c.b16 %v2013, %v2005
    %v2878 = vpack.c.b16 %v2022, %v2014
    %v2879 = vpack.c.b16 %v2023, %v2015
    %v2880 = vpack.c.b16 %v2024, %v2016
    %v2881 = vpack.c.b16 %v2025, %v2017
    %v2882 = vpack.c.b16 %v2026, %v2018
    %v2883 = vpack.c.b16 %v2027, %v2019
    %v2884 = vpack.c.b16 %v2028, %v2020
    %v2885 = vpack.c.b16 %v2029, %v2021
    %v2886 = vpack.c.b16 %v2038, %v2030
    %v2887 = vpack.c.b16 %v2039, %v2031
    %v2888 = vpack.c.b16 %v2040, %v2032
    %v2889 = vpack.c.b16 %v2041, %v2033
    %v2890 = vpack.c.b16 %v2042, %v2034
    %v2891 = vpack.c.b16 %v2043, %v2035
    %v2892 = vpack.c.b16 %v2044, %v2036
    %v2893 = vpack.c.b16 %v2045, %v2037
    %v2894 = vpack.c.b16 %v2054, %v2046
    %v2895 = vpack.c.b16 %v2055, %v2047
    %v2896 = vpack.c.b16 %v2056, %v2048
    %v2897 = vpack.c.b16 %v2057, %v2049
    %v2898 = vpack.c.b16 %v2058, %v2050
    %v2899 = vpack.c.b16 %v2059, %v2051
    %v2900 = vpack.c.b16 %v2060, %v2052
    %v2901 = vpack.c.b16 %v2061, %v2053
    %v2902 = vpack.c.b16 %v2070, %v2062
    %v2903 = vpack.c.b16 %v2071, %v2063
    %v2904 = vpack.c.b16 %v2072, %v2064
    %v2905 = vpack.c.b16 %v2073, %v2065
    %v2906 = vpack.c.b16 %v2074, %v2066
    %v2907 = vpack.c.b16 %v2075, %v2067
    %v2908 = vpack.c.b16 %v2076, %v2068
    %v2909 = vpack.c.b16 %v2077, %v2069
    %v2910 = vpack.c.b16 %v2086, %v2078
    %v2911 = vpack.c.b16 %v2087, %v2079
    %v2912 = vpack.c.b16 %v2088, %v2080
    %v2913 = vpack.c.b16 %v2089, %v2081
    %v2914 = vpack.c.b16 %v2090, %v2082
    %v2915 = vpack.c.b16 %v2091, %v2083
    %v2916 = vpack.c.b16 %v2092, %v2084
    %v2917 = vpack.c.b16 %v2093, %v2085
    %v2918 = vpack.c.b16 %v2102, %v2094
    %v2919 = vpack.c.b16 %v2103, %v2095
    %v2920 = vpack.c.b16 %v2104, %v2096
    %v2921 = vpack.c.b16 %v2105, %v2097
    %v2922 = vpack.c.b16 %v2106, %v2098
    %v2923 = vpack.c.b16 %v2107, %v2099
    %v2924 = vpack.c.b16 %v2108, %v2100
    %v2925 = vpack.c.b16 %v2109, %v2101
    %v2926 = vpack.c.b16 %v2118, %v2110
    %v2927 = vpack.c.b16 %v2119, %v2111
    %v2928 = vpack.c.b16 %v2120, %v2112
    %v2929 = vpack.c.b16 %v2121, %v2113
    %v2930 = vpack.c.b16 %v2122, %v2114
    %v2931 = vpack.c.b16 %v2123, %v2115
    %v2932 = vpack.c.b16 %v2124, %v2116
    %v2933 = vpack.c.b16 %v2125, %v2117
    %v2934 = vpack.c.b16 %v2134, %v2126
    %v2935 = vpack.c.b16 %v2135, %v2127
    %v2936 = vpack.c.b16 %v2136, %v2128
    %v2937 = vpack.c.b16 %v2137, %v2129
    %v2938 = vpack.c.b16 %v2138, %v2130
    %v2939 = vpack.c.b16 %v2139, %v2131
    %v2940 = vpack.c.b16 %v2140, %v2132
    %v2941 = vpack.c.b16 %v2141, %v2133
    %v2942 = vpack.c.b16 %v2150, %v2142
    %v2943 = vpack.c.b16 %v2151, %v2143
    %v2944 = vpack.c.b16 %v2152, %v2144
    %v2945 = vpack.c.b16 %v2153, %v2145
    %v2946 = vpack.c.b16 %v2154, %v2146
    %v2947 = vpack.c.b16 %v2155, %v2147
    %v2948 = vpack.c.b16 %v2156, %v2148
    %v2949 = vpack.c.b16 %v2157, %v2149
    %v2950 = vpack.c.b16 %v2166, %v2158
    %v2951 = vpack.c.b16 %v2167, %v2159
    %v2952 = vpack.c.b16 %v2168, %v2160
    %v2953 = vpack.c.b16 %v2169, %v2161
    %v2954 = vpack.c.b16 %v2170, %v2162
    %v2955 = vpack.c.b16 %v2171, %v2163
    %v2956 = vpack.c.b16 %v2172, %v2164
    %v2957 = vpack.c.b16 %v2173, %v2165
    %v2958 = vpack.c.b16 %v2182, %v2174
    %v2959 = vpack.c.b16 %v2183, %v2175
    %v2960 = vpack.c.b16 %v2184, %v2176
    %v2961 = vpack.c.b16 %v2185, %v2177
    %v2962 = vpack.c.b16 %v2186, %v2178
    %v2963 = vpack.c.b16 %v2187, %v2179
    %v2964 = vpack.c.b16 %v2188, %v2180
    %v2965 = vpack.c.b16 %v2189, %v2181
    %v2966 = vpack.c.b16 %v2198, %v2190
    %v2967 = vpack.c.b16 %v2199, %v2191
    %v2968 = vpack.c.b16 %v2200, %v2192
    %v2969 = vpack.c.b16 %v2201, %v2193
    %v2970 = vpack.c.b16 %v2202, %v2194
    %v2971 = vpack.c.b16 %v2203, %v2195
    %v2972 = vpack.c.b16 %v2204, %v2196
    %v2973 = vpack.c.b16 %v2205, %v2197
    %v2974 = vpack.c.b16 %v2214, %v2206
    %v2975 = vpack.c.b16 %v2215, %v2207
    %v2976 = vpack.c.b16 %v2216, %v2208
    %v2977 = vpack.c.b16 %v2217, %v2209
    %v2978 = vpack.c.b16 %v2218, %v2210
    %v2979 = vpack.c.b16 %v2219, %v2211
    %v2980 = vpack.c.b16 %v2220, %v2212
    %v2981 = vpack.c.b16 %v2221, %v2213
    %v2982 = vpack.c.b16 %v2230, %v2222
    %v2983 = vpack.c.b16 %v2231, %v2223
    %v2984 = vpack.c.b16 %v2232, %v2224
    %v2985 = vpack.c.b16 %v2233, %v2225
    %v2986 = vpack.c.b16 %v2234, %v2226
    %v2987 = vpack.c.b16 %v2235, %v2227
    %v2988 = vpack.c.b16 %v2236, %v2228
    %v2989 = vpack.c.b16 %v2237, %v2229
    %v2990 = vpack.c.b16 %v2246, %v2238
    %v2991 = vpack.c.b16 %v2247, %v2239
    %v2992 = vpack.c.b16 %v2248, %v2240
    %v2993 = vpack.c.b16 %v2249, %v2241
    %v2994 = vpack.c.b16 %v2250, %v2242
    %v2995 = vpack.c.b16 %v2251, %v2243
    %v2996 = vpack.c.b16 %v2252, %v2244
    %v2997 = vpack.c.b16 %v2253, %v2245
    %v2998 = vpack.c.b16 %v2262, %v2254
    %v2999 = vpack.c.b16 %v2263, %v2255
    %v3000 = vpack.c.b16 %v2264, %v2256
    %v3001 = vpack.c.b16 %v2265, %v2257
    %v3002 = vpack.c.b16 %v2266, %v2258
    %v3003 = vpack.c.b16 %v2267, %v2259
    %v3004 = vpack.c.b16 %v2268, %v2260
    %v3005 = vpack.c.b16 %v2269, %v2261
    %v3006 = vpack.c.b16 %v2278, %v2270
    %v3007 = vpack.c.b16 %v2279, %v2271
    %v3008 = vpack.c.b16 %v2280, %v2272
    %v3009 = vpack.c.b16 %v2281, %v2273
    %v3010 = vpack.c.b16 %v2282, %v2274
    %v3011 = vpack.c.b16 %v2283, %v2275
    %v3012 = vpack.c.b16 %v2284, %v2276
    %v3013 = vpack.c.b16 %v2285, %v2277
    %v3014 = vpack.c.b16 %v2294, %v2286
    %v3015 = vpack.c.b16 %v2295, %v2287
    %v3016 = vpack.c.b16 %v2296, %v2288
    %v3017 = vpack.c.b16 %v2297, %v2289
    %v3018 = vpack.c.b16 %v2298, %v2290
    %v3019 = vpack.c.b16 %v2299, %v2291
    %v3020 = vpack.c.b16 %v2300, %v2292
    %v3021 = vpack.c.b16 %v2301, %v2293
    %v3022 = vpack.c.b16 %v2310, %v2302
    %v3023 = vpack.c.b16 %v2311, %v2303
    %v3024 = vpack.c.b16 %v2312, %v2304
    %v3025 = vpack.c.b16 %v2313, %v2305
    %v3026 = vpack.c.b16 %v2314, %v2306
    %v3027 = vpack.c.b16 %v2315, %v2307
    %v3028 = vpack.c.b16 %v2316, %v2308
    %v3029 = vpack.c.b16 %v2317, %v2309
    %v3030 = vpack.c.b16 %v2326, %v2318
    %v3031 = vpack.c.b16 %v2327, %v2319
    %v3032 = vpack.c.b16 %v2328, %v2320
    %v3033 = vpack.c.b16 %v2329, %v2321
    %v3034 = vpack.c.b16 %v2330, %v2322
    %v3035 = vpack.c.b16 %v2331, %v2323
    %v3036 = vpack.c.b16 %v2332, %v2324
    %v3037 = vpack.c.b16 %v2333, %v2325
    %v3038 = vpack.c.b16 %v2342, %v2334
    %v3039 = vpack.c.b16 %v2343, %v2335
    %v3040 = vpack.c.b16 %v2344, %v2336
    %v3041 = vpack.c.b16 %v2345, %v2337
    %v3042 = vpack.c.b16 %v2346, %v2338
    %v3043 = vpack.c.b16 %v2347, %v2339
    %v3044 = vpack.c.b16 %v2348, %v2340
    %v3045 = vpack.c.b16 %v2349, %v2341
    %v3046 = vpack.c.b16 %v2358, %v2350
    %v3047 = vpack.c.b16 %v2359, %v2351
    %v3048 = vpack.c.b16 %v2360, %v2352
    %v3049 = vpack.c.b16 %v2361, %v2353
    %v3050 = vpack.c.b16 %v2362, %v2354
    %v3051 = vpack.c.b16 %v2363, %v2355
    %v3052 = vpack.c.b16 %v2364, %v2356
    %v3053 = vpack.c.b16 %v2365, %v2357
    %v3054 = vpack.c.b16 %v2374, %v2366
    %v3055 = vpack.c.b16 %v2375, %v2367
    %v3056 = vpack.c.b16 %v2376, %v2368
    %v3057 = vpack.c.b16 %v2377, %v2369
    %v3058 = vpack.c.b16 %v2378, %v2370
    %v3059 = vpack.c.b16 %v2379, %v2371
    %v3060 = vpack.c.b16 %v2380, %v2372
    %v3061 = vpack.c.b16 %v2381, %v2373
    %v3062 = vpack.c.b16 %v2390, %v2382
    %v3063 = vpack.c.b16 %v2391, %v2383
    %v3064 = vpack.c.b16 %v2392, %v2384
    %v3065 = vpack.c.b16 %v2393, %v2385
    %v3066 = vpack.c.b16 %v2394, %v2386
    %v3067 = vpack.c.b16 %v2395, %v2387
    %v3068 = vpack.c.b16 %v2396, %v2388
    %v3069 = vpack.c.b16 %v2397, %v2389
    %v3070 = vpack.c.b16 %v2406, %v2398
    %v3071 = vpack.c.b16 %v2407, %v2399
    %v3072 = vpack.c.b16 %v2408, %v2400
    %v3073 = vpack.c.b16 %v2409, %v2401
    %v3074 = vpack.c.b16 %v2410, %v2402
    %v3075 = vpack.c.b16 %v2411, %v2403
    %v3076 = vpack.c.b16 %v2412, %v2404
    %v3077 = vpack.c.b16 %v2413, %v2405
    %v3078 = vpack.c.b16 %v2422, %v2414
    %v3079 = vpack.c.b16 %v2423, %v2415
    %v3080 = vpack.c.b16 %v2424, %v2416
    %v3081 = vpack.c.b16 %v2425, %v2417
    %v3082 = vpack.c.b16 %v2426, %v2418
    %v3083 = vpack.c.b16 %v2427, %v2419
    %v3084 = vpack.c.b16 %v2428, %v2420
    %v3085 = vpack.c.b16 %v2429, %v2421
    %v3086 = vpack.c.b16 %v2438, %v2430
    %v3087 = vpack.c.b16 %v2439, %v2431
    %v3088 = vpack.c.b16 %v2440, %v2432
    %v3089 = vpack.c.b16 %v2441, %v2433
    %v3090 = vpack.c.b16 %v2442, %v2434
    %v3091 = vpack.c.b16 %v2443, %v2435
    %v3092 = vpack.c.b16 %v2444, %v2436
    %v3093 = vpack.c.b16 %v2445, %v2437
    %v3094 = vpack.c.b16 %v2454, %v2446
    %v3095 = vpack.c.b16 %v2455, %v2447
    %v3096 = vpack.c.b16 %v2456, %v2448
    %v3097 = vpack.c.b16 %v2457, %v2449
    %v3098 = vpack.c.b16 %v2458, %v2450
    %v3099 = vpack.c.b16 %v2459, %v2451
    %v3100 = vpack.c.b16 %v2460, %v2452
    %v3101 = vpack.c.b16 %v2461, %v2453
    %v3102 = vpack.c.b16 %v2470, %v2462
    %v3103 = vpack.c.b16 %v2471, %v2463
    %v3104 = vpack.c.b16 %v2472, %v2464
    %v3105 = vpack.c.b16 %v2473, %v2465
    %v3106 = vpack.c.b16 %v2474, %v2466
    %v3107 = vpack.c.b16 %v2475, %v2467
    %v3108 = vpack.c.b16 %v2476, %v2468
    %v3109 = vpack.c.b16 %v2477, %v2469
    %v3110 = vpack.c.b16 %v2486, %v2478
    %v3111 = vpack.c.b16 %v2487, %v2479
    %v3112 = vpack.c.b16 %v2488, %v2480
    %v3113 = vpack.c.b16 %v2489, %v2481
    %v3114 = vpack.c.b16 %v2490, %v2482
    %v3115 = vpack.c.b16 %v2491, %v2483
    %v3116 = vpack.c.b16 %v2492, %v2484
    %v3117 = vpack.c.b16 %v2493, %v2485
    %v3118 = vpack.c.b16 %v2502, %v2494
    %v3119 = vpack.c.b16 %v2503, %v2495
    %v3120 = vpack.c.b16 %v2504, %v2496
    %v3121 = vpack.c.b16 %v2505, %v2497
    %v3122 = vpack.c.b16 %v2506, %v2498
    %v3123 = vpack.c.b16 %v2507, %v2499
    %v3124 = vpack.c.b16 %v2508, %v2500
    %v3125 = vpack.c.b16 %v2509, %v2501
    %v3126 = vpack.c.b16 %v2518, %v2510
    %v3127 = vpack.c.b16 %v2519, %v2511
    %v3128 = vpack.c.b16 %v2520, %v2512
    %v3129 = vpack.c.b16 %v2521, %v2513
    %v3130 = vpack.c.b16 %v2522, %v2514
    %v3131 = vpack.c.b16 %v2523, %v2515
    %v3132 = vpack.c.b16 %v2524, %v2516
    %v3133 = vpack.c.b16 %v2525, %v2517
    %v3134 = vpack.c.b16 %v2534, %v2526
    %v3135 = vpack.c.b16 %v2535, %v2527
    %v3136 = vpack.c.b16 %v2536, %v2528
    %v3137 = vpack.c.b16 %v2537, %v2529
    %v3138 = vpack.c.b16 %v2538, %v2530
    %v3139 = vpack.c.b16 %v2539, %v2531
    %v3140 = vpack.c.b16 %v2540, %v2532
    %v3141 = vpack.c.b16 %v2541, %v2533
    %v3142 = vpack.c.b16 %v2550, %v2542
    %v3143 = vpack.c.b16 %v2551, %v2543
    %v3144 = vpack.c.b16 %v2552, %v2544
    %v3145 = vpack.c.b16 %v2553, %v2545
    %v3146 = vpack.c.b16 %v2554, %v2546
    %v3147 = vpack.c.b16 %v2555, %v2547
    %v3148 = vpack.c.b16 %v2556, %v2548
    %v3149 = vpack.c.b16 %v2557, %v2549
    %v3150 = vpack.c.b16 %v2566, %v2558
    %v3151 = vpack.c.b16 %v2567, %v2559
    %v3152 = vpack.c.b16 %v2568, %v2560
    %v3153 = vpack.c.b16 %v2569, %v2561
    %v3154 = vpack.c.b16 %v2570, %v2562
    %v3155 = vpack.c.b16 %v2571, %v2563
    %v3156 = vpack.c.b16 %v2572, %v2564
    %v3157 = vpack.c.b16 %v2573, %v2565
    %v3158 = vpack.c.b16 %v2582, %v2574
    %v3159 = vpack.c.b16 %v2583, %v2575
    %v3160 = vpack.c.b16 %v2584, %v2576
    %v3161 = vpack.c.b16 %v2585, %v2577
    %v3162 = vpack.c.b16 %v2586, %v2578
    %v3163 = vpack.c.b16 %v2587, %v2579
    %v3164 = vpack.c.b16 %v2588, %v2580
    %v3165 = vpack.c.b16 %v2589, %v2581
    %v3166 = vpack.c.b16 %v2598, %v2590
    %v3167 = vpack.c.b16 %v2599, %v2591
    %v3168 = vpack.c.b16 %v2600, %v2592
    %v3169 = vpack.c.b16 %v2601, %v2593
    %v3170 = vpack.c.b16 %v2602, %v2594
    %v3171 = vpack.c.b16 %v2603, %v2595
    %v3172 = vpack.c.b16 %v2604, %v2596
    %v3173 = vpack.c.b16 %v2605, %v2597
    %v3174 = vpack.c.b16 %v2614, %v2606
    %v3175 = vpack.c.b16 %v2615, %v2607
    %v3176 = vpack.c.b16 %v2616, %v2608
    %v3177 = vpack.c.b16 %v2617, %v2609
    %v3178 = vpack.c.b16 %v2618, %v2610
    %v3179 = vpack.c.b16 %v2619, %v2611
    %v3180 = vpack.c.b16 %v2620, %v2612
    %v3181 = vpack.c.b16 %v2621, %v2613
    %v3182 = vpack.c.b16 %v2630, %v2622
    %v3183 = vpack.c.b16 %v2631, %v2623
    %v3184 = vpack.c.b16 %v2632, %v2624
    %v3185 = vpack.c.b16 %v2633, %v2625
    %v3186 = vpack.c.b16 %v2634, %v2626
    %v3187 = vpack.c.b16 %v2635, %v2627
    %v3188 = vpack.c.b16 %v2636, %v2628
    %v3189 = vpack.c.b16 %v2637, %v2629
    %v3190 = vpack.c.b16 %v2646, %v2638
    %v3191 = vpack.c.b16 %v2647, %v2639
    %v3192 = vpack.c.b16 %v2648, %v2640
    %v3193 = vpack.c.b16 %v2649, %v2641
    %v3194 = vpack.c.b16 %v2650, %v2642
    %v3195 = vpack.c.b16 %v2651, %v2643
    %v3196 = vpack.c.b16 %v2652, %v2644
    %v3197 = vpack.c.b16 %v2653, %v2645
    %v3198 = vpack.c.b16 %v2662, %v2654
    %v3199 = vpack.c.b16 %v2663, %v2655
    %v3200 = vpack.c.b16 %v2664, %v2656
    %v3201 = vpack.c.b16 %v2665, %v2657
    %v3202 = vpack.c.b16 %v2666, %v2658
    %v3203 = vpack.c.b16 %v2667, %v2659
    %v3204 = vpack.c.b16 %v2668, %v2660
    %v3205 = vpack.c.b16 %v2669, %v2661
    %v3206 = vpack.c.b16 %v2678, %v2670
    %v3207 = vpack.c.b16 %v2679, %v2671
    %v3208 = vpack.c.b16 %v2680, %v2672
    %v3209 = vpack.c.b16 %v2681, %v2673
    %v3210 = vpack.c.b16 %v2682, %v2674
    %v3211 = vpack.c.b16 %v2683, %v2675
    %v3212 = vpack.c.b16 %v2684, %v2676
    %v3213 = vpack.c.b16 %v2685, %v2677
    %v3214 = vpack.c.b16 %v2694, %v2686
    %v3215 = vpack.c.b16 %v2695, %v2687
    %v3216 = vpack.c.b16 %v2696, %v2688
    %v3217 = vpack.c.b16 %v2697, %v2689
    %v3218 = vpack.c.b16 %v2698, %v2690
    %v3219 = vpack.c.b16 %v2699, %v2691
    %v3220 = vpack.c.b16 %v2700, %v2692
    %v3221 = vpack.c.b16 %v2701, %v2693
    %v3222 = vpack.c.b16 %v2710, %v2702
    %v3223 = vpack.c.b16 %v2711, %v2703
    %v3224 = vpack.c.b16 %v2712, %v2704
    %v3225 = vpack.c.b16 %v2713, %v2705
    %v3226 = vpack.c.b16 %v2714, %v2706
    %v3227 = vpack.c.b16 %v2715, %v2707
    %v3228 = vpack.c.b16 %v2716, %v2708
    %v3229 = vpack.c.b16 %v2717, %v2709
    %3742 = vmatpush.bf16.msra.mxu0 %v2774
    %3743 = vmatpush.bf16.msra.mxu0 %v2766
    %3744 = vmatpush.bf16.msra.mxu0 %v2758
    %3745 = vmatpush.bf16.msra.mxu0 %v2750
    %3746 = vmatpush.bf16.msra.mxu0 %v2742
    %3747 = vmatpush.bf16.msra.mxu0 %v2734
    %3748 = vmatpush.bf16.msra.mxu0 %v2726
    %3749 = vmatpush.bf16.msra.mxu0 %v2718
    %3750 = vmatmul.bf16.gmra.mxu0 %v644
    %v3751 = vpop.f32.mrf.mxu0
    %v3752 = vadd.f32 %v1166, %v3751
    %v3753 = vpop.f32.mrf.mxu0
    %3754 = vdwg.mxu0
    %3755 = vmatpush.bf16.msra.mxu0 %v2838
    %3756 = vmatpush.bf16.msra.mxu0 %v2830
    %3757 = vmatpush.bf16.msra.mxu0 %v2822
    %3758 = vmatpush.bf16.msra.mxu0 %v2814
    %3759 = vmatpush.bf16.msra.mxu0 %v2806
    %3760 = vmatpush.bf16.msra.mxu0 %v2798
    %3761 = vmatpush.bf16.msra.mxu0 %v2790
    %3762 = vmatpush.bf16.msra.mxu0 %v2782
    %3763 = vmatmul.bf16.gmra.mxu0 %v645
    %v3764 = vpop.f32.mrf.mxu0
    %v3765 = vadd.f32 %v3752, %v3764
    %v3766 = vpop.f32.mrf.mxu0
    %3767 = vdwg.mxu0
    %3768 = vmatpush.bf16.msra.mxu0 %v2902
    %3769 = vmatpush.bf16.msra.mxu0 %v2894
    %3770 = vmatpush.bf16.msra.mxu0 %v2886
    %3771 = vmatpush.bf16.msra.mxu0 %v2878
    %3772 = vmatpush.bf16.msra.mxu0 %v2870
    %3773 = vmatpush.bf16.msra.mxu0 %v2862
    %3774 = vmatpush.bf16.msra.mxu0 %v2854
    %3775 = vmatpush.bf16.msra.mxu0 %v2846
    %3776 = vmatmul.bf16.gmra.mxu0 %v646
    %v3777 = vpop.f32.mrf.mxu0
    %v3778 = vadd.f32 %v3765, %v3777
    %v3779 = vpop.f32.mrf.mxu0
    %3780 = vdwg.mxu0
    %3781 = vmatpush.bf16.msra.mxu0 %v2966
    %3782 = vmatpush.bf16.msra.mxu0 %v2958
    %3783 = vmatpush.bf16.msra.mxu0 %v2950
    %3784 = vmatpush.bf16.msra.mxu0 %v2942
    %3785 = vmatpush.bf16.msra.mxu0 %v2934
    %3786 = vmatpush.bf16.msra.mxu0 %v2926
    %3787 = vmatpush.bf16.msra.mxu0 %v2918
    %3788 = vmatpush.bf16.msra.mxu0 %v2910
    %3789 = vmatmul.bf16.gmra.mxu0 %v647
    %v3790 = vpop.f32.mrf.mxu0
    %v3791 = vadd.f32 %v3778, %v3790
    %v3792 = vpop.f32.mrf.mxu0
    %3793 = vdwg.mxu0
    %3794 = vmatpush.bf16.msra.mxu0 %v3030
    %3795 = vmatpush.bf16.msra.mxu0 %v3022
    %3796 = vmatpush.bf16.msra.mxu0 %v3014
    %3797 = vmatpush.bf16.msra.mxu0 %v3006
    %3798 = vmatpush.bf16.msra.mxu0 %v2998
    %3799 = vmatpush.bf16.msra.mxu0 %v2990
    %3800 = vmatpush.bf16.msra.mxu0 %v2982
    %3801 = vmatpush.bf16.msra.mxu0 %v2974
    %3802 = vmatmul.bf16.gmra.mxu0 %v648
    %v3803 = vpop.f32.mrf.mxu0
    %v3804 = vadd.f32 %v3791, %v3803
    %v3805 = vpop.f32.mrf.mxu0
    %3806 = vdwg.mxu0
    %3807 = vmatpush.bf16.msra.mxu0 %v3094
    %3808 = vmatpush.bf16.msra.mxu0 %v3086
    %3809 = vmatpush.bf16.msra.mxu0 %v3078
    %3810 = vmatpush.bf16.msra.mxu0 %v3070
    %3811 = vmatpush.bf16.msra.mxu0 %v3062
    %3812 = vmatpush.bf16.msra.mxu0 %v3054
    %3813 = vmatpush.bf16.msra.mxu0 %v3046
    %3814 = vmatpush.bf16.msra.mxu0 %v3038
    %3815 = vmatmul.bf16.gmra.mxu0 %v649
    %v3816 = vpop.f32.mrf.mxu0
    %v3817 = vadd.f32 %v3804, %v3816
    %v3818 = vpop.f32.mrf.mxu0
    %3819 = vdwg.mxu0
    %3820 = vmatpush.bf16.msra.mxu0 %v3158
    %3821 = vmatpush.bf16.msra.mxu0 %v3150
    %3822 = vmatpush.bf16.msra.mxu0 %v3142
    %3823 = vmatpush.bf16.msra.mxu0 %v3134
    %3824 = vmatpush.bf16.msra.mxu0 %v3126
    %3825 = vmatpush.bf16.msra.mxu0 %v3118
    %3826 = vmatpush.bf16.msra.mxu0 %v3110
    %3827 = vmatpush.bf16.msra.mxu0 %v3102
    %3828 = vmatmul.bf16.gmra.mxu0 %v650
    %v3829 = vpop.f32.mrf.mxu0
    %v3830 = vadd.f32 %v3817, %v3829
    %v3831 = vpop.f32.mrf.mxu0
    %3832 = vdwg.mxu0
    %3833 = vmatpush.bf16.msra.mxu0 %v3222
    %3834 = vmatpush.bf16.msra.mxu0 %v3214
    %3835 = vmatpush.bf16.msra.mxu0 %v3206
    %3836 = vmatpush.bf16.msra.mxu0 %v3198
    %3837 = vmatpush.bf16.msra.mxu0 %v3190
    %3838 = vmatpush.bf16.msra.mxu0 %v3182
    %3839 = vmatpush.bf16.msra.mxu0 %v3174
    %3840 = vmatpush.bf16.msra.mxu0 %v3166
    %3841 = vmatmul.bf16.gmra.mxu0 %v651
    %v3842 = vpop.f32.mrf.mxu0
    %v3843 = vadd.f32 %v3830, %v3842
    %v3844 = vpop.f32.mrf.mxu0
    %3845 = vdwg.mxu0
    %3846 = vmatpush.bf16.msra.mxu0 %v2775
    %3847 = vmatpush.bf16.msra.mxu0 %v2767
    %3848 = vmatpush.bf16.msra.mxu0 %v2759
    %3849 = vmatpush.bf16.msra.mxu0 %v2751
    %3850 = vmatpush.bf16.msra.mxu0 %v2743
    %3851 = vmatpush.bf16.msra.mxu0 %v2735
    %3852 = vmatpush.bf16.msra.mxu0 %v2727
    %3853 = vmatpush.bf16.msra.mxu0 %v2719
    %3854 = vmatmul.bf16.gmra.mxu0 %v644
    %v3855 = vpop.f32.mrf.mxu0
    %v3856 = vadd.f32 %v1167, %v3855
    %v3857 = vpop.f32.mrf.mxu0
    %3858 = vdwg.mxu0
    %3859 = vmatpush.bf16.msra.mxu0 %v2839
    %3860 = vmatpush.bf16.msra.mxu0 %v2831
    %3861 = vmatpush.bf16.msra.mxu0 %v2823
    %3862 = vmatpush.bf16.msra.mxu0 %v2815
    %3863 = vmatpush.bf16.msra.mxu0 %v2807
    %3864 = vmatpush.bf16.msra.mxu0 %v2799
    %3865 = vmatpush.bf16.msra.mxu0 %v2791
    %3866 = vmatpush.bf16.msra.mxu0 %v2783
    %3867 = vmatmul.bf16.gmra.mxu0 %v645
    %v3868 = vpop.f32.mrf.mxu0
    %v3869 = vadd.f32 %v3856, %v3868
    %v3870 = vpop.f32.mrf.mxu0
    %3871 = vdwg.mxu0
    %3872 = vmatpush.bf16.msra.mxu0 %v2903
    %3873 = vmatpush.bf16.msra.mxu0 %v2895
    %3874 = vmatpush.bf16.msra.mxu0 %v2887
    %3875 = vmatpush.bf16.msra.mxu0 %v2879
    %3876 = vmatpush.bf16.msra.mxu0 %v2871
    %3877 = vmatpush.bf16.msra.mxu0 %v2863
    %3878 = vmatpush.bf16.msra.mxu0 %v2855
    %3879 = vmatpush.bf16.msra.mxu0 %v2847
    %3880 = vmatmul.bf16.gmra.mxu0 %v646
    %v3881 = vpop.f32.mrf.mxu0
    %v3882 = vadd.f32 %v3869, %v3881
    %v3883 = vpop.f32.mrf.mxu0
    %3884 = vdwg.mxu0
    %3885 = vmatpush.bf16.msra.mxu0 %v2967
    %3886 = vmatpush.bf16.msra.mxu0 %v2959
    %3887 = vmatpush.bf16.msra.mxu0 %v2951
    %3888 = vmatpush.bf16.msra.mxu0 %v2943
    %3889 = vmatpush.bf16.msra.mxu0 %v2935
    %3890 = vmatpush.bf16.msra.mxu0 %v2927
    %3891 = vmatpush.bf16.msra.mxu0 %v2919
    %3892 = vmatpush.bf16.msra.mxu0 %v2911
    %3893 = vmatmul.bf16.gmra.mxu0 %v647
    %v3894 = vpop.f32.mrf.mxu0
    %v3895 = vadd.f32 %v3882, %v3894
    %v3896 = vpop.f32.mrf.mxu0
    %3897 = vdwg.mxu0
    %3898 = vmatpush.bf16.msra.mxu0 %v3031
    %3899 = vmatpush.bf16.msra.mxu0 %v3023
    %3900 = vmatpush.bf16.msra.mxu0 %v3015
    %3901 = vmatpush.bf16.msra.mxu0 %v3007
    %3902 = vmatpush.bf16.msra.mxu0 %v2999
    %3903 = vmatpush.bf16.msra.mxu0 %v2991
    %3904 = vmatpush.bf16.msra.mxu0 %v2983
    %3905 = vmatpush.bf16.msra.mxu0 %v2975
    %3906 = vmatmul.bf16.gmra.mxu0 %v648
    %v3907 = vpop.f32.mrf.mxu0
    %v3908 = vadd.f32 %v3895, %v3907
    %v3909 = vpop.f32.mrf.mxu0
    %3910 = vdwg.mxu0
    %3911 = vmatpush.bf16.msra.mxu0 %v3095
    %3912 = vmatpush.bf16.msra.mxu0 %v3087
    %3913 = vmatpush.bf16.msra.mxu0 %v3079
    %3914 = vmatpush.bf16.msra.mxu0 %v3071
    %3915 = vmatpush.bf16.msra.mxu0 %v3063
    %3916 = vmatpush.bf16.msra.mxu0 %v3055
    %3917 = vmatpush.bf16.msra.mxu0 %v3047
    %3918 = vmatpush.bf16.msra.mxu0 %v3039
    %3919 = vmatmul.bf16.gmra.mxu0 %v649
    %v3920 = vpop.f32.mrf.mxu0
    %v3921 = vadd.f32 %v3908, %v3920
    %v3922 = vpop.f32.mrf.mxu0
    %3923 = vdwg.mxu0
    %3924 = vmatpush.bf16.msra.mxu0 %v3159
    %3925 = vmatpush.bf16.msra.mxu0 %v3151
    %3926 = vmatpush.bf16.msra.mxu0 %v3143
    %3927 = vmatpush.bf16.msra.mxu0 %v3135
    %3928 = vmatpush.bf16.msra.mxu0 %v3127
    %3929 = vmatpush.bf16.msra.mxu0 %v3119
    %3930 = vmatpush.bf16.msra.mxu0 %v3111
    %3931 = vmatpush.bf16.msra.mxu0 %v3103
    %3932 = vmatmul.bf16.gmra.mxu0 %v650
    %v3933 = vpop.f32.mrf.mxu0
    %v3934 = vadd.f32 %v3921, %v3933
    %v3935 = vpop.f32.mrf.mxu0
    %3936 = vdwg.mxu0
    %3937 = vmatpush.bf16.msra.mxu0 %v3223
    %3938 = vmatpush.bf16.msra.mxu0 %v3215
    %3939 = vmatpush.bf16.msra.mxu0 %v3207
    %3940 = vmatpush.bf16.msra.mxu0 %v3199
    %3941 = vmatpush.bf16.msra.mxu0 %v3191
    %3942 = vmatpush.bf16.msra.mxu0 %v3183
    %3943 = vmatpush.bf16.msra.mxu0 %v3175
    %3944 = vmatpush.bf16.msra.mxu0 %v3167
    %3945 = vmatmul.bf16.gmra.mxu0 %v651
    %v3946 = vpop.f32.mrf.mxu0
    %v3947 = vadd.f32 %v3934, %v3946
    %v3948 = vpop.f32.mrf.mxu0
    %3949 = vdwg.mxu0
    %3950 = vmatpush.bf16.msra.mxu0 %v2776
    %3951 = vmatpush.bf16.msra.mxu0 %v2768
    %3952 = vmatpush.bf16.msra.mxu0 %v2760
    %3953 = vmatpush.bf16.msra.mxu0 %v2752
    %3954 = vmatpush.bf16.msra.mxu0 %v2744
    %3955 = vmatpush.bf16.msra.mxu0 %v2736
    %3956 = vmatpush.bf16.msra.mxu0 %v2728
    %3957 = vmatpush.bf16.msra.mxu0 %v2720
    %3958 = vmatmul.bf16.gmra.mxu0 %v644
    %v3959 = vpop.f32.mrf.mxu0
    %v3960 = vadd.f32 %v1168, %v3959
    %v3961 = vpop.f32.mrf.mxu0
    %3962 = vdwg.mxu0
    %3963 = vmatpush.bf16.msra.mxu0 %v2840
    %3964 = vmatpush.bf16.msra.mxu0 %v2832
    %3965 = vmatpush.bf16.msra.mxu0 %v2824
    %3966 = vmatpush.bf16.msra.mxu0 %v2816
    %3967 = vmatpush.bf16.msra.mxu0 %v2808
    %3968 = vmatpush.bf16.msra.mxu0 %v2800
    %3969 = vmatpush.bf16.msra.mxu0 %v2792
    %3970 = vmatpush.bf16.msra.mxu0 %v2784
    %3971 = vmatmul.bf16.gmra.mxu0 %v645
    %v3972 = vpop.f32.mrf.mxu0
    %v3973 = vadd.f32 %v3960, %v3972
    %v3974 = vpop.f32.mrf.mxu0
    %3975 = vdwg.mxu0
    %3976 = vmatpush.bf16.msra.mxu0 %v2904
    %3977 = vmatpush.bf16.msra.mxu0 %v2896
    %3978 = vmatpush.bf16.msra.mxu0 %v2888
    %3979 = vmatpush.bf16.msra.mxu0 %v2880
    %3980 = vmatpush.bf16.msra.mxu0 %v2872
    %3981 = vmatpush.bf16.msra.mxu0 %v2864
    %3982 = vmatpush.bf16.msra.mxu0 %v2856
    %3983 = vmatpush.bf16.msra.mxu0 %v2848
    %3984 = vmatmul.bf16.gmra.mxu0 %v646
    %v3985 = vpop.f32.mrf.mxu0
    %v3986 = vadd.f32 %v3973, %v3985
    %v3987 = vpop.f32.mrf.mxu0
    %3988 = vdwg.mxu0
    %3989 = vmatpush.bf16.msra.mxu0 %v2968
    %3990 = vmatpush.bf16.msra.mxu0 %v2960
    %3991 = vmatpush.bf16.msra.mxu0 %v2952
    %3992 = vmatpush.bf16.msra.mxu0 %v2944
    %3993 = vmatpush.bf16.msra.mxu0 %v2936
    %3994 = vmatpush.bf16.msra.mxu0 %v2928
    %3995 = vmatpush.bf16.msra.mxu0 %v2920
    %3996 = vmatpush.bf16.msra.mxu0 %v2912
    %3997 = vmatmul.bf16.gmra.mxu0 %v647
    %v3998 = vpop.f32.mrf.mxu0
    %v3999 = vadd.f32 %v3986, %v3998
    %v4000 = vpop.f32.mrf.mxu0
    %4001 = vdwg.mxu0
    %4002 = vmatpush.bf16.msra.mxu0 %v3032
    %4003 = vmatpush.bf16.msra.mxu0 %v3024
    %4004 = vmatpush.bf16.msra.mxu0 %v3016
    %4005 = vmatpush.bf16.msra.mxu0 %v3008
    %4006 = vmatpush.bf16.msra.mxu0 %v3000
    %4007 = vmatpush.bf16.msra.mxu0 %v2992
    %4008 = vmatpush.bf16.msra.mxu0 %v2984
    %4009 = vmatpush.bf16.msra.mxu0 %v2976
    %4010 = vmatmul.bf16.gmra.mxu0 %v648
    %v4011 = vpop.f32.mrf.mxu0
    %v4012 = vadd.f32 %v3999, %v4011
    %v4013 = vpop.f32.mrf.mxu0
    %4014 = vdwg.mxu0
    %4015 = vmatpush.bf16.msra.mxu0 %v3096
    %4016 = vmatpush.bf16.msra.mxu0 %v3088
    %4017 = vmatpush.bf16.msra.mxu0 %v3080
    %4018 = vmatpush.bf16.msra.mxu0 %v3072
    %4019 = vmatpush.bf16.msra.mxu0 %v3064
    %4020 = vmatpush.bf16.msra.mxu0 %v3056
    %4021 = vmatpush.bf16.msra.mxu0 %v3048
    %4022 = vmatpush.bf16.msra.mxu0 %v3040
    %4023 = vmatmul.bf16.gmra.mxu0 %v649
    %v4024 = vpop.f32.mrf.mxu0
    %v4025 = vadd.f32 %v4012, %v4024
    %v4026 = vpop.f32.mrf.mxu0
    %4027 = vdwg.mxu0
    %4028 = vmatpush.bf16.msra.mxu0 %v3160
    %4029 = vmatpush.bf16.msra.mxu0 %v3152
    %4030 = vmatpush.bf16.msra.mxu0 %v3144
    %4031 = vmatpush.bf16.msra.mxu0 %v3136
    %4032 = vmatpush.bf16.msra.mxu0 %v3128
    %4033 = vmatpush.bf16.msra.mxu0 %v3120
    %4034 = vmatpush.bf16.msra.mxu0 %v3112
    %4035 = vmatpush.bf16.msra.mxu0 %v3104
    %4036 = vmatmul.bf16.gmra.mxu0 %v650
    %v4037 = vpop.f32.mrf.mxu0
    %v4038 = vadd.f32 %v4025, %v4037
    %v4039 = vpop.f32.mrf.mxu0
    %4040 = vdwg.mxu0
    %4041 = vmatpush.bf16.msra.mxu0 %v3224
    %4042 = vmatpush.bf16.msra.mxu0 %v3216
    %4043 = vmatpush.bf16.msra.mxu0 %v3208
    %4044 = vmatpush.bf16.msra.mxu0 %v3200
    %4045 = vmatpush.bf16.msra.mxu0 %v3192
    %4046 = vmatpush.bf16.msra.mxu0 %v3184
    %4047 = vmatpush.bf16.msra.mxu0 %v3176
    %4048 = vmatpush.bf16.msra.mxu0 %v3168
    %4049 = vmatmul.bf16.gmra.mxu0 %v651
    %v4050 = vpop.f32.mrf.mxu0
    %v4051 = vadd.f32 %v4038, %v4050
    %v4052 = vpop.f32.mrf.mxu0
    %4053 = vdwg.mxu0
    %4054 = vmatpush.bf16.msra.mxu0 %v2777
    %4055 = vmatpush.bf16.msra.mxu0 %v2769
    %4056 = vmatpush.bf16.msra.mxu0 %v2761
    %4057 = vmatpush.bf16.msra.mxu0 %v2753
    %4058 = vmatpush.bf16.msra.mxu0 %v2745
    %4059 = vmatpush.bf16.msra.mxu0 %v2737
    %4060 = vmatpush.bf16.msra.mxu0 %v2729
    %4061 = vmatpush.bf16.msra.mxu0 %v2721
    %4062 = vmatmul.bf16.gmra.mxu0 %v644
    %v4063 = vpop.f32.mrf.mxu0
    %v4064 = vadd.f32 %v1169, %v4063
    %v4065 = vpop.f32.mrf.mxu0
    %4066 = vdwg.mxu0
    %4067 = vmatpush.bf16.msra.mxu0 %v2841
    %4068 = vmatpush.bf16.msra.mxu0 %v2833
    %4069 = vmatpush.bf16.msra.mxu0 %v2825
    %4070 = vmatpush.bf16.msra.mxu0 %v2817
    %4071 = vmatpush.bf16.msra.mxu0 %v2809
    %4072 = vmatpush.bf16.msra.mxu0 %v2801
    %4073 = vmatpush.bf16.msra.mxu0 %v2793
    %4074 = vmatpush.bf16.msra.mxu0 %v2785
    %4075 = vmatmul.bf16.gmra.mxu0 %v645
    %v4076 = vpop.f32.mrf.mxu0
    %v4077 = vadd.f32 %v4064, %v4076
    %v4078 = vpop.f32.mrf.mxu0
    %4079 = vdwg.mxu0
    %4080 = vmatpush.bf16.msra.mxu0 %v2905
    %4081 = vmatpush.bf16.msra.mxu0 %v2897
    %4082 = vmatpush.bf16.msra.mxu0 %v2889
    %4083 = vmatpush.bf16.msra.mxu0 %v2881
    %4084 = vmatpush.bf16.msra.mxu0 %v2873
    %4085 = vmatpush.bf16.msra.mxu0 %v2865
    %4086 = vmatpush.bf16.msra.mxu0 %v2857
    %4087 = vmatpush.bf16.msra.mxu0 %v2849
    %4088 = vmatmul.bf16.gmra.mxu0 %v646
    %v4089 = vpop.f32.mrf.mxu0
    %v4090 = vadd.f32 %v4077, %v4089
    %v4091 = vpop.f32.mrf.mxu0
    %4092 = vdwg.mxu0
    %4093 = vmatpush.bf16.msra.mxu0 %v2969
    %4094 = vmatpush.bf16.msra.mxu0 %v2961
    %4095 = vmatpush.bf16.msra.mxu0 %v2953
    %4096 = vmatpush.bf16.msra.mxu0 %v2945
    %4097 = vmatpush.bf16.msra.mxu0 %v2937
    %4098 = vmatpush.bf16.msra.mxu0 %v2929
    %4099 = vmatpush.bf16.msra.mxu0 %v2921
    %4100 = vmatpush.bf16.msra.mxu0 %v2913
    %4101 = vmatmul.bf16.gmra.mxu0 %v647
    %v4102 = vpop.f32.mrf.mxu0
    %v4103 = vadd.f32 %v4090, %v4102
    %v4104 = vpop.f32.mrf.mxu0
    %4105 = vdwg.mxu0
    %4106 = vmatpush.bf16.msra.mxu0 %v3033
    %4107 = vmatpush.bf16.msra.mxu0 %v3025
    %4108 = vmatpush.bf16.msra.mxu0 %v3017
    %4109 = vmatpush.bf16.msra.mxu0 %v3009
    %4110 = vmatpush.bf16.msra.mxu0 %v3001
    %4111 = vmatpush.bf16.msra.mxu0 %v2993
    %4112 = vmatpush.bf16.msra.mxu0 %v2985
    %4113 = vmatpush.bf16.msra.mxu0 %v2977
    %4114 = vmatmul.bf16.gmra.mxu0 %v648
    %v4115 = vpop.f32.mrf.mxu0
    %v4116 = vadd.f32 %v4103, %v4115
    %v4117 = vpop.f32.mrf.mxu0
    %4118 = vdwg.mxu0
    %4119 = vmatpush.bf16.msra.mxu0 %v3097
    %4120 = vmatpush.bf16.msra.mxu0 %v3089
    %4121 = vmatpush.bf16.msra.mxu0 %v3081
    %4122 = vmatpush.bf16.msra.mxu0 %v3073
    %4123 = vmatpush.bf16.msra.mxu0 %v3065
    %4124 = vmatpush.bf16.msra.mxu0 %v3057
    %4125 = vmatpush.bf16.msra.mxu0 %v3049
    %4126 = vmatpush.bf16.msra.mxu0 %v3041
    %4127 = vmatmul.bf16.gmra.mxu0 %v649
    %v4128 = vpop.f32.mrf.mxu0
    %v4129 = vadd.f32 %v4116, %v4128
    %v4130 = vpop.f32.mrf.mxu0
    %4131 = vdwg.mxu0
    %4132 = vmatpush.bf16.msra.mxu0 %v3161
    %4133 = vmatpush.bf16.msra.mxu0 %v3153
    %4134 = vmatpush.bf16.msra.mxu0 %v3145
    %4135 = vmatpush.bf16.msra.mxu0 %v3137
    %4136 = vmatpush.bf16.msra.mxu0 %v3129
    %4137 = vmatpush.bf16.msra.mxu0 %v3121
    %4138 = vmatpush.bf16.msra.mxu0 %v3113
    %4139 = vmatpush.bf16.msra.mxu0 %v3105
    %4140 = vmatmul.bf16.gmra.mxu0 %v650
    %v4141 = vpop.f32.mrf.mxu0
    %v4142 = vadd.f32 %v4129, %v4141
    %v4143 = vpop.f32.mrf.mxu0
    %4144 = vdwg.mxu0
    %4145 = vmatpush.bf16.msra.mxu0 %v3225
    %4146 = vmatpush.bf16.msra.mxu0 %v3217
    %4147 = vmatpush.bf16.msra.mxu0 %v3209
    %4148 = vmatpush.bf16.msra.mxu0 %v3201
    %4149 = vmatpush.bf16.msra.mxu0 %v3193
    %4150 = vmatpush.bf16.msra.mxu0 %v3185
    %4151 = vmatpush.bf16.msra.mxu0 %v3177
    %4152 = vmatpush.bf16.msra.mxu0 %v3169
    %4153 = vmatmul.bf16.gmra.mxu0 %v651
    %v4154 = vpop.f32.mrf.mxu0
    %v4155 = vadd.f32 %v4142, %v4154
    %v4156 = vpop.f32.mrf.mxu0
    %4157 = vdwg.mxu0
    %4158 = vmatpush.bf16.msra.mxu0 %v2778
    %4159 = vmatpush.bf16.msra.mxu0 %v2770
    %4160 = vmatpush.bf16.msra.mxu0 %v2762
    %4161 = vmatpush.bf16.msra.mxu0 %v2754
    %4162 = vmatpush.bf16.msra.mxu0 %v2746
    %4163 = vmatpush.bf16.msra.mxu0 %v2738
    %4164 = vmatpush.bf16.msra.mxu0 %v2730
    %4165 = vmatpush.bf16.msra.mxu0 %v2722
    %4166 = vmatmul.bf16.gmra.mxu0 %v644
    %v4167 = vpop.f32.mrf.mxu0
    %v4168 = vadd.f32 %v1170, %v4167
    %v4169 = vpop.f32.mrf.mxu0
    %4170 = vdwg.mxu0
    %4171 = vmatpush.bf16.msra.mxu0 %v2842
    %4172 = vmatpush.bf16.msra.mxu0 %v2834
    %4173 = vmatpush.bf16.msra.mxu0 %v2826
    %4174 = vmatpush.bf16.msra.mxu0 %v2818
    %4175 = vmatpush.bf16.msra.mxu0 %v2810
    %4176 = vmatpush.bf16.msra.mxu0 %v2802
    %4177 = vmatpush.bf16.msra.mxu0 %v2794
    %4178 = vmatpush.bf16.msra.mxu0 %v2786
    %4179 = vmatmul.bf16.gmra.mxu0 %v645
    %v4180 = vpop.f32.mrf.mxu0
    %v4181 = vadd.f32 %v4168, %v4180
    %v4182 = vpop.f32.mrf.mxu0
    %4183 = vdwg.mxu0
    %4184 = vmatpush.bf16.msra.mxu0 %v2906
    %4185 = vmatpush.bf16.msra.mxu0 %v2898
    %4186 = vmatpush.bf16.msra.mxu0 %v2890
    %4187 = vmatpush.bf16.msra.mxu0 %v2882
    %4188 = vmatpush.bf16.msra.mxu0 %v2874
    %4189 = vmatpush.bf16.msra.mxu0 %v2866
    %4190 = vmatpush.bf16.msra.mxu0 %v2858
    %4191 = vmatpush.bf16.msra.mxu0 %v2850
    %4192 = vmatmul.bf16.gmra.mxu0 %v646
    %v4193 = vpop.f32.mrf.mxu0
    %v4194 = vadd.f32 %v4181, %v4193
    %v4195 = vpop.f32.mrf.mxu0
    %4196 = vdwg.mxu0
    %4197 = vmatpush.bf16.msra.mxu0 %v2970
    %4198 = vmatpush.bf16.msra.mxu0 %v2962
    %4199 = vmatpush.bf16.msra.mxu0 %v2954
    %4200 = vmatpush.bf16.msra.mxu0 %v2946
    %4201 = vmatpush.bf16.msra.mxu0 %v2938
    %4202 = vmatpush.bf16.msra.mxu0 %v2930
    %4203 = vmatpush.bf16.msra.mxu0 %v2922
    %4204 = vmatpush.bf16.msra.mxu0 %v2914
    %4205 = vmatmul.bf16.gmra.mxu0 %v647
    %v4206 = vpop.f32.mrf.mxu0
    %v4207 = vadd.f32 %v4194, %v4206
    %v4208 = vpop.f32.mrf.mxu0
    %4209 = vdwg.mxu0
    %4210 = vmatpush.bf16.msra.mxu0 %v3034
    %4211 = vmatpush.bf16.msra.mxu0 %v3026
    %4212 = vmatpush.bf16.msra.mxu0 %v3018
    %4213 = vmatpush.bf16.msra.mxu0 %v3010
    %4214 = vmatpush.bf16.msra.mxu0 %v3002
    %4215 = vmatpush.bf16.msra.mxu0 %v2994
    %4216 = vmatpush.bf16.msra.mxu0 %v2986
    %4217 = vmatpush.bf16.msra.mxu0 %v2978
    %4218 = vmatmul.bf16.gmra.mxu0 %v648
    %v4219 = vpop.f32.mrf.mxu0
    %v4220 = vadd.f32 %v4207, %v4219
    %v4221 = vpop.f32.mrf.mxu0
    %4222 = vdwg.mxu0
    %4223 = vmatpush.bf16.msra.mxu0 %v3098
    %4224 = vmatpush.bf16.msra.mxu0 %v3090
    %4225 = vmatpush.bf16.msra.mxu0 %v3082
    %4226 = vmatpush.bf16.msra.mxu0 %v3074
    %4227 = vmatpush.bf16.msra.mxu0 %v3066
    %4228 = vmatpush.bf16.msra.mxu0 %v3058
    %4229 = vmatpush.bf16.msra.mxu0 %v3050
    %4230 = vmatpush.bf16.msra.mxu0 %v3042
    %4231 = vmatmul.bf16.gmra.mxu0 %v649
    %v4232 = vpop.f32.mrf.mxu0
    %v4233 = vadd.f32 %v4220, %v4232
    %v4234 = vpop.f32.mrf.mxu0
    %4235 = vdwg.mxu0
    %4236 = vmatpush.bf16.msra.mxu0 %v3162
    %4237 = vmatpush.bf16.msra.mxu0 %v3154
    %4238 = vmatpush.bf16.msra.mxu0 %v3146
    %4239 = vmatpush.bf16.msra.mxu0 %v3138
    %4240 = vmatpush.bf16.msra.mxu0 %v3130
    %4241 = vmatpush.bf16.msra.mxu0 %v3122
    %4242 = vmatpush.bf16.msra.mxu0 %v3114
    %4243 = vmatpush.bf16.msra.mxu0 %v3106
    %4244 = vmatmul.bf16.gmra.mxu0 %v650
    %v4245 = vpop.f32.mrf.mxu0
    %v4246 = vadd.f32 %v4233, %v4245
    %v4247 = vpop.f32.mrf.mxu0
    %4248 = vdwg.mxu0
    %4249 = vmatpush.bf16.msra.mxu0 %v3226
    %4250 = vmatpush.bf16.msra.mxu0 %v3218
    %4251 = vmatpush.bf16.msra.mxu0 %v3210
    %4252 = vmatpush.bf16.msra.mxu0 %v3202
    %4253 = vmatpush.bf16.msra.mxu0 %v3194
    %4254 = vmatpush.bf16.msra.mxu0 %v3186
    %4255 = vmatpush.bf16.msra.mxu0 %v3178
    %4256 = vmatpush.bf16.msra.mxu0 %v3170
    %4257 = vmatmul.bf16.gmra.mxu0 %v651
    %v4258 = vpop.f32.mrf.mxu0
    %v4259 = vadd.f32 %v4246, %v4258
    %v4260 = vpop.f32.mrf.mxu0
    %4261 = vdwg.mxu0
    %4262 = vmatpush.bf16.msra.mxu0 %v2779
    %4263 = vmatpush.bf16.msra.mxu0 %v2771
    %4264 = vmatpush.bf16.msra.mxu0 %v2763
    %4265 = vmatpush.bf16.msra.mxu0 %v2755
    %4266 = vmatpush.bf16.msra.mxu0 %v2747
    %4267 = vmatpush.bf16.msra.mxu0 %v2739
    %4268 = vmatpush.bf16.msra.mxu0 %v2731
    %4269 = vmatpush.bf16.msra.mxu0 %v2723
    %4270 = vmatmul.bf16.gmra.mxu0 %v644
    %v4271 = vpop.f32.mrf.mxu0
    %v4272 = vadd.f32 %v1171, %v4271
    %v4273 = vpop.f32.mrf.mxu0
    %4274 = vdwg.mxu0
    %4275 = vmatpush.bf16.msra.mxu0 %v2843
    %4276 = vmatpush.bf16.msra.mxu0 %v2835
    %4277 = vmatpush.bf16.msra.mxu0 %v2827
    %4278 = vmatpush.bf16.msra.mxu0 %v2819
    %4279 = vmatpush.bf16.msra.mxu0 %v2811
    %4280 = vmatpush.bf16.msra.mxu0 %v2803
    %4281 = vmatpush.bf16.msra.mxu0 %v2795
    %4282 = vmatpush.bf16.msra.mxu0 %v2787
    %4283 = vmatmul.bf16.gmra.mxu0 %v645
    %v4284 = vpop.f32.mrf.mxu0
    %v4285 = vadd.f32 %v4272, %v4284
    %v4286 = vpop.f32.mrf.mxu0
    %4287 = vdwg.mxu0
    %4288 = vmatpush.bf16.msra.mxu0 %v2907
    %4289 = vmatpush.bf16.msra.mxu0 %v2899
    %4290 = vmatpush.bf16.msra.mxu0 %v2891
    %4291 = vmatpush.bf16.msra.mxu0 %v2883
    %4292 = vmatpush.bf16.msra.mxu0 %v2875
    %4293 = vmatpush.bf16.msra.mxu0 %v2867
    %4294 = vmatpush.bf16.msra.mxu0 %v2859
    %4295 = vmatpush.bf16.msra.mxu0 %v2851
    %4296 = vmatmul.bf16.gmra.mxu0 %v646
    %v4297 = vpop.f32.mrf.mxu0
    %v4298 = vadd.f32 %v4285, %v4297
    %v4299 = vpop.f32.mrf.mxu0
    %4300 = vdwg.mxu0
    %4301 = vmatpush.bf16.msra.mxu0 %v2971
    %4302 = vmatpush.bf16.msra.mxu0 %v2963
    %4303 = vmatpush.bf16.msra.mxu0 %v2955
    %4304 = vmatpush.bf16.msra.mxu0 %v2947
    %4305 = vmatpush.bf16.msra.mxu0 %v2939
    %4306 = vmatpush.bf16.msra.mxu0 %v2931
    %4307 = vmatpush.bf16.msra.mxu0 %v2923
    %4308 = vmatpush.bf16.msra.mxu0 %v2915
    %4309 = vmatmul.bf16.gmra.mxu0 %v647
    %v4310 = vpop.f32.mrf.mxu0
    %v4311 = vadd.f32 %v4298, %v4310
    %v4312 = vpop.f32.mrf.mxu0
    %4313 = vdwg.mxu0
    %4314 = vmatpush.bf16.msra.mxu0 %v3035
    %4315 = vmatpush.bf16.msra.mxu0 %v3027
    %4316 = vmatpush.bf16.msra.mxu0 %v3019
    %4317 = vmatpush.bf16.msra.mxu0 %v3011
    %4318 = vmatpush.bf16.msra.mxu0 %v3003
    %4319 = vmatpush.bf16.msra.mxu0 %v2995
    %4320 = vmatpush.bf16.msra.mxu0 %v2987
    %4321 = vmatpush.bf16.msra.mxu0 %v2979
    %4322 = vmatmul.bf16.gmra.mxu0 %v648
    %v4323 = vpop.f32.mrf.mxu0
    %v4324 = vadd.f32 %v4311, %v4323
    %v4325 = vpop.f32.mrf.mxu0
    %4326 = vdwg.mxu0
    %4327 = vmatpush.bf16.msra.mxu0 %v3099
    %4328 = vmatpush.bf16.msra.mxu0 %v3091
    %4329 = vmatpush.bf16.msra.mxu0 %v3083
    %4330 = vmatpush.bf16.msra.mxu0 %v3075
    %4331 = vmatpush.bf16.msra.mxu0 %v3067
    %4332 = vmatpush.bf16.msra.mxu0 %v3059
    %4333 = vmatpush.bf16.msra.mxu0 %v3051
    %4334 = vmatpush.bf16.msra.mxu0 %v3043
    %4335 = vmatmul.bf16.gmra.mxu0 %v649
    %v4336 = vpop.f32.mrf.mxu0
    %v4337 = vadd.f32 %v4324, %v4336
    %v4338 = vpop.f32.mrf.mxu0
    %4339 = vdwg.mxu0
    %4340 = vmatpush.bf16.msra.mxu0 %v3163
    %4341 = vmatpush.bf16.msra.mxu0 %v3155
    %4342 = vmatpush.bf16.msra.mxu0 %v3147
    %4343 = vmatpush.bf16.msra.mxu0 %v3139
    %4344 = vmatpush.bf16.msra.mxu0 %v3131
    %4345 = vmatpush.bf16.msra.mxu0 %v3123
    %4346 = vmatpush.bf16.msra.mxu0 %v3115
    %4347 = vmatpush.bf16.msra.mxu0 %v3107
    %4348 = vmatmul.bf16.gmra.mxu0 %v650
    %v4349 = vpop.f32.mrf.mxu0
    %v4350 = vadd.f32 %v4337, %v4349
    %v4351 = vpop.f32.mrf.mxu0
    %4352 = vdwg.mxu0
    %4353 = vmatpush.bf16.msra.mxu0 %v3227
    %4354 = vmatpush.bf16.msra.mxu0 %v3219
    %4355 = vmatpush.bf16.msra.mxu0 %v3211
    %4356 = vmatpush.bf16.msra.mxu0 %v3203
    %4357 = vmatpush.bf16.msra.mxu0 %v3195
    %4358 = vmatpush.bf16.msra.mxu0 %v3187
    %4359 = vmatpush.bf16.msra.mxu0 %v3179
    %4360 = vmatpush.bf16.msra.mxu0 %v3171
    %4361 = vmatmul.bf16.gmra.mxu0 %v651
    %v4362 = vpop.f32.mrf.mxu0
    %v4363 = vadd.f32 %v4350, %v4362
    %v4364 = vpop.f32.mrf.mxu0
    %4365 = vdwg.mxu0
    %4366 = vmatpush.bf16.msra.mxu0 %v2780
    %4367 = vmatpush.bf16.msra.mxu0 %v2772
    %4368 = vmatpush.bf16.msra.mxu0 %v2764
    %4369 = vmatpush.bf16.msra.mxu0 %v2756
    %4370 = vmatpush.bf16.msra.mxu0 %v2748
    %4371 = vmatpush.bf16.msra.mxu0 %v2740
    %4372 = vmatpush.bf16.msra.mxu0 %v2732
    %4373 = vmatpush.bf16.msra.mxu0 %v2724
    %4374 = vmatmul.bf16.gmra.mxu0 %v644
    %v4375 = vpop.f32.mrf.mxu0
    %v4376 = vadd.f32 %v1172, %v4375
    %v4377 = vpop.f32.mrf.mxu0
    %4378 = vdwg.mxu0
    %4379 = vmatpush.bf16.msra.mxu0 %v2844
    %4380 = vmatpush.bf16.msra.mxu0 %v2836
    %4381 = vmatpush.bf16.msra.mxu0 %v2828
    %4382 = vmatpush.bf16.msra.mxu0 %v2820
    %4383 = vmatpush.bf16.msra.mxu0 %v2812
    %4384 = vmatpush.bf16.msra.mxu0 %v2804
    %4385 = vmatpush.bf16.msra.mxu0 %v2796
    %4386 = vmatpush.bf16.msra.mxu0 %v2788
    %4387 = vmatmul.bf16.gmra.mxu0 %v645
    %v4388 = vpop.f32.mrf.mxu0
    %v4389 = vadd.f32 %v4376, %v4388
    %v4390 = vpop.f32.mrf.mxu0
    %4391 = vdwg.mxu0
    %4392 = vmatpush.bf16.msra.mxu0 %v2908
    %4393 = vmatpush.bf16.msra.mxu0 %v2900
    %4394 = vmatpush.bf16.msra.mxu0 %v2892
    %4395 = vmatpush.bf16.msra.mxu0 %v2884
    %4396 = vmatpush.bf16.msra.mxu0 %v2876
    %4397 = vmatpush.bf16.msra.mxu0 %v2868
    %4398 = vmatpush.bf16.msra.mxu0 %v2860
    %4399 = vmatpush.bf16.msra.mxu0 %v2852
    %4400 = vmatmul.bf16.gmra.mxu0 %v646
    %v4401 = vpop.f32.mrf.mxu0
    %v4402 = vadd.f32 %v4389, %v4401
    %v4403 = vpop.f32.mrf.mxu0
    %4404 = vdwg.mxu0
    %4405 = vmatpush.bf16.msra.mxu0 %v2972
    %4406 = vmatpush.bf16.msra.mxu0 %v2964
    %4407 = vmatpush.bf16.msra.mxu0 %v2956
    %4408 = vmatpush.bf16.msra.mxu0 %v2948
    %4409 = vmatpush.bf16.msra.mxu0 %v2940
    %4410 = vmatpush.bf16.msra.mxu0 %v2932
    %4411 = vmatpush.bf16.msra.mxu0 %v2924
    %4412 = vmatpush.bf16.msra.mxu0 %v2916
    %4413 = vmatmul.bf16.gmra.mxu0 %v647
    %v4414 = vpop.f32.mrf.mxu0
    %v4415 = vadd.f32 %v4402, %v4414
    %v4416 = vpop.f32.mrf.mxu0
    %4417 = vdwg.mxu0
    %4418 = vmatpush.bf16.msra.mxu0 %v3036
    %4419 = vmatpush.bf16.msra.mxu0 %v3028
    %4420 = vmatpush.bf16.msra.mxu0 %v3020
    %4421 = vmatpush.bf16.msra.mxu0 %v3012
    %4422 = vmatpush.bf16.msra.mxu0 %v3004
    %4423 = vmatpush.bf16.msra.mxu0 %v2996
    %4424 = vmatpush.bf16.msra.mxu0 %v2988
    %4425 = vmatpush.bf16.msra.mxu0 %v2980
    %4426 = vmatmul.bf16.gmra.mxu0 %v648
    %v4427 = vpop.f32.mrf.mxu0
    %v4428 = vadd.f32 %v4415, %v4427
    %v4429 = vpop.f32.mrf.mxu0
    %4430 = vdwg.mxu0
    %4431 = vmatpush.bf16.msra.mxu0 %v3100
    %4432 = vmatpush.bf16.msra.mxu0 %v3092
    %4433 = vmatpush.bf16.msra.mxu0 %v3084
    %4434 = vmatpush.bf16.msra.mxu0 %v3076
    %4435 = vmatpush.bf16.msra.mxu0 %v3068
    %4436 = vmatpush.bf16.msra.mxu0 %v3060
    %4437 = vmatpush.bf16.msra.mxu0 %v3052
    %4438 = vmatpush.bf16.msra.mxu0 %v3044
    %4439 = vmatmul.bf16.gmra.mxu0 %v649
    %v4440 = vpop.f32.mrf.mxu0
    %v4441 = vadd.f32 %v4428, %v4440
    %v4442 = vpop.f32.mrf.mxu0
    %4443 = vdwg.mxu0
    %4444 = vmatpush.bf16.msra.mxu0 %v3164
    %4445 = vmatpush.bf16.msra.mxu0 %v3156
    %4446 = vmatpush.bf16.msra.mxu0 %v3148
    %4447 = vmatpush.bf16.msra.mxu0 %v3140
    %4448 = vmatpush.bf16.msra.mxu0 %v3132
    %4449 = vmatpush.bf16.msra.mxu0 %v3124
    %4450 = vmatpush.bf16.msra.mxu0 %v3116
    %4451 = vmatpush.bf16.msra.mxu0 %v3108
    %4452 = vmatmul.bf16.gmra.mxu0 %v650
    %v4453 = vpop.f32.mrf.mxu0
    %v4454 = vadd.f32 %v4441, %v4453
    %v4455 = vpop.f32.mrf.mxu0
    %4456 = vdwg.mxu0
    %4457 = vmatpush.bf16.msra.mxu0 %v3228
    %4458 = vmatpush.bf16.msra.mxu0 %v3220
    %4459 = vmatpush.bf16.msra.mxu0 %v3212
    %4460 = vmatpush.bf16.msra.mxu0 %v3204
    %4461 = vmatpush.bf16.msra.mxu0 %v3196
    %4462 = vmatpush.bf16.msra.mxu0 %v3188
    %4463 = vmatpush.bf16.msra.mxu0 %v3180
    %4464 = vmatpush.bf16.msra.mxu0 %v3172
    %4465 = vmatmul.bf16.gmra.mxu0 %v651
    %v4466 = vpop.f32.mrf.mxu0
    %v4467 = vadd.f32 %v4454, %v4466
    %v4468 = vpop.f32.mrf.mxu0
    %4469 = vdwg.mxu0
    %4470 = vmatpush.bf16.msra.mxu0 %v2781
    %4471 = vmatpush.bf16.msra.mxu0 %v2773
    %4472 = vmatpush.bf16.msra.mxu0 %v2765
    %4473 = vmatpush.bf16.msra.mxu0 %v2757
    %4474 = vmatpush.bf16.msra.mxu0 %v2749
    %4475 = vmatpush.bf16.msra.mxu0 %v2741
    %4476 = vmatpush.bf16.msra.mxu0 %v2733
    %4477 = vmatpush.bf16.msra.mxu0 %v2725
    %4478 = vmatmul.bf16.gmra.mxu0 %v644
    %v4479 = vpop.f32.mrf.mxu0
    %v4480 = vadd.f32 %v1173, %v4479
    %v4481 = vpop.f32.mrf.mxu0
    %4482 = vdwg.mxu0
    %4483 = vmatpush.bf16.msra.mxu0 %v2845
    %4484 = vmatpush.bf16.msra.mxu0 %v2837
    %4485 = vmatpush.bf16.msra.mxu0 %v2829
    %4486 = vmatpush.bf16.msra.mxu0 %v2821
    %4487 = vmatpush.bf16.msra.mxu0 %v2813
    %4488 = vmatpush.bf16.msra.mxu0 %v2805
    %4489 = vmatpush.bf16.msra.mxu0 %v2797
    %4490 = vmatpush.bf16.msra.mxu0 %v2789
    %4491 = vmatmul.bf16.gmra.mxu0 %v645
    %v4492 = vpop.f32.mrf.mxu0
    %v4493 = vadd.f32 %v4480, %v4492
    %v4494 = vpop.f32.mrf.mxu0
    %4495 = vdwg.mxu0
    %4496 = vmatpush.bf16.msra.mxu0 %v2909
    %4497 = vmatpush.bf16.msra.mxu0 %v2901
    %4498 = vmatpush.bf16.msra.mxu0 %v2893
    %4499 = vmatpush.bf16.msra.mxu0 %v2885
    %4500 = vmatpush.bf16.msra.mxu0 %v2877
    %4501 = vmatpush.bf16.msra.mxu0 %v2869
    %4502 = vmatpush.bf16.msra.mxu0 %v2861
    %4503 = vmatpush.bf16.msra.mxu0 %v2853
    %4504 = vmatmul.bf16.gmra.mxu0 %v646
    %v4505 = vpop.f32.mrf.mxu0
    %v4506 = vadd.f32 %v4493, %v4505
    %v4507 = vpop.f32.mrf.mxu0
    %4508 = vdwg.mxu0
    %4509 = vmatpush.bf16.msra.mxu0 %v2973
    %4510 = vmatpush.bf16.msra.mxu0 %v2965
    %4511 = vmatpush.bf16.msra.mxu0 %v2957
    %4512 = vmatpush.bf16.msra.mxu0 %v2949
    %4513 = vmatpush.bf16.msra.mxu0 %v2941
    %4514 = vmatpush.bf16.msra.mxu0 %v2933
    %4515 = vmatpush.bf16.msra.mxu0 %v2925
    %4516 = vmatpush.bf16.msra.mxu0 %v2917
    %4517 = vmatmul.bf16.gmra.mxu0 %v647
    %v4518 = vpop.f32.mrf.mxu0
    %v4519 = vadd.f32 %v4506, %v4518
    %v4520 = vpop.f32.mrf.mxu0
    %4521 = vdwg.mxu0
    %4522 = vmatpush.bf16.msra.mxu0 %v3037
    %4523 = vmatpush.bf16.msra.mxu0 %v3029
    %4524 = vmatpush.bf16.msra.mxu0 %v3021
    %4525 = vmatpush.bf16.msra.mxu0 %v3013
    %4526 = vmatpush.bf16.msra.mxu0 %v3005
    %4527 = vmatpush.bf16.msra.mxu0 %v2997
    %4528 = vmatpush.bf16.msra.mxu0 %v2989
    %4529 = vmatpush.bf16.msra.mxu0 %v2981
    %4530 = vmatmul.bf16.gmra.mxu0 %v648
    %v4531 = vpop.f32.mrf.mxu0
    %v4532 = vadd.f32 %v4519, %v4531
    %v4533 = vpop.f32.mrf.mxu0
    %4534 = vdwg.mxu0
    %4535 = vmatpush.bf16.msra.mxu0 %v3101
    %4536 = vmatpush.bf16.msra.mxu0 %v3093
    %4537 = vmatpush.bf16.msra.mxu0 %v3085
    %4538 = vmatpush.bf16.msra.mxu0 %v3077
    %4539 = vmatpush.bf16.msra.mxu0 %v3069
    %4540 = vmatpush.bf16.msra.mxu0 %v3061
    %4541 = vmatpush.bf16.msra.mxu0 %v3053
    %4542 = vmatpush.bf16.msra.mxu0 %v3045
    %4543 = vmatmul.bf16.gmra.mxu0 %v649
    %v4544 = vpop.f32.mrf.mxu0
    %v4545 = vadd.f32 %v4532, %v4544
    %v4546 = vpop.f32.mrf.mxu0
    %4547 = vdwg.mxu0
    %4548 = vmatpush.bf16.msra.mxu0 %v3165
    %4549 = vmatpush.bf16.msra.mxu0 %v3157
    %4550 = vmatpush.bf16.msra.mxu0 %v3149
    %4551 = vmatpush.bf16.msra.mxu0 %v3141
    %4552 = vmatpush.bf16.msra.mxu0 %v3133
    %4553 = vmatpush.bf16.msra.mxu0 %v3125
    %4554 = vmatpush.bf16.msra.mxu0 %v3117
    %4555 = vmatpush.bf16.msra.mxu0 %v3109
    %4556 = vmatmul.bf16.gmra.mxu0 %v650
    %v4557 = vpop.f32.mrf.mxu0
    %v4558 = vadd.f32 %v4545, %v4557
    %v4559 = vpop.f32.mrf.mxu0
    %4560 = vdwg.mxu0
    %4561 = vmatpush.bf16.msra.mxu0 %v3229
    %4562 = vmatpush.bf16.msra.mxu0 %v3221
    %4563 = vmatpush.bf16.msra.mxu0 %v3213
    %4564 = vmatpush.bf16.msra.mxu0 %v3205
    %4565 = vmatpush.bf16.msra.mxu0 %v3197
    %4566 = vmatpush.bf16.msra.mxu0 %v3189
    %4567 = vmatpush.bf16.msra.mxu0 %v3181
    %4568 = vmatpush.bf16.msra.mxu0 %v3173
    %4569 = vmatmul.bf16.gmra.mxu0 %v651
    %v4570 = vpop.f32.mrf.mxu0
    %v4571 = vadd.f32 %v4558, %v4570
    %v4572 = vpop.f32.mrf.mxu0
    %4573 = vdwg.mxu0
    %v4574 = vmax.f32 %v3843, 0.0
    %v4575 = vmax.f32 %v3947, 0.0
    %v4576 = vmax.f32 %v4051, 0.0
    %v4577 = vmax.f32 %v4155, 0.0
    %v4578 = vmax.f32 %v4259, 0.0
    %v4579 = vmax.f32 %v4363, 0.0
    %v4580 = vmax.f32 %v4467, 0.0
    %v4581 = vmax.f32 %v4571, 0.0
    %v4582 = vpack.c.bf16 %v4574, %v4574
    %v4583 = vpack.c.bf16 %v4575, %v4575
    %v4584 = vpack.c.bf16 %v4576, %v4576
    %v4585 = vpack.c.bf16 %v4577, %v4577
    %v4586 = vpack.c.bf16 %v4578, %v4578
    %v4587 = vpack.c.bf16 %v4579, %v4579
    %v4588 = vpack.c.bf16 %v4580, %v4580
    %v4589 = vpack.c.bf16 %v4581, %v4581
    %v4590 = vld [vmem:[#allocation11] sm:$0xf]
    %v4591 = vld [vmem:[#allocation11 + $0x4] sm:$0xf]
    %v4592 = vld [vmem:[#allocation11 + $0x8] sm:$0xf]
    %v4593 = vld [vmem:[#allocation11 + $0xc] sm:$0xf]
    %v4594 = vld [vmem:[#allocation11 + $0x10] sm:$0xf]
    %v4595 = vld [vmem:[#allocation11 + $0x14] sm:$0xf]
    %v4596 = vld [vmem:[#allocation11 + $0x18] sm:$0xf]
    %v4597 = vld [vmem:[#allocation11 + $0x1c] sm:$0xf]
    %v4598 = vld [vmem:[#allocation11 + $0x20] sm:$0xf]
    %v4599 = vld [vmem:[#allocation11 + $0x24] sm:$0xf]
    %v4600 = vld [vmem:[#allocation11 + $0x28] sm:$0xf]
    %v4601 = vld [vmem:[#allocation11 + $0x2c] sm:$0xf]
    %v4602 = vld [vmem:[#allocation11 + $0x30] sm:$0xf]
    %v4603 = vld [vmem:[#allocation11 + $0x34] sm:$0xf]
    %v4604 = vld [vmem:[#allocation11 + $0x38] sm:$0xf]
    %v4605 = vld [vmem:[#allocation11 + $0x3c] sm:$0xf]
    %v4606 = vld [vmem:[#allocation11 + $0x40] sm:$0xf]
    %v4607 = vld [vmem:[#allocation11 + $0x44] sm:$0xf]
    %v4608 = vld [vmem:[#allocation11 + $0x48] sm:$0xf]
    %v4609 = vld [vmem:[#allocation11 + $0x4c] sm:$0xf]
    %v4610 = vld [vmem:[#allocation11 + $0x50] sm:$0xf]
    %v4611 = vld [vmem:[#allocation11 + $0x54] sm:$0xf]
    %v4612 = vld [vmem:[#allocation11 + $0x58] sm:$0xf]
    %v4613 = vld [vmem:[#allocation11 + $0x5c] sm:$0xf]
    %v4614 = vld [vmem:[#allocation11 + $0x60] sm:$0xf]
    %v4615 = vld [vmem:[#allocation11 + $0x64] sm:$0xf]
    %v4616 = vld [vmem:[#allocation11 + $0x68] sm:$0xf]
    %v4617 = vld [vmem:[#allocation11 + $0x6c] sm:$0xf]
    %v4618 = vld [vmem:[#allocation11 + $0x70] sm:$0xf]
    %v4619 = vld [vmem:[#allocation11 + $0x74] sm:$0xf]
    %v4620 = vld [vmem:[#allocation11 + $0x78] sm:$0xf]
    %v4621 = vld [vmem:[#allocation11 + $0x7c] sm:$0xf]
    %v4622 = vld [vmem:[#allocation11 + $0x80] sm:$0xf]
    %v4623 = vld [vmem:[#allocation11 + $0x84] sm:$0xf]
    %v4624 = vld [vmem:[#allocation11 + $0x88] sm:$0xf]
    %v4625 = vld [vmem:[#allocation11 + $0x8c] sm:$0xf]
    %v4626 = vld [vmem:[#allocation11 + $0x90] sm:$0xf]
    %v4627 = vld [vmem:[#allocation11 + $0x94] sm:$0xf]
    %v4628 = vld [vmem:[#allocation11 + $0x98] sm:$0xf]
    %v4629 = vld [vmem:[#allocation11 + $0x9c] sm:$0xf]
    %v4630 = vld [vmem:[#allocation11 + $0xa0] sm:$0xf]
    %v4631 = vld [vmem:[#allocation11 + $0xa4] sm:$0xf]
    %v4632 = vld [vmem:[#allocation11 + $0xa8] sm:$0xf]
    %v4633 = vld [vmem:[#allocation11 + $0xac] sm:$0xf]
    %v4634 = vld [vmem:[#allocation11 + $0xb0] sm:$0xf]
    %v4635 = vld [vmem:[#allocation11 + $0xb4] sm:$0xf]
    %v4636 = vld [vmem:[#allocation11 + $0xb8] sm:$0xf]
    %v4637 = vld [vmem:[#allocation11 + $0xbc] sm:$0xf]
    %v4638 = vld [vmem:[#allocation11 + $0xc0] sm:$0xf]
    %v4639 = vld [vmem:[#allocation11 + $0xc4] sm:$0xf]
    %v4640 = vld [vmem:[#allocation11 + $0xc8] sm:$0xf]
    %v4641 = vld [vmem:[#allocation11 + $0xcc] sm:$0xf]
    %v4642 = vld [vmem:[#allocation11 + $0xd0] sm:$0xf]
    %v4643 = vld [vmem:[#allocation11 + $0xd4] sm:$0xf]
    %v4644 = vld [vmem:[#allocation11 + $0xd8] sm:$0xf]
    %v4645 = vld [vmem:[#allocation11 + $0xdc] sm:$0xf]
    %v4646 = vld [vmem:[#allocation11 + $0xe0] sm:$0xf]
    %v4647 = vld [vmem:[#allocation11 + $0xe4] sm:$0xf]
    %v4648 = vld [vmem:[#allocation11 + $0xe8] sm:$0xf]
    %v4649 = vld [vmem:[#allocation11 + $0xec] sm:$0xf]
    %v4650 = vld [vmem:[#allocation11 + $0xf0] sm:$0xf]
    %v4651 = vld [vmem:[#allocation11 + $0xf4] sm:$0xf]
    %v4652 = vld [vmem:[#allocation11 + $0xf8] sm:$0xf]
    %v4653 = vld [vmem:[#allocation11 + $0xfc] sm:$0xf]
    %v4654 = vld [vmem:[#allocation11 + $0x100] sm:$0xf]
    %v4655 = vld [vmem:[#allocation11 + $0x104] sm:$0xf]
    %v4656 = vld [vmem:[#allocation11 + $0x108] sm:$0xf]
    %v4657 = vld [vmem:[#allocation11 + $0x10c] sm:$0xf]
    %v4658 = vld [vmem:[#allocation11 + $0x110] sm:$0xf]
    %v4659 = vld [vmem:[#allocation11 + $0x114] sm:$0xf]
    %v4660 = vld [vmem:[#allocation11 + $0x118] sm:$0xf]
    %v4661 = vld [vmem:[#allocation11 + $0x11c] sm:$0xf]
    %v4662 = vld [vmem:[#allocation11 + $0x120] sm:$0xf]
    %v4663 = vld [vmem:[#allocation11 + $0x124] sm:$0xf]
    %v4664 = vld [vmem:[#allocation11 + $0x128] sm:$0xf]
    %v4665 = vld [vmem:[#allocation11 + $0x12c] sm:$0xf]
    %v4666 = vld [vmem:[#allocation11 + $0x130] sm:$0xf]
    %v4667 = vld [vmem:[#allocation11 + $0x134] sm:$0xf]
    %v4668 = vld [vmem:[#allocation11 + $0x138] sm:$0xf]
    %v4669 = vld [vmem:[#allocation11 + $0x13c] sm:$0xf]
    %v4670 = vld [vmem:[#allocation11 + $0x140] sm:$0xf]
    %v4671 = vld [vmem:[#allocation11 + $0x144] sm:$0xf]
    %v4672 = vld [vmem:[#allocation11 + $0x148] sm:$0xf]
    %v4673 = vld [vmem:[#allocation11 + $0x14c] sm:$0xf]
    %v4674 = vld [vmem:[#allocation11 + $0x150] sm:$0xf]
    %v4675 = vld [vmem:[#allocation11 + $0x154] sm:$0xf]
    %v4676 = vld [vmem:[#allocation11 + $0x158] sm:$0xf]
    %v4677 = vld [vmem:[#allocation11 + $0x15c] sm:$0xf]
    %v4678 = vld [vmem:[#allocation11 + $0x160] sm:$0xf]
    %v4679 = vld [vmem:[#allocation11 + $0x164] sm:$0xf]
    %v4680 = vld [vmem:[#allocation11 + $0x168] sm:$0xf]
    %v4681 = vld [vmem:[#allocation11 + $0x16c] sm:$0xf]
    %v4682 = vld [vmem:[#allocation11 + $0x170] sm:$0xf]
    %v4683 = vld [vmem:[#allocation11 + $0x174] sm:$0xf]
    %v4684 = vld [vmem:[#allocation11 + $0x178] sm:$0xf]
    %v4685 = vld [vmem:[#allocation11 + $0x17c] sm:$0xf]
    %v4686 = vld [vmem:[#allocation11 + $0x180] sm:$0xf]
    %v4687 = vld [vmem:[#allocation11 + $0x184] sm:$0xf]
    %v4688 = vld [vmem:[#allocation11 + $0x188] sm:$0xf]
    %v4689 = vld [vmem:[#allocation11 + $0x18c] sm:$0xf]
    %v4690 = vld [vmem:[#allocation11 + $0x190] sm:$0xf]
    %v4691 = vld [vmem:[#allocation11 + $0x194] sm:$0xf]
    %v4692 = vld [vmem:[#allocation11 + $0x198] sm:$0xf]
    %v4693 = vld [vmem:[#allocation11 + $0x19c] sm:$0xf]
    %v4694 = vld [vmem:[#allocation11 + $0x1a0] sm:$0xf]
    %v4695 = vld [vmem:[#allocation11 + $0x1a4] sm:$0xf]
    %v4696 = vld [vmem:[#allocation11 + $0x1a8] sm:$0xf]
    %v4697 = vld [vmem:[#allocation11 + $0x1ac] sm:$0xf]
    %v4698 = vld [vmem:[#allocation11 + $0x1b0] sm:$0xf]
    %v4699 = vld [vmem:[#allocation11 + $0x1b4] sm:$0xf]
    %v4700 = vld [vmem:[#allocation11 + $0x1b8] sm:$0xf]
    %v4701 = vld [vmem:[#allocation11 + $0x1bc] sm:$0xf]
    %v4702 = vld [vmem:[#allocation11 + $0x1c0] sm:$0xf]
    %v4703 = vld [vmem:[#allocation11 + $0x1c4] sm:$0xf]
    %v4704 = vld [vmem:[#allocation11 + $0x1c8] sm:$0xf]
    %v4705 = vld [vmem:[#allocation11 + $0x1cc] sm:$0xf]
    %v4706 = vld [vmem:[#allocation11 + $0x1d0] sm:$0xf]
    %v4707 = vld [vmem:[#allocation11 + $0x1d4] sm:$0xf]
    %v4708 = vld [vmem:[#allocation11 + $0x1d8] sm:$0xf]
    %v4709 = vld [vmem:[#allocation11 + $0x1dc] sm:$0xf]
    %v4710 = vld [vmem:[#allocation11 + $0x1e0] sm:$0xf]
    %v4711 = vld [vmem:[#allocation11 + $0x1e4] sm:$0xf]
    %v4712 = vld [vmem:[#allocation11 + $0x1e8] sm:$0xf]
    %v4713 = vld [vmem:[#allocation11 + $0x1ec] sm:$0xf]
    %v4714 = vld [vmem:[#allocation11 + $0x1f0] sm:$0xf]
    %v4715 = vld [vmem:[#allocation11 + $0x1f4] sm:$0xf]
    %v4716 = vld [vmem:[#allocation11 + $0x1f8] sm:$0xf]
    %v4717 = vld [vmem:[#allocation11 + $0x1fc] sm:$0xf]
    %v4718 = vld [vmem:[#allocation13] sm:$0x1]
    %v4720 = vperm.slane %v4718, 0
    %v4850 = vunpack.c.l.b16 %v4590
    %v4851 = vunpack.c.l.b16 %v4591
    %v4852 = vunpack.c.l.b16 %v4592
    %v4853 = vunpack.c.l.b16 %v4593
    %v4854 = vunpack.c.l.b16 %v4594
    %v4855 = vunpack.c.l.b16 %v4595
    %v4856 = vunpack.c.l.b16 %v4596
    %v4857 = vunpack.c.l.b16 %v4597
    %v4858 = vunpack.c.l.b16 %v4598
    %v4859 = vunpack.c.l.b16 %v4599
    %v4860 = vunpack.c.l.b16 %v4600
    %v4861 = vunpack.c.l.b16 %v4601
    %v4862 = vunpack.c.l.b16 %v4602
    %v4863 = vunpack.c.l.b16 %v4603
    %v4864 = vunpack.c.l.b16 %v4604
    %v4865 = vunpack.c.l.b16 %v4605
    %v4866 = vunpack.c.l.b16 %v4606
    %v4867 = vunpack.c.l.b16 %v4607
    %v4868 = vunpack.c.l.b16 %v4608
    %v4869 = vunpack.c.l.b16 %v4609
    %v4870 = vunpack.c.l.b16 %v4610
    %v4871 = vunpack.c.l.b16 %v4611
    %v4872 = vunpack.c.l.b16 %v4612
    %v4873 = vunpack.c.l.b16 %v4613
    %v4874 = vunpack.c.l.b16 %v4614
    %v4875 = vunpack.c.l.b16 %v4615
    %v4876 = vunpack.c.l.b16 %v4616
    %v4877 = vunpack.c.l.b16 %v4617
    %v4878 = vunpack.c.l.b16 %v4618
    %v4879 = vunpack.c.l.b16 %v4619
    %v4880 = vunpack.c.l.b16 %v4620
    %v4881 = vunpack.c.l.b16 %v4621
    %v4882 = vunpack.c.l.b16 %v4622
    %v4883 = vunpack.c.l.b16 %v4623
    %v4884 = vunpack.c.l.b16 %v4624
    %v4885 = vunpack.c.l.b16 %v4625
    %v4886 = vunpack.c.l.b16 %v4626
    %v4887 = vunpack.c.l.b16 %v4627
    %v4888 = vunpack.c.l.b16 %v4628
    %v4889 = vunpack.c.l.b16 %v4629
    %v4890 = vunpack.c.l.b16 %v4630
    %v4891 = vunpack.c.l.b16 %v4631
    %v4892 = vunpack.c.l.b16 %v4632
    %v4893 = vunpack.c.l.b16 %v4633
    %v4894 = vunpack.c.l.b16 %v4634
    %v4895 = vunpack.c.l.b16 %v4635
    %v4896 = vunpack.c.l.b16 %v4636
    %v4897 = vunpack.c.l.b16 %v4637
    %v4898 = vunpack.c.l.b16 %v4638
    %v4899 = vunpack.c.l.b16 %v4639
    %v4900 = vunpack.c.l.b16 %v4640
    %v4901 = vunpack.c.l.b16 %v4641
    %v4902 = vunpack.c.l.b16 %v4642
    %v4903 = vunpack.c.l.b16 %v4643
    %v4904 = vunpack.c.l.b16 %v4644
    %v4905 = vunpack.c.l.b16 %v4645
    %v4906 = vunpack.c.l.b16 %v4646
    %v4907 = vunpack.c.l.b16 %v4647
    %v4908 = vunpack.c.l.b16 %v4648
    %v4909 = vunpack.c.l.b16 %v4649
    %v4910 = vunpack.c.l.b16 %v4650
    %v4911 = vunpack.c.l.b16 %v4651
    %v4912 = vunpack.c.l.b16 %v4652
    %v4913 = vunpack.c.l.b16 %v4653
    %v4914 = vunpack.c.l.b16 %v4654
    %v4915 = vunpack.c.l.b16 %v4655
    %v4916 = vunpack.c.l.b16 %v4656
    %v4917 = vunpack.c.l.b16 %v4657
    %v4918 = vunpack.c.l.b16 %v4658
    %v4919 = vunpack.c.l.b16 %v4659
    %v4920 = vunpack.c.l.b16 %v4660
    %v4921 = vunpack.c.l.b16 %v4661
    %v4922 = vunpack.c.l.b16 %v4662
    %v4923 = vunpack.c.l.b16 %v4663
    %v4924 = vunpack.c.l.b16 %v4664
    %v4925 = vunpack.c.l.b16 %v4665
    %v4926 = vunpack.c.l.b16 %v4666
    %v4927 = vunpack.c.l.b16 %v4667
    %v4928 = vunpack.c.l.b16 %v4668
    %v4929 = vunpack.c.l.b16 %v4669
    %v4930 = vunpack.c.l.b16 %v4670
    %v4931 = vunpack.c.l.b16 %v4671
    %v4932 = vunpack.c.l.b16 %v4672
    %v4933 = vunpack.c.l.b16 %v4673
    %v4934 = vunpack.c.l.b16 %v4674
    %v4935 = vunpack.c.l.b16 %v4675
    %v4936 = vunpack.c.l.b16 %v4676
    %v4937 = vunpack.c.l.b16 %v4677
    %v4938 = vunpack.c.l.b16 %v4678
    %v4939 = vunpack.c.l.b16 %v4679
    %v4940 = vunpack.c.l.b16 %v4680
    %v4941 = vunpack.c.l.b16 %v4681
    %v4942 = vunpack.c.l.b16 %v4682
    %v4943 = vunpack.c.l.b16 %v4683
    %v4944 = vunpack.c.l.b16 %v4684
    %v4945 = vunpack.c.l.b16 %v4685
    %v4946 = vunpack.c.l.b16 %v4686
    %v4947 = vunpack.c.l.b16 %v4687
    %v4948 = vunpack.c.l.b16 %v4688
    %v4949 = vunpack.c.l.b16 %v4689
    %v4950 = vunpack.c.l.b16 %v4690
    %v4951 = vunpack.c.l.b16 %v4691
    %v4952 = vunpack.c.l.b16 %v4692
    %v4953 = vunpack.c.l.b16 %v4693
    %v4954 = vunpack.c.l.b16 %v4694
    %v4955 = vunpack.c.l.b16 %v4695
    %v4956 = vunpack.c.l.b16 %v4696
    %v4957 = vunpack.c.l.b16 %v4697
    %v4958 = vunpack.c.l.b16 %v4698
    %v4959 = vunpack.c.l.b16 %v4699
    %v4960 = vunpack.c.l.b16 %v4700
    %v4961 = vunpack.c.l.b16 %v4701
    %v4962 = vunpack.c.l.b16 %v4702
    %v4963 = vunpack.c.l.b16 %v4703
    %v4964 = vunpack.c.l.b16 %v4704
    %v4965 = vunpack.c.l.b16 %v4705
    %v4966 = vunpack.c.l.b16 %v4706
    %v4967 = vunpack.c.l.b16 %v4707
    %v4968 = vunpack.c.l.b16 %v4708
    %v4969 = vunpack.c.l.b16 %v4709
    %v4970 = vunpack.c.l.b16 %v4710
    %v4971 = vunpack.c.l.b16 %v4711
    %v4972 = vunpack.c.l.b16 %v4712
    %v4973 = vunpack.c.l.b16 %v4713
    %v4974 = vunpack.c.l.b16 %v4714
    %v4975 = vunpack.c.l.b16 %v4715
    %v4976 = vunpack.c.l.b16 %v4716
    %v4977 = vunpack.c.l.b16 %v4717
    %v4978 = vpack.c.b16 %v4851, %v4850
    %v4979 = vpack.c.b16 %v4853, %v4852
    %v4980 = vpack.c.b16 %v4855, %v4854
    %v4981 = vpack.c.b16 %v4857, %v4856
    %v4982 = vpack.c.b16 %v4859, %v4858
    %v4983 = vpack.c.b16 %v4861, %v4860
    %v4984 = vpack.c.b16 %v4863, %v4862
    %v4985 = vpack.c.b16 %v4865, %v4864
    %v4986 = vpack.c.b16 %v4867, %v4866
    %v4987 = vpack.c.b16 %v4869, %v4868
    %v4988 = vpack.c.b16 %v4871, %v4870
    %v4989 = vpack.c.b16 %v4873, %v4872
    %v4990 = vpack.c.b16 %v4875, %v4874
    %v4991 = vpack.c.b16 %v4877, %v4876
    %v4992 = vpack.c.b16 %v4879, %v4878
    %v4993 = vpack.c.b16 %v4881, %v4880
    %v4994 = vpack.c.b16 %v4883, %v4882
    %v4995 = vpack.c.b16 %v4885, %v4884
    %v4996 = vpack.c.b16 %v4887, %v4886
    %v4997 = vpack.c.b16 %v4889, %v4888
    %v4998 = vpack.c.b16 %v4891, %v4890
    %v4999 = vpack.c.b16 %v4893, %v4892
    %v5000 = vpack.c.b16 %v4895, %v4894
    %v5001 = vpack.c.b16 %v4897, %v4896
    %v5002 = vpack.c.b16 %v4899, %v4898
    %v5003 = vpack.c.b16 %v4901, %v4900
    %v5004 = vpack.c.b16 %v4903, %v4902
    %v5005 = vpack.c.b16 %v4905, %v4904
    %v5006 = vpack.c.b16 %v4907, %v4906
    %v5007 = vpack.c.b16 %v4909, %v4908
    %v5008 = vpack.c.b16 %v4911, %v4910
    %v5009 = vpack.c.b16 %v4913, %v4912
    %v5010 = vpack.c.b16 %v4915, %v4914
    %v5011 = vpack.c.b16 %v4917, %v4916
    %v5012 = vpack.c.b16 %v4919, %v4918
    %v5013 = vpack.c.b16 %v4921, %v4920
    %v5014 = vpack.c.b16 %v4923, %v4922
    %v5015 = vpack.c.b16 %v4925, %v4924
    %v5016 = vpack.c.b16 %v4927, %v4926
    %v5017 = vpack.c.b16 %v4929, %v4928
    %v5018 = vpack.c.b16 %v4931, %v4930
    %v5019 = vpack.c.b16 %v4933, %v4932
    %v5020 = vpack.c.b16 %v4935, %v4934
    %v5021 = vpack.c.b16 %v4937, %v4936
    %v5022 = vpack.c.b16 %v4939, %v4938
    %v5023 = vpack.c.b16 %v4941, %v4940
    %v5024 = vpack.c.b16 %v4943, %v4942
    %v5025 = vpack.c.b16 %v4945, %v4944
    %v5026 = vpack.c.b16 %v4947, %v4946
    %v5027 = vpack.c.b16 %v4949, %v4948
    %v5028 = vpack.c.b16 %v4951, %v4950
    %v5029 = vpack.c.b16 %v4953, %v4952
    %v5030 = vpack.c.b16 %v4955, %v4954
    %v5031 = vpack.c.b16 %v4957, %v4956
    %v5032 = vpack.c.b16 %v4959, %v4958
    %v5033 = vpack.c.b16 %v4961, %v4960
    %v5034 = vpack.c.b16 %v4963, %v4962
    %v5035 = vpack.c.b16 %v4965, %v4964
    %v5036 = vpack.c.b16 %v4967, %v4966
    %v5037 = vpack.c.b16 %v4969, %v4968
    %v5038 = vpack.c.b16 %v4971, %v4970
    %v5039 = vpack.c.b16 %v4973, %v4972
    %v5040 = vpack.c.b16 %v4975, %v4974
    %v5041 = vpack.c.b16 %v4977, %v4976
    %5106 = vmatpush.bf16.msra.mxu0 %v4985
    %5107 = vmatpush.bf16.msra.mxu0 %v4984
    %5108 = vmatpush.bf16.msra.mxu0 %v4983
    %5109 = vmatpush.bf16.msra.mxu0 %v4982
    %5110 = vmatpush.bf16.msra.mxu0 %v4981
    %5111 = vmatpush.bf16.msra.mxu0 %v4980
    %5112 = vmatpush.bf16.msra.mxu0 %v4979
    %5113 = vmatpush.bf16.msra.mxu0 %v4978
    %5114 = vmatmul.bf16.gmra.mxu0 %v4582
    %v5115 = vpop.f32.mrf.mxu0
    %v5116 = vadd.f32 %v4720, %v5115
    %v5117 = vpop.f32.mrf.mxu0
    %5118 = vdwg.mxu0
    %5119 = vmatpush.bf16.msra.mxu0 %v4993
    %5120 = vmatpush.bf16.msra.mxu0 %v4992
    %5121 = vmatpush.bf16.msra.mxu0 %v4991
    %5122 = vmatpush.bf16.msra.mxu0 %v4990
    %5123 = vmatpush.bf16.msra.mxu0 %v4989
    %5124 = vmatpush.bf16.msra.mxu0 %v4988
    %5125 = vmatpush.bf16.msra.mxu0 %v4987
    %5126 = vmatpush.bf16.msra.mxu0 %v4986
    %5127 = vmatmul.bf16.gmra.mxu0 %v4583
    %v5128 = vpop.f32.mrf.mxu0
    %v5129 = vadd.f32 %v5116, %v5128
    %v5130 = vpop.f32.mrf.mxu0
    %5131 = vdwg.mxu0
    %5132 = vmatpush.bf16.msra.mxu0 %v5001
    %5133 = vmatpush.bf16.msra.mxu0 %v5000
    %5134 = vmatpush.bf16.msra.mxu0 %v4999
    %5135 = vmatpush.bf16.msra.mxu0 %v4998
    %5136 = vmatpush.bf16.msra.mxu0 %v4997
    %5137 = vmatpush.bf16.msra.mxu0 %v4996
    %5138 = vmatpush.bf16.msra.mxu0 %v4995
    %5139 = vmatpush.bf16.msra.mxu0 %v4994
    %5140 = vmatmul.bf16.gmra.mxu0 %v4584
    %v5141 = vpop.f32.mrf.mxu0
    %v5142 = vadd.f32 %v5129, %v5141
    %v5143 = vpop.f32.mrf.mxu0
    %5144 = vdwg.mxu0
    %5145 = vmatpush.bf16.msra.mxu0 %v5009
    %5146 = vmatpush.bf16.msra.mxu0 %v5008
    %5147 = vmatpush.bf16.msra.mxu0 %v5007
    %5148 = vmatpush.bf16.msra.mxu0 %v5006
    %5149 = vmatpush.bf16.msra.mxu0 %v5005
    %5150 = vmatpush.bf16.msra.mxu0 %v5004
    %5151 = vmatpush.bf16.msra.mxu0 %v5003
    %5152 = vmatpush.bf16.msra.mxu0 %v5002
    %5153 = vmatmul.bf16.gmra.mxu0 %v4585
    %v5154 = vpop.f32.mrf.mxu0
    %v5155 = vadd.f32 %v5142, %v5154
    %v5156 = vpop.f32.mrf.mxu0
    %5157 = vdwg.mxu0
    %5158 = vmatpush.bf16.msra.mxu0 %v5017
    %5159 = vmatpush.bf16.msra.mxu0 %v5016
    %5160 = vmatpush.bf16.msra.mxu0 %v5015
    %5161 = vmatpush.bf16.msra.mxu0 %v5014
    %5162 = vmatpush.bf16.msra.mxu0 %v5013
    %5163 = vmatpush.bf16.msra.mxu0 %v5012
    %5164 = vmatpush.bf16.msra.mxu0 %v5011
    %5165 = vmatpush.bf16.msra.mxu0 %v5010
    %5166 = vmatmul.bf16.gmra.mxu0 %v4586
    %v5167 = vpop.f32.mrf.mxu0
    %v5168 = vadd.f32 %v5155, %v5167
    %v5169 = vpop.f32.mrf.mxu0
    %5170 = vdwg.mxu0
    %5171 = vmatpush.bf16.msra.mxu0 %v5025
    %5172 = vmatpush.bf16.msra.mxu0 %v5024
    %5173 = vmatpush.bf16.msra.mxu0 %v5023
    %5174 = vmatpush.bf16.msra.mxu0 %v5022
    %5175 = vmatpush.bf16.msra.mxu0 %v5021
    %5176 = vmatpush.bf16.msra.mxu0 %v5020
    %5177 = vmatpush.bf16.msra.mxu0 %v5019
    %5178 = vmatpush.bf16.msra.mxu0 %v5018
    %5179 = vmatmul.bf16.gmra.mxu0 %v4587
    %v5180 = vpop.f32.mrf.mxu0
    %v5181 = vadd.f32 %v5168, %v5180
    %v5182 = vpop.f32.mrf.mxu0
    %5183 = vdwg.mxu0
    %5184 = vmatpush.bf16.msra.mxu0 %v5033
    %5185 = vmatpush.bf16.msra.mxu0 %v5032
    %5186 = vmatpush.bf16.msra.mxu0 %v5031
    %5187 = vmatpush.bf16.msra.mxu0 %v5030
    %5188 = vmatpush.bf16.msra.mxu0 %v5029
    %5189 = vmatpush.bf16.msra.mxu0 %v5028
    %5190 = vmatpush.bf16.msra.mxu0 %v5027
    %5191 = vmatpush.bf16.msra.mxu0 %v5026
    %5192 = vmatmul.bf16.gmra.mxu0 %v4588
    %v5193 = vpop.f32.mrf.mxu0
    %v5194 = vadd.f32 %v5181, %v5193
    %v5195 = vpop.f32.mrf.mxu0
    %5196 = vdwg.mxu0
    %5197 = vmatpush.bf16.msra.mxu0 %v5041
    %5198 = vmatpush.bf16.msra.mxu0 %v5040
    %5199 = vmatpush.bf16.msra.mxu0 %v5039
    %5200 = vmatpush.bf16.msra.mxu0 %v5038
    %5201 = vmatpush.bf16.msra.mxu0 %v5037
    %5202 = vmatpush.bf16.msra.mxu0 %v5036
    %5203 = vmatpush.bf16.msra.mxu0 %v5035
    %5204 = vmatpush.bf16.msra.mxu0 %v5034
    %5205 = vmatmul.bf16.gmra.mxu0 %v4589
    %v5206 = vpop.f32.mrf.mxu0
    %v5207 = vadd.f32 %v5194, %v5206
    %v5208 = vpop.f32.mrf.mxu0
    %5209 = vdwg.mxu0
    %v5210 = vpack.c.bf16 %v5207, %v5207
    %5211 = vst [vmem:[#allocation14] sm:$0xf] %v5210
    // Predicated region
    $region58: #{tpu_custom_call.1} parent=1 // pred_check
      _
    $region59: #{tpu_custom_call.1} parent=1 // pred_check_branch
      %5213 = sbr.rel (0) target = $region61
    $region60: #{tpu_custom_call.1} parent=1 // pred_region
      %5215 = vsyncadd [#allocation4], 0
      %s5217 = sshll.u32 [#allocation14], 4
      %s5218 = int_to_ptr.vmem [resolvable:$true] %s5217
      %s5219 = sshll.u32 %s7, 4
      %s5220 = int_to_ptr.hbm [resolvable:$true] %s5219
      %5222 = dma.vmem_to_hbm [thread:$0]  %s5218, 64, %s5220, [#allocation4]
    $region61: #{tpu_custom_call.1} parent=1 // pred_fallthru
      _
    // Predicated region
    $region62: #{tpu_custom_call.1} parent=1 // pred_check
      _
    $region63: #{tpu_custom_call.1} parent=1 // pred_check_branch
      %5224 = sbr.rel (0) target = $region65
    $region64: #{tpu_custom_call.1} parent=1 // pred_region
      %5226 = dma.done [#allocation4], 64
    $region65: #{tpu_custom_call.1} parent=1 // pred_fallthru
      _
    %5227 = vsyncpa [#allocation3], 1
    %5228 = vsyncpa [#allocation6], 1
    %5229 = vsyncpa [#allocation9], 1
    %5230 = vsyncpa [#allocation12], 1
    %5231 = vsyncpa [#allocation4], 1

</llo_original>
